<compile_context>
chip_gen: v5e
topology: v5e:2x2
jax: 0.10.0
libtpu: 0.0.40
codegen_flags: <defaults>
</compile_context>

<pallas_src>
import numpy as np
import jax
import jax.numpy as jnp
from jax.experimental import pallas as pl
from jax.experimental.pallas import tpu as pltpu

# ---------------- static network geometry (30x30 input <-> 900 flatten) -----
C_IN, C1, C2, N_CLS = 3, 9, 25, 3
H_IN, W_IN, H_PAD = 30, 30, 32          # pad rows 30->32 so slabs stay in range
W1ROW = W_IN                            # 30: row width of flat conv1 input
W2ROW = 14                              # 14: row width of flat pooled-1 map
L_X = H_PAD * W_IN                      # 960: flattened, padded input / channel
L_C1 = 28 * W1ROW                       # 840: flat conv1 output (28 valid rows)
L_M1 = 2 * 13 * W1ROW + 2 * 13 + 1      # 807: shift-max length needed by pool1
N_P1 = 14 * 14                          # 196: pooled conv1 map (14x14, no junk)
L_C2 = 11 * W2ROW + 11 + 1              # 166: flat conv2 output length
L_M2 = 2 * 5 * W2ROW + 2 * 5 + 1        # 151: shift-max length needed by pool2
N_P2 = 6 * 6                            # 36 : pooled conv2 map (6x6)
FC1, FC2 = 100, 40


# ---------------------------------------------------------------------------
# Fully-fused forward kernel (one grid step == one sample)
# ---------------------------------------------------------------------------
def _net_fused_kernel(x_ref, w1_ref, b1_ref, d1_ref, w2_ref, b2_ref, d2_ref,
                      wf1_ref, bf1_ref, wf2_ref, bf2_ref, wf3_ref, bf3_ref,
                      out_ref):
    f32, bf16 = jnp.float32, jnp.bfloat16

    def conv_flat(flat, w_ref, row_w, out_len):
        """3x3 'valid' conv on a row-major flattened (Cin, rows*row_w) map as a
        sum of 9 shifted-slab matmuls (contiguous lane slices only).  Columns
        whose x-coordinate is out of range are garbage but are never selected
        by the pooling decimation matrix."""
        acc = None
        for i in range(3):
            for j in range(3):
                off = i * row_w + j
                slab = flat[:, off:off + out_len].astype(bf16)        # (Cin, L)
                term = jnp.dot(w_ref[i * 3 + j], slab,
                               preferred_element_type=f32)            # (Cout, L)
                acc = term if acc is None else acc + term
        return acc

    def maxpool_flat(conv, row_w, d_ref):
        """Fused 2x2 stride-2 max-pool on the flat map: max over the four
        window corners (plain shifted slices), then a 0/1 decimation matmul
        that keeps stride-2 positions and compacts them lane-dense."""
        L = d_ref.shape[0]
        m = jnp.maximum(
            jnp.maximum(conv[:, 0:L], conv[:, 1:1 + L]),
            jnp.maximum(conv[:, row_w:row_w + L], conv[:, row_w + 1:row_w + 1 + L]))
        return jnp.dot(m, d_ref[...], preferred_element_type=f32)

    x = x_ref[0]                                                       # (3, 960) f32

    # conv1 + ReLU + pool1  (bias/ReLU commute with max -> applied post-pool)
    c1 = conv_flat(x, w1_ref, W1ROW, L_C1)                             # (9, 840)
    p1 = jnp.maximum(maxpool_flat(c1, W1ROW, d1_ref) + b1_ref[...], 0.0)   # (9, 196)

    # conv2 + ReLU + pool2
    c2 = conv_flat(p1, w2_ref, W2ROW, L_C2)                            # (25, 166)
    p2 = jnp.maximum(maxpool_flat(c2, W2ROW, d2_ref) + b2_ref[...], 0.0)   # (25, 36)

    # p2[c, h*6+w] is exactly PyTorch's x.view(-1, 900) (C,H,W) order, so fc1
    # is a sum of 25 block-row matmuls over the channel axis (no flatten op).
    h = bf1_ref[...]                                                   # (1, 100) f32
    for c in range(C2):
        h = h + jnp.dot(p2[c:c + 1, :].astype(bf16), wf1_ref[c],
                        preferred_element_type=f32)
    h = jnp.maximum(h, 0.0)                                            # (1, 100)

    h = jnp.dot(h.astype(bf16), wf2_ref[...],
                preferred_element_type=f32) + bf2_ref[...]
    h = jnp.maximum(h, 0.0)                                            # (1, 40)

    y = jnp.dot(h.astype(bf16), wf3_ref[...],
                preferred_element_type=f32) + bf3_ref[...]             # (1, 3)
    out_ref[0] = y.astype(out_ref.dtype)


# ---------------------------------------------------------------------------
# One-time parameter / constant preparation
# ---------------------------------------------------------------------------
def _pool_decimation_matrix(n_rows, row_w, pooled_h, pooled_w):
    """0/1 matrix D with D[2a*row_w + 2b, a*pooled_w + b] = 1: right-multiplying
    the shift-maxed flat map by D keeps the stride-2 window origins and packs
    them into a lane-dense pooled map."""
    d = np.zeros((n_rows, pooled_h * pooled_w), np.float32)
    a = np.arange(pooled_h)[:, None]
    b = np.arange(pooled_w)[None, :]
    rows = (2 * a * row_w + 2 * b).reshape(-1)
    d[rows, np.arange(pooled_h * pooled_w)] = 1.0
    return jnp.asarray(d)


def prepare_params(params):
    """Layout/dtype prep done once: bf16 MXU operands, per-shift conv weight
    matrices, pre-transposed fc weights, pooling decimation matrices."""
    bf16, f32 = jnp.bfloat16, jnp.float32
    # conv weights (O,I,kh,kw) -> (kh*kw, O, I): one (Cout,Cin) matrix per shift
    w1 = jnp.transpose(params["conv1_w"], (2, 3, 0, 1)).reshape(9, C1, C_IN).astype(bf16)
    w2 = jnp.transpose(params["conv2_w"], (2, 3, 0, 1)).reshape(9, C2, C1).astype(bf16)
    wf1 = params["fc1_w"].T.reshape(C2, N_P2, FC1).astype(bf16)   # split per channel
    wf2 = params["fc2_w"].T.astype(bf16)
    wf3 = params["fc3_w"].T.astype(bf16)
    return {
        "w1": w1, "b1": params["conv1_b"].reshape(C1, 1).astype(f32),
        "w2": w2, "b2": params["conv2_b"].reshape(C2, 1).astype(f32),
        "d1": _pool_decimation_matrix(L_M1, W1ROW, 14, 14),
        "d2": _pool_decimation_matrix(L_M2, W2ROW, 6, 6),
        "wf1": wf1, "bf1": params["fc1_b"].reshape(1, FC1).astype(f32),
        "wf2": wf2, "bf2": params["fc2_b"].reshape(1, FC2).astype(f32),
        "wf3": wf3, "bf3": params["fc3_b"].reshape(1, N_CLS).astype(f32),
    }


# ---------------------------------------------------------------------------
# Jitted forward pass (single fused pallas_call)
# ---------------------------------------------------------------------------
@jax.jit
def net_forward(x_nchw, prep):
    n = x_nchw.shape[0]
    # pad H 30->32 so every shifted slab is a contiguous in-range lane slice,
    # then flatten each channel image row-major (width 30).
    xf = jnp.pad(x_nchw.astype(jnp.float32),
                 ((0, 0), (0, 0), (0, H_PAD - H_IN), (0, 0)))
    xf = xf.reshape(n, C_IN, L_X)

    flops = 2 * n * (9 * C1 * C_IN * L_C1 + C1 * L_M1 * N_P1
                     + 9 * C2 * C1 * L_C2 + C2 * L_M2 * N_P2
                     + 900 * FC1 + FC1 * FC2 + FC2 * N_CLS)
    bytes_accessed = (xf.size * 4 + prep["d1"].size * 4 + prep["d2"].size * 4
                      + (prep["w1"].size + prep["w2"].size + prep["wf1"].size
                         + prep["wf2"].size + prep["wf3"].size) * 2
                      + (C1 + C2 + FC1 + FC2 + N_CLS) * 4 + n * N_CLS * 4)

    const2 = lambda i: (0, 0)
    const3 = lambda i: (0, 0, 0)
    out = pl.pallas_call(
        _net_fused_kernel,
        out_shape=jax.ShapeDtypeStruct((n, 1, N_CLS), jnp.float32),
        grid=(n,),
        in_specs=[
            pl.BlockSpec((1, C_IN, L_X), lambda i: (i, 0, 0)),   # per-sample input
            pl.BlockSpec((9, C1, C_IN), const3),                 # conv1 weights
            pl.BlockSpec((C1, 1), const2),                       # conv1 bias
            pl.BlockSpec((L_M1, N_P1), const2),                  # pool1 decimation
            pl.BlockSpec((9, C2, C1), const3),                   # conv2 weights
            pl.BlockSpec((C2, 1), const2),                       # conv2 bias
            pl.BlockSpec((L_M2, N_P2), const2),                  # pool2 decimation
            pl.BlockSpec((C2, N_P2, FC1), const3),               # fc1 weights
            pl.BlockSpec((1, FC1), const2),                      # fc1 bias
            pl.BlockSpec((FC1, FC2), const2),                    # fc2 weights
            pl.BlockSpec((1, FC2), const2),                      # fc2 bias
            pl.BlockSpec((FC2, N_CLS), const2),                  # fc3 weights
            pl.BlockSpec((1, N_CLS), const2),                    # fc3 bias
        ],
        out_specs=pl.BlockSpec((1, 1, N_CLS), lambda i: (i, 0, 0)),
        compiler_params=pltpu.CompilerParams(dimension_semantics=("parallel",)),
        cost_estimate=pl.CostEstimate(flops=flops, transcendentals=0,
                                      bytes_accessed=bytes_accessed),
    )(xf, prep["w1"], prep["b1"], prep["d1"], prep["w2"], prep["b2"], prep["d2"],
      prep["wf1"], prep["bf1"], prep["wf2"], prep["bf2"], prep["wf3"], prep["bf3"])
    return out.reshape(n, N_CLS)


# ---------------------------------------------------------------------------
# Deterministic params + pure-JAX reference (for a correctness sanity check)
# ---------------------------------------------------------------------------
def init_params(key):
    ks = jax.random.split(key, 10)
    scale = 0.05
    return {
        "conv1_w": scale * jax.random.normal(ks[0], (9, 3, 3, 3), jnp.float32),
        "conv1_b": scale * jax.random.normal(ks[1], (9,), jnp.float32),
        "conv2_w": scale * jax.random.normal(ks[2], (25, 9, 3, 3), jnp.float32),
        "conv2_b": scale * jax.random.normal(ks[3], (25,), jnp.float32),
        "fc1_w": scale * jax.random.normal(ks[4], (100, 900), jnp.float32),
        "fc1_b": scale * jax.random.normal(ks[5], (100,), jnp.float32),
        "fc2_w": scale * jax.random.normal(ks[6], (40, 100), jnp.float32),
        "fc2_b": scale * jax.random.normal(ks[7], (40,), jnp.float32),
        "fc3_w": scale * jax.random.normal(ks[8], (3, 40), jnp.float32),
        "fc3_b": scale * jax.random.normal(ks[9], (3,), jnp.float32),
    }


def _maxpool2x2_ref(x):  # NCHW, even H/W
    return jnp.maximum(
        jnp.maximum(x[:, :, 0::2, 0::2], x[:, :, 0::2, 1::2]),
        jnp.maximum(x[:, :, 1::2, 0::2], x[:, :, 1::2, 1::2]))


@jax.jit
def reference_forward(x, params):
    y = jax.lax.conv_general_dilated(x, params["conv1_w"], (1, 1), "VALID",
                                     dimension_numbers=("NCHW", "OIHW", "NCHW"))
    y = _maxpool2x2_ref(jax.nn.relu(y + params["conv1_b"][None, :, None, None]))
    y = jax.lax.conv_general_dilated(y, params["conv2_w"], (1, 1), "VALID",
                                     dimension_numbers=("NCHW", "OIHW", "NCHW"))
    y = _maxpool2x2_ref(jax.nn.relu(y + params["conv2_b"][None, :, None, None]))
    y = y.reshape(y.shape[0], 900)
    y = jax.nn.relu(y @ params["fc1_w"].T + params["fc1_b"])
    y = jax.nn.relu(y @ params["fc2_w"].T + params["fc2_b"])
    return y @ params["fc3_w"].T + params["fc3_b"]


if __name__ == "__main__":
    key = jax.random.PRNGKey(0)
    k_params, k_x = jax.random.split(key)
    params = init_params(k_params)
    prep = prepare_params(params)
    # 30x30 spatial input is what the 900-dim flatten implies (batch=2, C=3).
    x = jax.random.normal(k_x, (2, 3, 30, 30), jnp.float32)

    out = jax.block_until_ready(net_forward(x, prep))
    assert out.shape == (2, 3), out.shape

    ref = jax.block_until_ready(reference_forward(x, params))
    # bf16 MXU operands (f32 accumulation) -> allow a small tolerance.
    assert bool(jnp.allclose(out, ref, atol=2e-2, rtol=2e-2)), (out, ref)
    print("KERNEL_OK")
</pallas_src>

<mosaic_0001>
module attributes {stable_mosaic.version = 11 : i64} {
  func.func @_net_fused_kernel(%arg0: i32, %arg1: memref<1x3x960xf32, #tpu.memory_space<vmem>>, %arg2: memref<9x9x3xbf16, #tpu.memory_space<vmem>>, %arg3: memref<9x1xf32, #tpu.memory_space<vmem>>, %arg4: memref<807x196xf32, #tpu.memory_space<vmem>>, %arg5: memref<9x25x9xbf16, #tpu.memory_space<vmem>>, %arg6: memref<25x1xf32, #tpu.memory_space<vmem>>, %arg7: memref<151x36xf32, #tpu.memory_space<vmem>>, %arg8: memref<25x36x100xbf16, #tpu.memory_space<vmem>>, %arg9: memref<1x100xf32, #tpu.memory_space<vmem>>, %arg10: memref<100x40xbf16, #tpu.memory_space<vmem>>, %arg11: memref<1x40xf32, #tpu.memory_space<vmem>>, %arg12: memref<40x3xbf16, #tpu.memory_space<vmem>>, %arg13: memref<1x3xf32, #tpu.memory_space<vmem>>, %arg14: memref<1x1x3xf32, #tpu.memory_space<vmem>>) attributes {dimension_semantics = [#tpu.dimension_semantics<parallel>], iteration_bounds = array<i64: 2>, scalar_prefetch = 0 : i64, scratch_operands = 0 : i64, tpu.core_type = #tpu.core_type<tc>, window_params = [{transform_indices = @transform_0, window_bounds = array<i64: 1, 3, 960>}, {pipeline_mode = #tpu.pipeline_mode<synchronous>, transform_indices = @transform_1, window_bounds = array<i64: 9, 9, 3>}, {pipeline_mode = #tpu.pipeline_mode<synchronous>, transform_indices = @transform_2, window_bounds = array<i64: 9, 1>}, {pipeline_mode = #tpu.pipeline_mode<synchronous>, transform_indices = @transform_3, window_bounds = array<i64: 807, 196>}, {pipeline_mode = #tpu.pipeline_mode<synchronous>, transform_indices = @transform_4, window_bounds = array<i64: 9, 25, 9>}, {pipeline_mode = #tpu.pipeline_mode<synchronous>, transform_indices = @transform_5, window_bounds = array<i64: 25, 1>}, {pipeline_mode = #tpu.pipeline_mode<synchronous>, transform_indices = @transform_6, window_bounds = array<i64: 151, 36>}, {pipeline_mode = #tpu.pipeline_mode<synchronous>, transform_indices = @transform_7, window_bounds = array<i64: 25, 36, 100>}, {pipeline_mode = #tpu.pipeline_mode<synchronous>, transform_indices = @transform_8, window_bounds = array<i64: 1, 100>}, {pipeline_mode = #tpu.pipeline_mode<synchronous>, transform_indices = @transform_9, window_bounds = array<i64: 100, 40>}, {pipeline_mode = #tpu.pipeline_mode<synchronous>, transform_indices = @transform_10, window_bounds = array<i64: 1, 40>}, {pipeline_mode = #tpu.pipeline_mode<synchronous>, transform_indices = @transform_11, window_bounds = array<i64: 40, 3>}, {pipeline_mode = #tpu.pipeline_mode<synchronous>, transform_indices = @transform_12, window_bounds = array<i64: 1, 3>}, {transform_indices = @transform_13, window_bounds = array<i64: 1, 1, 3>}]} {
    %c0 = arith.constant 0 : index
    %c0_0 = arith.constant 0 : index
    %c0_1 = arith.constant 0 : index
    %0 = vector.load %arg1[%c0, %c0_0, %c0_1] : memref<1x3x960xf32, #tpu.memory_space<vmem>>, vector<1x3x960xf32>
    %1 = vector.shape_cast %0 : vector<1x3x960xf32> to vector<3x960xf32>
    %2 = vector.extract_strided_slice %1 {offsets = [0, 0], sizes = [3, 840], strides = [1, 1]} : vector<3x960xf32> to vector<3x840xf32>
    %3 = arith.truncf %2 : vector<3x840xf32> to vector<3x840xbf16>
    %c0_2 = arith.constant 0 : index
    %c0_3 = arith.constant 0 : index
    %c0_4 = arith.constant 0 : index
    %4 = vector.load %arg2[%c0_2, %c0_3, %c0_4] : memref<9x9x3xbf16, #tpu.memory_space<vmem>>, vector<1x9x3xbf16>
    %5 = vector.shape_cast %4 : vector<1x9x3xbf16> to vector<9x3xbf16>
    %cst = arith.constant dense<0.000000e+00> : vector<9x840xf32>
    %6 = tpu.matmul %5, %3, %cst {dimension_numbers = #tpu.dot_dimension_numbers<[1], [0], [0], [1], [0, 0, 1, 1], [], []>} : vector<9x3xbf16>, vector<3x840xbf16>, vector<9x840xf32> -> vector<9x840xf32>
    %7 = vector.extract_strided_slice %1 {offsets = [0, 1], sizes = [3, 840], strides = [1, 1]} : vector<3x960xf32> to vector<3x840xf32>
    %8 = arith.truncf %7 : vector<3x840xf32> to vector<3x840xbf16>
    %c1 = arith.constant 1 : index
    %c0_5 = arith.constant 0 : index
    %c0_6 = arith.constant 0 : index
    %9 = vector.load %arg2[%c1, %c0_5, %c0_6] : memref<9x9x3xbf16, #tpu.memory_space<vmem>>, vector<1x9x3xbf16>
    %10 = vector.shape_cast %9 : vector<1x9x3xbf16> to vector<9x3xbf16>
    %cst_7 = arith.constant dense<0.000000e+00> : vector<9x840xf32>
    %11 = tpu.matmul %10, %8, %cst_7 {dimension_numbers = #tpu.dot_dimension_numbers<[1], [0], [0], [1], [0, 0, 1, 1], [], []>} : vector<9x3xbf16>, vector<3x840xbf16>, vector<9x840xf32> -> vector<9x840xf32>
    %12 = arith.addf %6, %11 : vector<9x840xf32>
    %13 = vector.extract_strided_slice %1 {offsets = [0, 2], sizes = [3, 840], strides = [1, 1]} : vector<3x960xf32> to vector<3x840xf32>
    %14 = arith.truncf %13 : vector<3x840xf32> to vector<3x840xbf16>
    %c2 = arith.constant 2 : index
    %c0_8 = arith.constant 0 : index
    %c0_9 = arith.constant 0 : index
    %15 = vector.load %arg2[%c2, %c0_8, %c0_9] : memref<9x9x3xbf16, #tpu.memory_space<vmem>>, vector<1x9x3xbf16>
    %16 = vector.shape_cast %15 : vector<1x9x3xbf16> to vector<9x3xbf16>
    %cst_10 = arith.constant dense<0.000000e+00> : vector<9x840xf32>
    %17 = tpu.matmul %16, %14, %cst_10 {dimension_numbers = #tpu.dot_dimension_numbers<[1], [0], [0], [1], [0, 0, 1, 1], [], []>} : vector<9x3xbf16>, vector<3x840xbf16>, vector<9x840xf32> -> vector<9x840xf32>
    %18 = arith.addf %12, %17 : vector<9x840xf32>
    %19 = vector.extract_strided_slice %1 {offsets = [0, 30], sizes = [3, 840], strides = [1, 1]} : vector<3x960xf32> to vector<3x840xf32>
    %20 = arith.truncf %19 : vector<3x840xf32> to vector<3x840xbf16>
    %c3 = arith.constant 3 : index
    %c0_11 = arith.constant 0 : index
    %c0_12 = arith.constant 0 : index
    %21 = vector.load %arg2[%c3, %c0_11, %c0_12] : memref<9x9x3xbf16, #tpu.memory_space<vmem>>, vector<1x9x3xbf16>
    %22 = vector.shape_cast %21 : vector<1x9x3xbf16> to vector<9x3xbf16>
    %cst_13 = arith.constant dense<0.000000e+00> : vector<9x840xf32>
    %23 = tpu.matmul %22, %20, %cst_13 {dimension_numbers = #tpu.dot_dimension_numbers<[1], [0], [0], [1], [0, 0, 1, 1], [], []>} : vector<9x3xbf16>, vector<3x840xbf16>, vector<9x840xf32> -> vector<9x840xf32>
    %24 = arith.addf %18, %23 : vector<9x840xf32>
    %25 = vector.extract_strided_slice %1 {offsets = [0, 31], sizes = [3, 840], strides = [1, 1]} : vector<3x960xf32> to vector<3x840xf32>
    %26 = arith.truncf %25 : vector<3x840xf32> to vector<3x840xbf16>
    %c4 = arith.constant 4 : index
    %c0_14 = arith.constant 0 : index
    %c0_15 = arith.constant 0 : index
    %27 = vector.load %arg2[%c4, %c0_14, %c0_15] : memref<9x9x3xbf16, #tpu.memory_space<vmem>>, vector<1x9x3xbf16>
    %28 = vector.shape_cast %27 : vector<1x9x3xbf16> to vector<9x3xbf16>
    %cst_16 = arith.constant dense<0.000000e+00> : vector<9x840xf32>
    %29 = tpu.matmul %28, %26, %cst_16 {dimension_numbers = #tpu.dot_dimension_numbers<[1], [0], [0], [1], [0, 0, 1, 1], [], []>} : vector<9x3xbf16>, vector<3x840xbf16>, vector<9x840xf32> -> vector<9x840xf32>
    %30 = arith.addf %24, %29 : vector<9x840xf32>
    %31 = vector.extract_strided_slice %1 {offsets = [0, 32], sizes = [3, 840], strides = [1, 1]} : vector<3x960xf32> to vector<3x840xf32>
    %32 = arith.truncf %31 : vector<3x840xf32> to vector<3x840xbf16>
    %c5 = arith.constant 5 : index
    %c0_17 = arith.constant 0 : index
    %c0_18 = arith.constant 0 : index
    %33 = vector.load %arg2[%c5, %c0_17, %c0_18] : memref<9x9x3xbf16, #tpu.memory_space<vmem>>, vector<1x9x3xbf16>
    %34 = vector.shape_cast %33 : vector<1x9x3xbf16> to vector<9x3xbf16>
    %cst_19 = arith.constant dense<0.000000e+00> : vector<9x840xf32>
    %35 = tpu.matmul %34, %32, %cst_19 {dimension_numbers = #tpu.dot_dimension_numbers<[1], [0], [0], [1], [0, 0, 1, 1], [], []>} : vector<9x3xbf16>, vector<3x840xbf16>, vector<9x840xf32> -> vector<9x840xf32>
    %36 = arith.addf %30, %35 : vector<9x840xf32>
    %37 = vector.extract_strided_slice %1 {offsets = [0, 60], sizes = [3, 840], strides = [1, 1]} : vector<3x960xf32> to vector<3x840xf32>
    %38 = arith.truncf %37 : vector<3x840xf32> to vector<3x840xbf16>
    %c6 = arith.constant 6 : index
    %c0_20 = arith.constant 0 : index
    %c0_21 = arith.constant 0 : index
    %39 = vector.load %arg2[%c6, %c0_20, %c0_21] : memref<9x9x3xbf16, #tpu.memory_space<vmem>>, vector<1x9x3xbf16>
    %40 = vector.shape_cast %39 : vector<1x9x3xbf16> to vector<9x3xbf16>
    %cst_22 = arith.constant dense<0.000000e+00> : vector<9x840xf32>
    %41 = tpu.matmul %40, %38, %cst_22 {dimension_numbers = #tpu.dot_dimension_numbers<[1], [0], [0], [1], [0, 0, 1, 1], [], []>} : vector<9x3xbf16>, vector<3x840xbf16>, vector<9x840xf32> -> vector<9x840xf32>
    %42 = arith.addf %36, %41 : vector<9x840xf32>
    %43 = vector.extract_strided_slice %1 {offsets = [0, 61], sizes = [3, 840], strides = [1, 1]} : vector<3x960xf32> to vector<3x840xf32>
    %44 = arith.truncf %43 : vector<3x840xf32> to vector<3x840xbf16>
    %c7 = arith.constant 7 : index
    %c0_23 = arith.constant 0 : index
    %c0_24 = arith.constant 0 : index
    %45 = vector.load %arg2[%c7, %c0_23, %c0_24] : memref<9x9x3xbf16, #tpu.memory_space<vmem>>, vector<1x9x3xbf16>
    %46 = vector.shape_cast %45 : vector<1x9x3xbf16> to vector<9x3xbf16>
    %cst_25 = arith.constant dense<0.000000e+00> : vector<9x840xf32>
    %47 = tpu.matmul %46, %44, %cst_25 {dimension_numbers = #tpu.dot_dimension_numbers<[1], [0], [0], [1], [0, 0, 1, 1], [], []>} : vector<9x3xbf16>, vector<3x840xbf16>, vector<9x840xf32> -> vector<9x840xf32>
    %48 = arith.addf %42, %47 : vector<9x840xf32>
    %49 = vector.extract_strided_slice %1 {offsets = [0, 62], sizes = [3, 840], strides = [1, 1]} : vector<3x960xf32> to vector<3x840xf32>
    %50 = arith.truncf %49 : vector<3x840xf32> to vector<3x840xbf16>
    %c8 = arith.constant 8 : index
    %c0_26 = arith.constant 0 : index
    %c0_27 = arith.constant 0 : index
    %51 = vector.load %arg2[%c8, %c0_26, %c0_27] : memref<9x9x3xbf16, #tpu.memory_space<vmem>>, vector<1x9x3xbf16>
    %52 = vector.shape_cast %51 : vector<1x9x3xbf16> to vector<9x3xbf16>
    %cst_28 = arith.constant dense<0.000000e+00> : vector<9x840xf32>
    %53 = tpu.matmul %52, %50, %cst_28 {dimension_numbers = #tpu.dot_dimension_numbers<[1], [0], [0], [1], [0, 0, 1, 1], [], []>} : vector<9x3xbf16>, vector<3x840xbf16>, vector<9x840xf32> -> vector<9x840xf32>
    %54 = arith.addf %48, %53 : vector<9x840xf32>
    %55 = vector.extract_strided_slice %54 {offsets = [0, 0], sizes = [9, 807], strides = [1, 1]} : vector<9x840xf32> to vector<9x807xf32>
    %56 = vector.extract_strided_slice %54 {offsets = [0, 1], sizes = [9, 807], strides = [1, 1]} : vector<9x840xf32> to vector<9x807xf32>
    %57 = arith.maximumf %55, %56 : vector<9x807xf32>
    %58 = vector.extract_strided_slice %54 {offsets = [0, 30], sizes = [9, 807], strides = [1, 1]} : vector<9x840xf32> to vector<9x807xf32>
    %59 = vector.extract_strided_slice %54 {offsets = [0, 31], sizes = [9, 807], strides = [1, 1]} : vector<9x840xf32> to vector<9x807xf32>
    %60 = arith.maximumf %58, %59 : vector<9x807xf32>
    %61 = arith.maximumf %57, %60 : vector<9x807xf32>
    %c0_29 = arith.constant 0 : index
    %c0_30 = arith.constant 0 : index
    %62 = vector.load %arg4[%c0_29, %c0_30] : memref<807x196xf32, #tpu.memory_space<vmem>>, vector<807x196xf32>
    %cst_31 = arith.constant dense<0.000000e+00> : vector<9x196xf32>
    %63 = tpu.matmul %61, %62, %cst_31 {dimension_numbers = #tpu.dot_dimension_numbers<[1], [0], [0], [1], [0, 0, 1, 1], [], []>} : vector<9x807xf32>, vector<807x196xf32>, vector<9x196xf32> -> vector<9x196xf32>
    %c0_32 = arith.constant 0 : index
    %c0_33 = arith.constant 0 : index
    %64 = vector.load %arg3[%c0_32, %c0_33] : memref<9x1xf32, #tpu.memory_space<vmem>>, vector<9x1xf32>
    %65 = vector.broadcast %64 : vector<9x1xf32> to vector<9x196xf32>
    %66 = arith.addf %63, %65 : vector<9x196xf32>
    %cst_34 = arith.constant 0.000000e+00 : f32
    %67 = vector.broadcast %cst_34 : f32 to vector<9x196xf32>
    %68 = arith.maximumf %66, %67 : vector<9x196xf32>
    %69 = vector.extract_strided_slice %68 {offsets = [0, 0], sizes = [9, 166], strides = [1, 1]} : vector<9x196xf32> to vector<9x166xf32>
    %70 = arith.truncf %69 : vector<9x166xf32> to vector<9x166xbf16>
    %c0_35 = arith.constant 0 : index
    %c0_36 = arith.constant 0 : index
    %c0_37 = arith.constant 0 : index
    %71 = vector.load %arg5[%c0_35, %c0_36, %c0_37] : memref<9x25x9xbf16, #tpu.memory_space<vmem>>, vector<1x25x9xbf16>
    %72 = vector.shape_cast %71 : vector<1x25x9xbf16> to vector<25x9xbf16>
    %cst_38 = arith.constant dense<0.000000e+00> : vector<25x166xf32>
    %73 = tpu.matmul %72, %70, %cst_38 {dimension_numbers = #tpu.dot_dimension_numbers<[1], [0], [0], [1], [0, 0, 1, 1], [], []>} : vector<25x9xbf16>, vector<9x166xbf16>, vector<25x166xf32> -> vector<25x166xf32>
    %74 = vector.extract_strided_slice %68 {offsets = [0, 1], sizes = [9, 166], strides = [1, 1]} : vector<9x196xf32> to vector<9x166xf32>
    %75 = arith.truncf %74 : vector<9x166xf32> to vector<9x166xbf16>
    %c1_39 = arith.constant 1 : index
    %c0_40 = arith.constant 0 : index
    %c0_41 = arith.constant 0 : index
    %76 = vector.load %arg5[%c1_39, %c0_40, %c0_41] : memref<9x25x9xbf16, #tpu.memory_space<vmem>>, vector<1x25x9xbf16>
    %77 = vector.shape_cast %76 : vector<1x25x9xbf16> to vector<25x9xbf16>
    %cst_42 = arith.constant dense<0.000000e+00> : vector<25x166xf32>
    %78 = tpu.matmul %77, %75, %cst_42 {dimension_numbers = #tpu.dot_dimension_numbers<[1], [0], [0], [1], [0, 0, 1, 1], [], []>} : vector<25x9xbf16>, vector<9x166xbf16>, vector<25x166xf32> -> vector<25x166xf32>
    %79 = arith.addf %73, %78 : vector<25x166xf32>
    %80 = vector.extract_strided_slice %68 {offsets = [0, 2], sizes = [9, 166], strides = [1, 1]} : vector<9x196xf32> to vector<9x166xf32>
    %81 = arith.truncf %80 : vector<9x166xf32> to vector<9x166xbf16>
    %c2_43 = arith.constant 2 : index
    %c0_44 = arith.constant 0 : index
    %c0_45 = arith.constant 0 : index
    %82 = vector.load %arg5[%c2_43, %c0_44, %c0_45] : memref<9x25x9xbf16, #tpu.memory_space<vmem>>, vector<1x25x9xbf16>
    %83 = vector.shape_cast %82 : vector<1x25x9xbf16> to vector<25x9xbf16>
    %cst_46 = arith.constant dense<0.000000e+00> : vector<25x166xf32>
    %84 = tpu.matmul %83, %81, %cst_46 {dimension_numbers = #tpu.dot_dimension_numbers<[1], [0], [0], [1], [0, 0, 1, 1], [], []>} : vector<25x9xbf16>, vector<9x166xbf16>, vector<25x166xf32> -> vector<25x166xf32>
    %85 = arith.addf %79, %84 : vector<25x166xf32>
    %86 = vector.extract_strided_slice %68 {offsets = [0, 14], sizes = [9, 166], strides = [1, 1]} : vector<9x196xf32> to vector<9x166xf32>
    %87 = arith.truncf %86 : vector<9x166xf32> to vector<9x166xbf16>
    %c3_47 = arith.constant 3 : index
    %c0_48 = arith.constant 0 : index
    %c0_49 = arith.constant 0 : index
    %88 = vector.load %arg5[%c3_47, %c0_48, %c0_49] : memref<9x25x9xbf16, #tpu.memory_space<vmem>>, vector<1x25x9xbf16>
    %89 = vector.shape_cast %88 : vector<1x25x9xbf16> to vector<25x9xbf16>
    %cst_50 = arith.constant dense<0.000000e+00> : vector<25x166xf32>
    %90 = tpu.matmul %89, %87, %cst_50 {dimension_numbers = #tpu.dot_dimension_numbers<[1], [0], [0], [1], [0, 0, 1, 1], [], []>} : vector<25x9xbf16>, vector<9x166xbf16>, vector<25x166xf32> -> vector<25x166xf32>
    %91 = arith.addf %85, %90 : vector<25x166xf32>
    %92 = vector.extract_strided_slice %68 {offsets = [0, 15], sizes = [9, 166], strides = [1, 1]} : vector<9x196xf32> to vector<9x166xf32>
    %93 = arith.truncf %92 : vector<9x166xf32> to vector<9x166xbf16>
    %c4_51 = arith.constant 4 : index
    %c0_52 = arith.constant 0 : index
    %c0_53 = arith.constant 0 : index
    %94 = vector.load %arg5[%c4_51, %c0_52, %c0_53] : memref<9x25x9xbf16, #tpu.memory_space<vmem>>, vector<1x25x9xbf16>
    %95 = vector.shape_cast %94 : vector<1x25x9xbf16> to vector<25x9xbf16>
    %cst_54 = arith.constant dense<0.000000e+00> : vector<25x166xf32>
    %96 = tpu.matmul %95, %93, %cst_54 {dimension_numbers = #tpu.dot_dimension_numbers<[1], [0], [0], [1], [0, 0, 1, 1], [], []>} : vector<25x9xbf16>, vector<9x166xbf16>, vector<25x166xf32> -> vector<25x166xf32>
    %97 = arith.addf %91, %96 : vector<25x166xf32>
    %98 = vector.extract_strided_slice %68 {offsets = [0, 16], sizes = [9, 166], strides = [1, 1]} : vector<9x196xf32> to vector<9x166xf32>
    %99 = arith.truncf %98 : vector<9x166xf32> to vector<9x166xbf16>
    %c5_55 = arith.constant 5 : index
    %c0_56 = arith.constant 0 : index
    %c0_57 = arith.constant 0 : index
    %100 = vector.load %arg5[%c5_55, %c0_56, %c0_57] : memref<9x25x9xbf16, #tpu.memory_space<vmem>>, vector<1x25x9xbf16>
    %101 = vector.shape_cast %100 : vector<1x25x9xbf16> to vector<25x9xbf16>
    %cst_58 = arith.constant dense<0.000000e+00> : vector<25x166xf32>
    %102 = tpu.matmul %101, %99, %cst_58 {dimension_numbers = #tpu.dot_dimension_numbers<[1], [0], [0], [1], [0, 0, 1, 1], [], []>} : vector<25x9xbf16>, vector<9x166xbf16>, vector<25x166xf32> -> vector<25x166xf32>
    %103 = arith.addf %97, %102 : vector<25x166xf32>
    %104 = vector.extract_strided_slice %68 {offsets = [0, 28], sizes = [9, 166], strides = [1, 1]} : vector<9x196xf32> to vector<9x166xf32>
    %105 = arith.truncf %104 : vector<9x166xf32> to vector<9x166xbf16>
    %c6_59 = arith.constant 6 : index
    %c0_60 = arith.constant 0 : index
    %c0_61 = arith.constant 0 : index
    %106 = vector.load %arg5[%c6_59, %c0_60, %c0_61] : memref<9x25x9xbf16, #tpu.memory_space<vmem>>, vector<1x25x9xbf16>
    %107 = vector.shape_cast %106 : vector<1x25x9xbf16> to vector<25x9xbf16>
    %cst_62 = arith.constant dense<0.000000e+00> : vector<25x166xf32>
    %108 = tpu.matmul %107, %105, %cst_62 {dimension_numbers = #tpu.dot_dimension_numbers<[1], [0], [0], [1], [0, 0, 1, 1], [], []>} : vector<25x9xbf16>, vector<9x166xbf16>, vector<25x166xf32> -> vector<25x166xf32>
    %109 = arith.addf %103, %108 : vector<25x166xf32>
    %110 = vector.extract_strided_slice %68 {offsets = [0, 29], sizes = [9, 166], strides = [1, 1]} : vector<9x196xf32> to vector<9x166xf32>
    %111 = arith.truncf %110 : vector<9x166xf32> to vector<9x166xbf16>
    %c7_63 = arith.constant 7 : index
    %c0_64 = arith.constant 0 : index
    %c0_65 = arith.constant 0 : index
    %112 = vector.load %arg5[%c7_63, %c0_64, %c0_65] : memref<9x25x9xbf16, #tpu.memory_space<vmem>>, vector<1x25x9xbf16>
    %113 = vector.shape_cast %112 : vector<1x25x9xbf16> to vector<25x9xbf16>
    %cst_66 = arith.constant dense<0.000000e+00> : vector<25x166xf32>
    %114 = tpu.matmul %113, %111, %cst_66 {dimension_numbers = #tpu.dot_dimension_numbers<[1], [0], [0], [1], [0, 0, 1, 1], [], []>} : vector<25x9xbf16>, vector<9x166xbf16>, vector<25x166xf32> -> vector<25x166xf32>
    %115 = arith.addf %109, %114 : vector<25x166xf32>
    %116 = vector.extract_strided_slice %68 {offsets = [0, 30], sizes = [9, 166], strides = [1, 1]} : vector<9x196xf32> to vector<9x166xf32>
    %117 = arith.truncf %116 : vector<9x166xf32> to vector<9x166xbf16>
    %c8_67 = arith.constant 8 : index
    %c0_68 = arith.constant 0 : index
    %c0_69 = arith.constant 0 : index
    %118 = vector.load %arg5[%c8_67, %c0_68, %c0_69] : memref<9x25x9xbf16, #tpu.memory_space<vmem>>, vector<1x25x9xbf16>
    %119 = vector.shape_cast %118 : vector<1x25x9xbf16> to vector<25x9xbf16>
    %cst_70 = arith.constant dense<0.000000e+00> : vector<25x166xf32>
    %120 = tpu.matmul %119, %117, %cst_70 {dimension_numbers = #tpu.dot_dimension_numbers<[1], [0], [0], [1], [0, 0, 1, 1], [], []>} : vector<25x9xbf16>, vector<9x166xbf16>, vector<25x166xf32> -> vector<25x166xf32>
    %121 = arith.addf %115, %120 : vector<25x166xf32>
    %122 = vector.extract_strided_slice %121 {offsets = [0, 0], sizes = [25, 151], strides = [1, 1]} : vector<25x166xf32> to vector<25x151xf32>
    %123 = vector.extract_strided_slice %121 {offsets = [0, 1], sizes = [25, 151], strides = [1, 1]} : vector<25x166xf32> to vector<25x151xf32>
    %124 = arith.maximumf %122, %123 : vector<25x151xf32>
    %125 = vector.extract_strided_slice %121 {offsets = [0, 14], sizes = [25, 151], strides = [1, 1]} : vector<25x166xf32> to vector<25x151xf32>
    %126 = vector.extract_strided_slice %121 {offsets = [0, 15], sizes = [25, 151], strides = [1, 1]} : vector<25x166xf32> to vector<25x151xf32>
    %127 = arith.maximumf %125, %126 : vector<25x151xf32>
    %128 = arith.maximumf %124, %127 : vector<25x151xf32>
    %c0_71 = arith.constant 0 : index
    %c0_72 = arith.constant 0 : index
    %129 = vector.load %arg7[%c0_71, %c0_72] : memref<151x36xf32, #tpu.memory_space<vmem>>, vector<151x36xf32>
    %cst_73 = arith.constant dense<0.000000e+00> : vector<25x36xf32>
    %130 = tpu.matmul %128, %129, %cst_73 {dimension_numbers = #tpu.dot_dimension_numbers<[1], [0], [0], [1], [0, 0, 1, 1], [], []>} : vector<25x151xf32>, vector<151x36xf32>, vector<25x36xf32> -> vector<25x36xf32>
    %c0_74 = arith.constant 0 : index
    %c0_75 = arith.constant 0 : index
    %131 = vector.load %arg6[%c0_74, %c0_75] : memref<25x1xf32, #tpu.memory_space<vmem>>, vector<25x1xf32>
    %132 = vector.broadcast %131 : vector<25x1xf32> to vector<25x36xf32>
    %133 = arith.addf %130, %132 : vector<25x36xf32>
    %cst_76 = arith.constant 0.000000e+00 : f32
    %134 = vector.broadcast %cst_76 : f32 to vector<25x36xf32>
    %135 = arith.maximumf %133, %134 : vector<25x36xf32>
    %c0_77 = arith.constant 0 : index
    %c0_78 = arith.constant 0 : index
    %136 = vector.load %arg9[%c0_77, %c0_78] : memref<1x100xf32, #tpu.memory_space<vmem>>, vector<1x100xf32>
    %137 = vector.extract_strided_slice %135 {offsets = [0, 0], sizes = [1, 36], strides = [1, 1]} : vector<25x36xf32> to vector<1x36xf32>
    %138 = arith.truncf %137 : vector<1x36xf32> to vector<1x36xbf16>
    %c0_79 = arith.constant 0 : index
    %c0_80 = arith.constant 0 : index
    %c0_81 = arith.constant 0 : index
    %139 = vector.load %arg8[%c0_79, %c0_80, %c0_81] : memref<25x36x100xbf16, #tpu.memory_space<vmem>>, vector<1x36x100xbf16>
    %140 = vector.shape_cast %139 : vector<1x36x100xbf16> to vector<36x100xbf16>
    %cst_82 = arith.constant dense<0.000000e+00> : vector<1x100xf32>
    %141 = tpu.matmul %138, %140, %cst_82 {dimension_numbers = #tpu.dot_dimension_numbers<[1], [0], [0], [1], [0, 0, 1, 1], [], []>} : vector<1x36xbf16>, vector<36x100xbf16>, vector<1x100xf32> -> vector<1x100xf32>
    %142 = arith.addf %136, %141 : vector<1x100xf32>
    %143 = vector.extract_strided_slice %135 {offsets = [1, 0], sizes = [1, 36], strides = [1, 1]} : vector<25x36xf32> to vector<1x36xf32>
    %144 = arith.truncf %143 : vector<1x36xf32> to vector<1x36xbf16>
    %c1_83 = arith.constant 1 : index
    %c0_84 = arith.constant 0 : index
    %c0_85 = arith.constant 0 : index
    %145 = vector.load %arg8[%c1_83, %c0_84, %c0_85] : memref<25x36x100xbf16, #tpu.memory_space<vmem>>, vector<1x36x100xbf16>
    %146 = vector.shape_cast %145 : vector<1x36x100xbf16> to vector<36x100xbf16>
    %cst_86 = arith.constant dense<0.000000e+00> : vector<1x100xf32>
    %147 = tpu.matmul %144, %146, %cst_86 {dimension_numbers = #tpu.dot_dimension_numbers<[1], [0], [0], [1], [0, 0, 1, 1], [], []>} : vector<1x36xbf16>, vector<36x100xbf16>, vector<1x100xf32> -> vector<1x100xf32>
    %148 = arith.addf %142, %147 : vector<1x100xf32>
    %149 = vector.extract_strided_slice %135 {offsets = [2, 0], sizes = [1, 36], strides = [1, 1]} : vector<25x36xf32> to vector<1x36xf32>
    %150 = arith.truncf %149 : vector<1x36xf32> to vector<1x36xbf16>
    %c2_87 = arith.constant 2 : index
    %c0_88 = arith.constant 0 : index
    %c0_89 = arith.constant 0 : index
    %151 = vector.load %arg8[%c2_87, %c0_88, %c0_89] : memref<25x36x100xbf16, #tpu.memory_space<vmem>>, vector<1x36x100xbf16>
    %152 = vector.shape_cast %151 : vector<1x36x100xbf16> to vector<36x100xbf16>
    %cst_90 = arith.constant dense<0.000000e+00> : vector<1x100xf32>
    %153 = tpu.matmul %150, %152, %cst_90 {dimension_numbers = #tpu.dot_dimension_numbers<[1], [0], [0], [1], [0, 0, 1, 1], [], []>} : vector<1x36xbf16>, vector<36x100xbf16>, vector<1x100xf32> -> vector<1x100xf32>
    %154 = arith.addf %148, %153 : vector<1x100xf32>
    %155 = vector.extract_strided_slice %135 {offsets = [3, 0], sizes = [1, 36], strides = [1, 1]} : vector<25x36xf32> to vector<1x36xf32>
    %156 = arith.truncf %155 : vector<1x36xf32> to vector<1x36xbf16>
    %c3_91 = arith.constant 3 : index
    %c0_92 = arith.constant 0 : index
    %c0_93 = arith.constant 0 : index
    %157 = vector.load %arg8[%c3_91, %c0_92, %c0_93] : memref<25x36x100xbf16, #tpu.memory_space<vmem>>, vector<1x36x100xbf16>
    %158 = vector.shape_cast %157 : vector<1x36x100xbf16> to vector<36x100xbf16>
    %cst_94 = arith.constant dense<0.000000e+00> : vector<1x100xf32>
    %159 = tpu.matmul %156, %158, %cst_94 {dimension_numbers = #tpu.dot_dimension_numbers<[1], [0], [0], [1], [0, 0, 1, 1], [], []>} : vector<1x36xbf16>, vector<36x100xbf16>, vector<1x100xf32> -> vector<1x100xf32>
    %160 = arith.addf %154, %159 : vector<1x100xf32>
    %161 = vector.extract_strided_slice %135 {offsets = [4, 0], sizes = [1, 36], strides = [1, 1]} : vector<25x36xf32> to vector<1x36xf32>
    %162 = arith.truncf %161 : vector<1x36xf32> to vector<1x36xbf16>
    %c4_95 = arith.constant 4 : index
    %c0_96 = arith.constant 0 : index
    %c0_97 = arith.constant 0 : index
    %163 = vector.load %arg8[%c4_95, %c0_96, %c0_97] : memref<25x36x100xbf16, #tpu.memory_space<vmem>>, vector<1x36x100xbf16>
    %164 = vector.shape_cast %163 : vector<1x36x100xbf16> to vector<36x100xbf16>
    %cst_98 = arith.constant dense<0.000000e+00> : vector<1x100xf32>
    %165 = tpu.matmul %162, %164, %cst_98 {dimension_numbers = #tpu.dot_dimension_numbers<[1], [0], [0], [1], [0, 0, 1, 1], [], []>} : vector<1x36xbf16>, vector<36x100xbf16>, vector<1x100xf32> -> vector<1x100xf32>
    %166 = arith.addf %160, %165 : vector<1x100xf32>
    %167 = vector.extract_strided_slice %135 {offsets = [5, 0], sizes = [1, 36], strides = [1, 1]} : vector<25x36xf32> to vector<1x36xf32>
    %168 = arith.truncf %167 : vector<1x36xf32> to vector<1x36xbf16>
    %c5_99 = arith.constant 5 : index
    %c0_100 = arith.constant 0 : index
    %c0_101 = arith.constant 0 : index
    %169 = vector.load %arg8[%c5_99, %c0_100, %c0_101] : memref<25x36x100xbf16, #tpu.memory_space<vmem>>, vector<1x36x100xbf16>
    %170 = vector.shape_cast %169 : vector<1x36x100xbf16> to vector<36x100xbf16>
    %cst_102 = arith.constant dense<0.000000e+00> : vector<1x100xf32>
    %171 = tpu.matmul %168, %170, %cst_102 {dimension_numbers = #tpu.dot_dimension_numbers<[1], [0], [0], [1], [0, 0, 1, 1], [], []>} : vector<1x36xbf16>, vector<36x100xbf16>, vector<1x100xf32> -> vector<1x100xf32>
    %172 = arith.addf %166, %171 : vector<1x100xf32>
    %173 = vector.extract_strided_slice %135 {offsets = [6, 0], sizes = [1, 36], strides = [1, 1]} : vector<25x36xf32> to vector<1x36xf32>
    %174 = arith.truncf %173 : vector<1x36xf32> to vector<1x36xbf16>
    %c6_103 = arith.constant 6 : index
    %c0_104 = arith.constant 0 : index
    %c0_105 = arith.constant 0 : index
    %175 = vector.load %arg8[%c6_103, %c0_104, %c0_105] : memref<25x36x100xbf16, #tpu.memory_space<vmem>>, vector<1x36x100xbf16>
    %176 = vector.shape_cast %175 : vector<1x36x100xbf16> to vector<36x100xbf16>
    %cst_106 = arith.constant dense<0.000000e+00> : vector<1x100xf32>
    %177 = tpu.matmul %174, %176, %cst_106 {dimension_numbers = #tpu.dot_dimension_numbers<[1], [0], [0], [1], [0, 0, 1, 1], [], []>} : vector<1x36xbf16>, vector<36x100xbf16>, vector<1x100xf32> -> vector<1x100xf32>
    %178 = arith.addf %172, %177 : vector<1x100xf32>
    %179 = vector.extract_strided_slice %135 {offsets = [7, 0], sizes = [1, 36], strides = [1, 1]} : vector<25x36xf32> to vector<1x36xf32>
    %180 = arith.truncf %179 : vector<1x36xf32> to vector<1x36xbf16>
    %c7_107 = arith.constant 7 : index
    %c0_108 = arith.constant 0 : index
    %c0_109 = arith.constant 0 : index
    %181 = vector.load %arg8[%c7_107, %c0_108, %c0_109] : memref<25x36x100xbf16, #tpu.memory_space<vmem>>, vector<1x36x100xbf16>
    %182 = vector.shape_cast %181 : vector<1x36x100xbf16> to vector<36x100xbf16>
    %cst_110 = arith.constant dense<0.000000e+00> : vector<1x100xf32>
    %183 = tpu.matmul %180, %182, %cst_110 {dimension_numbers = #tpu.dot_dimension_numbers<[1], [0], [0], [1], [0, 0, 1, 1], [], []>} : vector<1x36xbf16>, vector<36x100xbf16>, vector<1x100xf32> -> vector<1x100xf32>
    %184 = arith.addf %178, %183 : vector<1x100xf32>
    %185 = vector.extract_strided_slice %135 {offsets = [8, 0], sizes = [1, 36], strides = [1, 1]} : vector<25x36xf32> to vector<1x36xf32>
    %186 = arith.truncf %185 : vector<1x36xf32> to vector<1x36xbf16>
    %c8_111 = arith.constant 8 : index
    %c0_112 = arith.constant 0 : index
    %c0_113 = arith.constant 0 : index
    %187 = vector.load %arg8[%c8_111, %c0_112, %c0_113] : memref<25x36x100xbf16, #tpu.memory_space<vmem>>, vector<1x36x100xbf16>
    %188 = vector.shape_cast %187 : vector<1x36x100xbf16> to vector<36x100xbf16>
    %cst_114 = arith.constant dense<0.000000e+00> : vector<1x100xf32>
    %189 = tpu.matmul %186, %188, %cst_114 {dimension_numbers = #tpu.dot_dimension_numbers<[1], [0], [0], [1], [0, 0, 1, 1], [], []>} : vector<1x36xbf16>, vector<36x100xbf16>, vector<1x100xf32> -> vector<1x100xf32>
    %190 = arith.addf %184, %189 : vector<1x100xf32>
    %191 = vector.extract_strided_slice %135 {offsets = [9, 0], sizes = [1, 36], strides = [1, 1]} : vector<25x36xf32> to vector<1x36xf32>
    %192 = arith.truncf %191 : vector<1x36xf32> to vector<1x36xbf16>
    %c9 = arith.constant 9 : index
    %c0_115 = arith.constant 0 : index
    %c0_116 = arith.constant 0 : index
    %193 = vector.load %arg8[%c9, %c0_115, %c0_116] : memref<25x36x100xbf16, #tpu.memory_space<vmem>>, vector<1x36x100xbf16>
    %194 = vector.shape_cast %193 : vector<1x36x100xbf16> to vector<36x100xbf16>
    %cst_117 = arith.constant dense<0.000000e+00> : vector<1x100xf32>
    %195 = tpu.matmul %192, %194, %cst_117 {dimension_numbers = #tpu.dot_dimension_numbers<[1], [0], [0], [1], [0, 0, 1, 1], [], []>} : vector<1x36xbf16>, vector<36x100xbf16>, vector<1x100xf32> -> vector<1x100xf32>
    %196 = arith.addf %190, %195 : vector<1x100xf32>
    %197 = vector.extract_strided_slice %135 {offsets = [10, 0], sizes = [1, 36], strides = [1, 1]} : vector<25x36xf32> to vector<1x36xf32>
    %198 = arith.truncf %197 : vector<1x36xf32> to vector<1x36xbf16>
    %c10 = arith.constant 10 : index
    %c0_118 = arith.constant 0 : index
    %c0_119 = arith.constant 0 : index
    %199 = vector.load %arg8[%c10, %c0_118, %c0_119] : memref<25x36x100xbf16, #tpu.memory_space<vmem>>, vector<1x36x100xbf16>
    %200 = vector.shape_cast %199 : vector<1x36x100xbf16> to vector<36x100xbf16>
    %cst_120 = arith.constant dense<0.000000e+00> : vector<1x100xf32>
    %201 = tpu.matmul %198, %200, %cst_120 {dimension_numbers = #tpu.dot_dimension_numbers<[1], [0], [0], [1], [0, 0, 1, 1], [], []>} : vector<1x36xbf16>, vector<36x100xbf16>, vector<1x100xf32> -> vector<1x100xf32>
    %202 = arith.addf %196, %201 : vector<1x100xf32>
    %203 = vector.extract_strided_slice %135 {offsets = [11, 0], sizes = [1, 36], strides = [1, 1]} : vector<25x36xf32> to vector<1x36xf32>
    %204 = arith.truncf %203 : vector<1x36xf32> to vector<1x36xbf16>
    %c11 = arith.constant 11 : index
    %c0_121 = arith.constant 0 : index
    %c0_122 = arith.constant 0 : index
    %205 = vector.load %arg8[%c11, %c0_121, %c0_122] : memref<25x36x100xbf16, #tpu.memory_space<vmem>>, vector<1x36x100xbf16>
    %206 = vector.shape_cast %205 : vector<1x36x100xbf16> to vector<36x100xbf16>
    %cst_123 = arith.constant dense<0.000000e+00> : vector<1x100xf32>
    %207 = tpu.matmul %204, %206, %cst_123 {dimension_numbers = #tpu.dot_dimension_numbers<[1], [0], [0], [1], [0, 0, 1, 1], [], []>} : vector<1x36xbf16>, vector<36x100xbf16>, vector<1x100xf32> -> vector<1x100xf32>
    %208 = arith.addf %202, %207 : vector<1x100xf32>
    %209 = vector.extract_strided_slice %135 {offsets = [12, 0], sizes = [1, 36], strides = [1, 1]} : vector<25x36xf32> to vector<1x36xf32>
    %210 = arith.truncf %209 : vector<1x36xf32> to vector<1x36xbf16>
    %c12 = arith.constant 12 : index
    %c0_124 = arith.constant 0 : index
    %c0_125 = arith.constant 0 : index
    %211 = vector.load %arg8[%c12, %c0_124, %c0_125] : memref<25x36x100xbf16, #tpu.memory_space<vmem>>, vector<1x36x100xbf16>
    %212 = vector.shape_cast %211 : vector<1x36x100xbf16> to vector<36x100xbf16>
    %cst_126 = arith.constant dense<0.000000e+00> : vector<1x100xf32>
    %213 = tpu.matmul %210, %212, %cst_126 {dimension_numbers = #tpu.dot_dimension_numbers<[1], [0], [0], [1], [0, 0, 1, 1], [], []>} : vector<1x36xbf16>, vector<36x100xbf16>, vector<1x100xf32> -> vector<1x100xf32>
    %214 = arith.addf %208, %213 : vector<1x100xf32>
    %215 = vector.extract_strided_slice %135 {offsets = [13, 0], sizes = [1, 36], strides = [1, 1]} : vector<25x36xf32> to vector<1x36xf32>
    %216 = arith.truncf %215 : vector<1x36xf32> to vector<1x36xbf16>
    %c13 = arith.constant 13 : index
    %c0_127 = arith.constant 0 : index
    %c0_128 = arith.constant 0 : index
    %217 = vector.load %arg8[%c13, %c0_127, %c0_128] : memref<25x36x100xbf16, #tpu.memory_space<vmem>>, vector<1x36x100xbf16>
    %218 = vector.shape_cast %217 : vector<1x36x100xbf16> to vector<36x100xbf16>
    %cst_129 = arith.constant dense<0.000000e+00> : vector<1x100xf32>
    %219 = tpu.matmul %216, %218, %cst_129 {dimension_numbers = #tpu.dot_dimension_numbers<[1], [0], [0], [1], [0, 0, 1, 1], [], []>} : vector<1x36xbf16>, vector<36x100xbf16>, vector<1x100xf32> -> vector<1x100xf32>
    %220 = arith.addf %214, %219 : vector<1x100xf32>
    %221 = vector.extract_strided_slice %135 {offsets = [14, 0], sizes = [1, 36], strides = [1, 1]} : vector<25x36xf32> to vector<1x36xf32>
    %222 = arith.truncf %221 : vector<1x36xf32> to vector<1x36xbf16>
    %c14 = arith.constant 14 : index
    %c0_130 = arith.constant 0 : index
    %c0_131 = arith.constant 0 : index
    %223 = vector.load %arg8[%c14, %c0_130, %c0_131] : memref<25x36x100xbf16, #tpu.memory_space<vmem>>, vector<1x36x100xbf16>
    %224 = vector.shape_cast %223 : vector<1x36x100xbf16> to vector<36x100xbf16>
    %cst_132 = arith.constant dense<0.000000e+00> : vector<1x100xf32>
    %225 = tpu.matmul %222, %224, %cst_132 {dimension_numbers = #tpu.dot_dimension_numbers<[1], [0], [0], [1], [0, 0, 1, 1], [], []>} : vector<1x36xbf16>, vector<36x100xbf16>, vector<1x100xf32> -> vector<1x100xf32>
    %226 = arith.addf %220, %225 : vector<1x100xf32>
    %227 = vector.extract_strided_slice %135 {offsets = [15, 0], sizes = [1, 36], strides = [1, 1]} : vector<25x36xf32> to vector<1x36xf32>
    %228 = arith.truncf %227 : vector<1x36xf32> to vector<1x36xbf16>
    %c15 = arith.constant 15 : index
    %c0_133 = arith.constant 0 : index
    %c0_134 = arith.constant 0 : index
    %229 = vector.load %arg8[%c15, %c0_133, %c0_134] : memref<25x36x100xbf16, #tpu.memory_space<vmem>>, vector<1x36x100xbf16>
    %230 = vector.shape_cast %229 : vector<1x36x100xbf16> to vector<36x100xbf16>
    %cst_135 = arith.constant dense<0.000000e+00> : vector<1x100xf32>
    %231 = tpu.matmul %228, %230, %cst_135 {dimension_numbers = #tpu.dot_dimension_numbers<[1], [0], [0], [1], [0, 0, 1, 1], [], []>} : vector<1x36xbf16>, vector<36x100xbf16>, vector<1x100xf32> -> vector<1x100xf32>
    %232 = arith.addf %226, %231 : vector<1x100xf32>
    %233 = vector.extract_strided_slice %135 {offsets = [16, 0], sizes = [1, 36], strides = [1, 1]} : vector<25x36xf32> to vector<1x36xf32>
    %234 = arith.truncf %233 : vector<1x36xf32> to vector<1x36xbf16>
    %c16 = arith.constant 16 : index
    %c0_136 = arith.constant 0 : index
    %c0_137 = arith.constant 0 : index
    %235 = vector.load %arg8[%c16, %c0_136, %c0_137] : memref<25x36x100xbf16, #tpu.memory_space<vmem>>, vector<1x36x100xbf16>
    %236 = vector.shape_cast %235 : vector<1x36x100xbf16> to vector<36x100xbf16>
    %cst_138 = arith.constant dense<0.000000e+00> : vector<1x100xf32>
    %237 = tpu.matmul %234, %236, %cst_138 {dimension_numbers = #tpu.dot_dimension_numbers<[1], [0], [0], [1], [0, 0, 1, 1], [], []>} : vector<1x36xbf16>, vector<36x100xbf16>, vector<1x100xf32> -> vector<1x100xf32>
    %238 = arith.addf %232, %237 : vector<1x100xf32>
    %239 = vector.extract_strided_slice %135 {offsets = [17, 0], sizes = [1, 36], strides = [1, 1]} : vector<25x36xf32> to vector<1x36xf32>
    %240 = arith.truncf %239 : vector<1x36xf32> to vector<1x36xbf16>
    %c17 = arith.constant 17 : index
    %c0_139 = arith.constant 0 : index
    %c0_140 = arith.constant 0 : index
    %241 = vector.load %arg8[%c17, %c0_139, %c0_140] : memref<25x36x100xbf16, #tpu.memory_space<vmem>>, vector<1x36x100xbf16>
    %242 = vector.shape_cast %241 : vector<1x36x100xbf16> to vector<36x100xbf16>
    %cst_141 = arith.constant dense<0.000000e+00> : vector<1x100xf32>
    %243 = tpu.matmul %240, %242, %cst_141 {dimension_numbers = #tpu.dot_dimension_numbers<[1], [0], [0], [1], [0, 0, 1, 1], [], []>} : vector<1x36xbf16>, vector<36x100xbf16>, vector<1x100xf32> -> vector<1x100xf32>
    %244 = arith.addf %238, %243 : vector<1x100xf32>
    %245 = vector.extract_strided_slice %135 {offsets = [18, 0], sizes = [1, 36], strides = [1, 1]} : vector<25x36xf32> to vector<1x36xf32>
    %246 = arith.truncf %245 : vector<1x36xf32> to vector<1x36xbf16>
    %c18 = arith.constant 18 : index
    %c0_142 = arith.constant 0 : index
    %c0_143 = arith.constant 0 : index
    %247 = vector.load %arg8[%c18, %c0_142, %c0_143] : memref<25x36x100xbf16, #tpu.memory_space<vmem>>, vector<1x36x100xbf16>
    %248 = vector.shape_cast %247 : vector<1x36x100xbf16> to vector<36x100xbf16>
    %cst_144 = arith.constant dense<0.000000e+00> : vector<1x100xf32>
    %249 = tpu.matmul %246, %248, %cst_144 {dimension_numbers = #tpu.dot_dimension_numbers<[1], [0], [0], [1], [0, 0, 1, 1], [], []>} : vector<1x36xbf16>, vector<36x100xbf16>, vector<1x100xf32> -> vector<1x100xf32>
    %250 = arith.addf %244, %249 : vector<1x100xf32>
    %251 = vector.extract_strided_slice %135 {offsets = [19, 0], sizes = [1, 36], strides = [1, 1]} : vector<25x36xf32> to vector<1x36xf32>
    %252 = arith.truncf %251 : vector<1x36xf32> to vector<1x36xbf16>
    %c19 = arith.constant 19 : index
    %c0_145 = arith.constant 0 : index
    %c0_146 = arith.constant 0 : index
    %253 = vector.load %arg8[%c19, %c0_145, %c0_146] : memref<25x36x100xbf16, #tpu.memory_space<vmem>>, vector<1x36x100xbf16>
    %254 = vector.shape_cast %253 : vector<1x36x100xbf16> to vector<36x100xbf16>
    %cst_147 = arith.constant dense<0.000000e+00> : vector<1x100xf32>
    %255 = tpu.matmul %252, %254, %cst_147 {dimension_numbers = #tpu.dot_dimension_numbers<[1], [0], [0], [1], [0, 0, 1, 1], [], []>} : vector<1x36xbf16>, vector<36x100xbf16>, vector<1x100xf32> -> vector<1x100xf32>
    %256 = arith.addf %250, %255 : vector<1x100xf32>
    %257 = vector.extract_strided_slice %135 {offsets = [20, 0], sizes = [1, 36], strides = [1, 1]} : vector<25x36xf32> to vector<1x36xf32>
    %258 = arith.truncf %257 : vector<1x36xf32> to vector<1x36xbf16>
    %c20 = arith.constant 20 : index
    %c0_148 = arith.constant 0 : index
    %c0_149 = arith.constant 0 : index
    %259 = vector.load %arg8[%c20, %c0_148, %c0_149] : memref<25x36x100xbf16, #tpu.memory_space<vmem>>, vector<1x36x100xbf16>
    %260 = vector.shape_cast %259 : vector<1x36x100xbf16> to vector<36x100xbf16>
    %cst_150 = arith.constant dense<0.000000e+00> : vector<1x100xf32>
    %261 = tpu.matmul %258, %260, %cst_150 {dimension_numbers = #tpu.dot_dimension_numbers<[1], [0], [0], [1], [0, 0, 1, 1], [], []>} : vector<1x36xbf16>, vector<36x100xbf16>, vector<1x100xf32> -> vector<1x100xf32>
    %262 = arith.addf %256, %261 : vector<1x100xf32>
    %263 = vector.extract_strided_slice %135 {offsets = [21, 0], sizes = [1, 36], strides = [1, 1]} : vector<25x36xf32> to vector<1x36xf32>
    %264 = arith.truncf %263 : vector<1x36xf32> to vector<1x36xbf16>
    %c21 = arith.constant 21 : index
    %c0_151 = arith.constant 0 : index
    %c0_152 = arith.constant 0 : index
    %265 = vector.load %arg8[%c21, %c0_151, %c0_152] : memref<25x36x100xbf16, #tpu.memory_space<vmem>>, vector<1x36x100xbf16>
    %266 = vector.shape_cast %265 : vector<1x36x100xbf16> to vector<36x100xbf16>
    %cst_153 = arith.constant dense<0.000000e+00> : vector<1x100xf32>
    %267 = tpu.matmul %264, %266, %cst_153 {dimension_numbers = #tpu.dot_dimension_numbers<[1], [0], [0], [1], [0, 0, 1, 1], [], []>} : vector<1x36xbf16>, vector<36x100xbf16>, vector<1x100xf32> -> vector<1x100xf32>
    %268 = arith.addf %262, %267 : vector<1x100xf32>
    %269 = vector.extract_strided_slice %135 {offsets = [22, 0], sizes = [1, 36], strides = [1, 1]} : vector<25x36xf32> to vector<1x36xf32>
    %270 = arith.truncf %269 : vector<1x36xf32> to vector<1x36xbf16>
    %c22 = arith.constant 22 : index
    %c0_154 = arith.constant 0 : index
    %c0_155 = arith.constant 0 : index
    %271 = vector.load %arg8[%c22, %c0_154, %c0_155] : memref<25x36x100xbf16, #tpu.memory_space<vmem>>, vector<1x36x100xbf16>
    %272 = vector.shape_cast %271 : vector<1x36x100xbf16> to vector<36x100xbf16>
    %cst_156 = arith.constant dense<0.000000e+00> : vector<1x100xf32>
    %273 = tpu.matmul %270, %272, %cst_156 {dimension_numbers = #tpu.dot_dimension_numbers<[1], [0], [0], [1], [0, 0, 1, 1], [], []>} : vector<1x36xbf16>, vector<36x100xbf16>, vector<1x100xf32> -> vector<1x100xf32>
    %274 = arith.addf %268, %273 : vector<1x100xf32>
    %275 = vector.extract_strided_slice %135 {offsets = [23, 0], sizes = [1, 36], strides = [1, 1]} : vector<25x36xf32> to vector<1x36xf32>
    %276 = arith.truncf %275 : vector<1x36xf32> to vector<1x36xbf16>
    %c23 = arith.constant 23 : index
    %c0_157 = arith.constant 0 : index
    %c0_158 = arith.constant 0 : index
    %277 = vector.load %arg8[%c23, %c0_157, %c0_158] : memref<25x36x100xbf16, #tpu.memory_space<vmem>>, vector<1x36x100xbf16>
    %278 = vector.shape_cast %277 : vector<1x36x100xbf16> to vector<36x100xbf16>
    %cst_159 = arith.constant dense<0.000000e+00> : vector<1x100xf32>
    %279 = tpu.matmul %276, %278, %cst_159 {dimension_numbers = #tpu.dot_dimension_numbers<[1], [0], [0], [1], [0, 0, 1, 1], [], []>} : vector<1x36xbf16>, vector<36x100xbf16>, vector<1x100xf32> -> vector<1x100xf32>
    %280 = arith.addf %274, %279 : vector<1x100xf32>
    %281 = vector.extract_strided_slice %135 {offsets = [24, 0], sizes = [1, 36], strides = [1, 1]} : vector<25x36xf32> to vector<1x36xf32>
    %282 = arith.truncf %281 : vector<1x36xf32> to vector<1x36xbf16>
    %c24 = arith.constant 24 : index
    %c0_160 = arith.constant 0 : index
    %c0_161 = arith.constant 0 : index
    %283 = vector.load %arg8[%c24, %c0_160, %c0_161] : memref<25x36x100xbf16, #tpu.memory_space<vmem>>, vector<1x36x100xbf16>
    %284 = vector.shape_cast %283 : vector<1x36x100xbf16> to vector<36x100xbf16>
    %cst_162 = arith.constant dense<0.000000e+00> : vector<1x100xf32>
    %285 = tpu.matmul %282, %284, %cst_162 {dimension_numbers = #tpu.dot_dimension_numbers<[1], [0], [0], [1], [0, 0, 1, 1], [], []>} : vector<1x36xbf16>, vector<36x100xbf16>, vector<1x100xf32> -> vector<1x100xf32>
    %286 = arith.addf %280, %285 : vector<1x100xf32>
    %cst_163 = arith.constant 0.000000e+00 : f32
    %287 = vector.broadcast %cst_163 : f32 to vector<1x100xf32>
    %288 = arith.maximumf %286, %287 : vector<1x100xf32>
    %289 = arith.truncf %288 : vector<1x100xf32> to vector<1x100xbf16>
    %c0_164 = arith.constant 0 : index
    %c0_165 = arith.constant 0 : index
    %290 = vector.load %arg10[%c0_164, %c0_165] : memref<100x40xbf16, #tpu.memory_space<vmem>>, vector<100x40xbf16>
    %cst_166 = arith.constant dense<0.000000e+00> : vector<1x40xf32>
    %291 = tpu.matmul %289, %290, %cst_166 {dimension_numbers = #tpu.dot_dimension_numbers<[1], [0], [0], [1], [0, 0, 1, 1], [], []>} : vector<1x100xbf16>, vector<100x40xbf16>, vector<1x40xf32> -> vector<1x40xf32>
    %c0_167 = arith.constant 0 : index
    %c0_168 = arith.constant 0 : index
    %292 = vector.load %arg11[%c0_167, %c0_168] : memref<1x40xf32, #tpu.memory_space<vmem>>, vector<1x40xf32>
    %293 = arith.addf %291, %292 : vector<1x40xf32>
    %cst_169 = arith.constant 0.000000e+00 : f32
    %294 = vector.broadcast %cst_169 : f32 to vector<1x40xf32>
    %295 = arith.maximumf %293, %294 : vector<1x40xf32>
    %296 = arith.truncf %295 : vector<1x40xf32> to vector<1x40xbf16>
    %c0_170 = arith.constant 0 : index
    %c0_171 = arith.constant 0 : index
    %297 = vector.load %arg12[%c0_170, %c0_171] : memref<40x3xbf16, #tpu.memory_space<vmem>>, vector<40x3xbf16>
    %cst_172 = arith.constant dense<0.000000e+00> : vector<1x3xf32>
    %298 = tpu.matmul %296, %297, %cst_172 {dimension_numbers = #tpu.dot_dimension_numbers<[1], [0], [0], [1], [0, 0, 1, 1], [], []>} : vector<1x40xbf16>, vector<40x3xbf16>, vector<1x3xf32> -> vector<1x3xf32>
    %c0_173 = arith.constant 0 : index
    %c0_174 = arith.constant 0 : index
    %299 = vector.load %arg13[%c0_173, %c0_174] : memref<1x3xf32, #tpu.memory_space<vmem>>, vector<1x3xf32>
    %300 = arith.addf %298, %299 : vector<1x3xf32>
    %c0_175 = arith.constant 0 : index
    %c0_176 = arith.constant 0 : index
    %c0_177 = arith.constant 0 : index
    %301 = vector.load %arg14[%c0_175, %c0_176, %c0_177] : memref<1x1x3xf32, #tpu.memory_space<vmem>>, vector<1x1x3xf32>
    %302 = vector.shape_cast %301 : vector<1x1x3xf32> to vector<1x3xf32>
    %303 = vector.shape_cast %300 : vector<1x3xf32> to vector<1x1x3xf32>
    tpu.vector_store %arg14[%c0_175, %c0_176, %c0_177], %303 {strides = array<i32>} : memref<1x1x3xf32, #tpu.memory_space<vmem>>, vector<1x1x3xf32>,
    return
  }
  func.func @transform_0(%arg0: i32) -> (i32, i32, i32) {
    %c0_i32 = arith.constant 0 : i32
    %c0_i32_0 = arith.constant 0 : i32
    %c0_i32_1 = arith.constant 0 : i32
    return %arg0, %c0_i32, %c0_i32_0 : i32, i32, i32
  }
  func.func @transform_1(%arg0: i32) -> (i32, i32, i32) {
    %c0_i32 = arith.constant 0 : i32
    %c0_i32_0 = arith.constant 0 : i32
    %c0_i32_1 = arith.constant 0 : i32
    %c0_i32_2 = arith.constant 0 : i32
    return %c0_i32, %c0_i32_0, %c0_i32_1 : i32, i32, i32
  }
  func.func @transform_2(%arg0: i32) -> (i32, i32) {
    %c0_i32 = arith.constant 0 : i32
    %c0_i32_0 = arith.constant 0 : i32
    %c0_i32_1 = arith.constant 0 : i32
    return %c0_i32, %c0_i32_0 : i32, i32
  }
  func.func @transform_3(%arg0: i32) -> (i32, i32) {
    %c0_i32 = arith.constant 0 : i32
    %c0_i32_0 = arith.constant 0 : i32
    %c0_i32_1 = arith.constant 0 : i32
    return %c0_i32, %c0_i32_0 : i32, i32
  }
  func.func @transform_4(%arg0: i32) -> (i32, i32, i32) {
    %c0_i32 = arith.constant 0 : i32
    %c0_i32_0 = arith.constant 0 : i32
    %c0_i32_1 = arith.constant 0 : i32
    %c0_i32_2 = arith.constant 0 : i32
    return %c0_i32, %c0_i32_0, %c0_i32_1 : i32, i32, i32
  }
  func.func @transform_5(%arg0: i32) -> (i32, i32) {
    %c0_i32 = arith.constant 0 : i32
    %c0_i32_0 = arith.constant 0 : i32
    %c0_i32_1 = arith.constant 0 : i32
    return %c0_i32, %c0_i32_0 : i32, i32
  }
  func.func @transform_6(%arg0: i32) -> (i32, i32) {
    %c0_i32 = arith.constant 0 : i32
    %c0_i32_0 = arith.constant 0 : i32
    %c0_i32_1 = arith.constant 0 : i32
    return %c0_i32, %c0_i32_0 : i32, i32
  }
  func.func @transform_7(%arg0: i32) -> (i32, i32, i32) {
    %c0_i32 = arith.constant 0 : i32
    %c0_i32_0 = arith.constant 0 : i32
    %c0_i32_1 = arith.constant 0 : i32
    %c0_i32_2 = arith.constant 0 : i32
    return %c0_i32, %c0_i32_0, %c0_i32_1 : i32, i32, i32
  }
  func.func @transform_8(%arg0: i32) -> (i32, i32) {
    %c0_i32 = arith.constant 0 : i32
    %c0_i32_0 = arith.constant 0 : i32
    %c0_i32_1 = arith.constant 0 : i32
    return %c0_i32, %c0_i32_0 : i32, i32
  }
  func.func @transform_9(%arg0: i32) -> (i32, i32) {
    %c0_i32 = arith.constant 0 : i32
    %c0_i32_0 = arith.constant 0 : i32
    %c0_i32_1 = arith.constant 0 : i32
    return %c0_i32, %c0_i32_0 : i32, i32
  }
  func.func @transform_10(%arg0: i32) -> (i32, i32) {
    %c0_i32 = arith.constant 0 : i32
    %c0_i32_0 = arith.constant 0 : i32
    %c0_i32_1 = arith.constant 0 : i32
    return %c0_i32, %c0_i32_0 : i32, i32
  }
  func.func @transform_11(%arg0: i32) -> (i32, i32) {
    %c0_i32 = arith.constant 0 : i32
    %c0_i32_0 = arith.constant 0 : i32
    %c0_i32_1 = arith.constant 0 : i32
    return %c0_i32, %c0_i32_0 : i32, i32
  }
  func.func @transform_12(%arg0: i32) -> (i32, i32) {
    %c0_i32 = arith.constant 0 : i32
    %c0_i32_0 = arith.constant 0 : i32
    %c0_i32_1 = arith.constant 0 : i32
    return %c0_i32, %c0_i32_0 : i32, i32
  }
  func.func @transform_13(%arg0: i32) -> (i32, i32, i32) {
    %c0_i32 = arith.constant 0 : i32
    %c0_i32_0 = arith.constant 0 : i32
    %c0_i32_1 = arith.constant 0 : i32
    return %arg0, %c0_i32, %c0_i32_0 : i32, i32, i32
  }
}

</mosaic_0001>

<llo_original>
// kernel: net_forward.1
$region0: #{net_forward.1}
  #allocation0 [shape = 'u32[]', space=smem, size = 0x4, offset = 0x4, fixed_abs, tag = 'smem constant byte address 0x4 - core index']
  #allocation1 [shape = 'u32[72,128]{1,0:T(1,128)}', space=vmem, size = 0x9000, scoped, tag = 'internal scratch']
  %s0 = inlined_call_operand.vmem [shape: f32[2,3,960], index: 0, kind: input, shape index: {}]
  %s1 = inlined_call_operand.vmem [shape: bf16[9,9,3], index: 1, kind: input, shape index: {}]
  %s2 = inlined_call_operand.vmem [shape: f32[9,1], index: 2, kind: input, shape index: {}]
  %s3 = inlined_call_operand.vmem [shape: f32[807,196], index: 3, kind: input, shape index: {}]
  %s4 = inlined_call_operand.vmem [shape: bf16[9,25,9], index: 4, kind: input, shape index: {}]
  %s5 = inlined_call_operand.vmem [shape: f32[25,1], index: 5, kind: input, shape index: {}]
  %s6 = inlined_call_operand.vmem [shape: f32[151,36], index: 6, kind: input, shape index: {}]
  %s7 = inlined_call_operand.vmem [shape: bf16[25,36,100], index: 7, kind: input, shape index: {}]
  %s8 = inlined_call_operand.vmem [shape: f32[1,100], index: 8, kind: input, shape index: {}]
  %s9 = inlined_call_operand.vmem [shape: bf16[100,40], index: 9, kind: input, shape index: {}]
  %s10 = inlined_call_operand.vmem [shape: f32[1,40], index: 10, kind: input, shape index: {}]
  %s11 = inlined_call_operand.vmem [shape: bf16[40,3], index: 11, kind: input, shape index: {}]
  %s12 = inlined_call_operand.vmem [shape: f32[1,3], index: 12, kind: input, shape index: {}]
  %s13 = inlined_call_operand.hbm [shape: f32[2,1,3], index: 13, kind: output, shape index: {}]
  %s14 = sld [smem:[#allocation0]]
  $region85: #{net_forward.1} parent=0
    _
  %s16 = ssub.s32 1, %s14
  %s17 = scalar_select 0, %s16, %s14
  $region1: #{net_forward.1} parent=0
    #allocation2 [shape = 'u8[1024]{0}', space=vmem, size = 0x400, scoped, tag = 'output window, operand 0']
    #allocation3 [shape = 's32[2]{0}', space=sflag, size = 0x8, scoped, tag = 'scoped memory for net_forward.1']
    %18 = vsyncpa [#allocation3], 0
    %s19 = scalar_lea.sflag [#allocation3], 1
    %20 = vsyncpa %s19, 0
    loop: start=0, step=1, limit=4
    $region2: #{net_forward.1} parent=1 // loop_pre_header
      _
    $region3: #{net_forward.1} parent=1 // loop_header
      %s22 = sphi 0, %s26
      %p23 = scmp.ge.s32.totalorder %s22, 4
      %s32 = sphi 0, %s34
      %s35 = sphi 0, %s32
      %s36 = sphi 0, %s35
      %s52 = sphi 0, %s36
      %s56 = sphi 0, %s56
      %s58 = sphi 0, %s56
      %s59 = sphi 0, %s58
      %s73 = sphi 0, %s59
      %s77 = sphi 0, %s77
      %s79 = sphi 0, %s77
      %s80 = sphi 0, %s79
      %s94 = sphi 0, %s80
      %s98 = sphi 0, %s98
      %s100 = sphi 0, %s98
      %s101 = sphi 0, %s100
      %s115 = sphi 0, %s101
      %s119 = sphi 0, %s119
      %s121 = sphi 0, %s119
      %s122 = sphi 0, %s121
      %s136 = sphi 0, %s122
      %s140 = sphi 0, %s140
      %s142 = sphi 0, %s140
      %s143 = sphi 0, %s142
      %s157 = sphi 0, %s143
      %s161 = sphi 0, %s161
      %s163 = sphi 0, %s161
      %s164 = sphi 0, %s163
      %s178 = sphi 0, %s164
      %s182 = sphi 0, %s182
      %s184 = sphi 0, %s182
      %s185 = sphi 0, %s184
      %s199 = sphi 0, %s185
      %s203 = sphi 0, %s203
      %s205 = sphi 0, %s203
      %s206 = sphi 0, %s205
      %s220 = sphi 0, %s206
      %s224 = sphi 0, %s224
      %s226 = sphi 0, %s224
      %s227 = sphi 0, %s226
      %s241 = sphi 0, %s227
      %s245 = sphi 0, %s245
      %s247 = sphi 0, %s245
      %s248 = sphi 0, %s247
      %s262 = sphi 0, %s248
      %s266 = sphi 0, %s266
      %s268 = sphi 0, %s266
      %s269 = sphi 0, %s268
      %s283 = sphi 0, %s269
      %s287 = sphi 0, %s287
      %s289 = sphi 0, %s287
      %s290 = sphi 0, %s289
      %s304 = sphi 0, %s290
      %s310 = sphi 0, %s312
      %s313 = sphi 0, %s310
      %s314 = sphi 0, %s313
      %s330 = sphi 0, %s314
    $region4: #{net_forward.1} parent=1 // loop_header_branch
      %25 = sbr.rel (%p23) target = $region8
    $region5: #{net_forward.1} parent=1 // loop_body
      %s27 = ssub.s32 %s22, 1
      %s28 = ssub.s32 %s22, 2
      %s29 = sadd.s32 %s22, 1
      %s30 = ssub.s32 %s22, %s29
      %p31 = scmp.eq.s32.totalorder %s30, 0
      %s33 = sadd.s32 %s32, 1
      %s34 = scalar_select %p31, %s32, %s33
      %p37 = pneg %p31
      %p38 = scmp.eq.s32.totalorder %s22, 1
      %p39 = por %p37, %p38
      %p40 = scmp.ne.s32.totalorder %s32, %s35
      %p41 = scmp.eq.s32.totalorder %s22, 0
      %p42 = por %p40, %p41
      %p43 = scmp.ne.s32.totalorder %s32, %s35
      %p44 = scmp.eq.s32.totalorder %s27, 1
      %p45 = por %p43, %p44
      %p46 = scmp.ne.s32.totalorder %s35, %s36
      %p47 = scmp.eq.s32.totalorder %s27, 0
      %p48 = por %p46, %p47
      %p49 = scmp.ne.s32.totalorder %s35, %s36
      %p50 = scmp.eq.s32.totalorder %s28, 1
      %p51 = por %p49, %p50
      %p53 = scmp.ne.s32.totalorder %s36, %s52
      %p54 = scmp.eq.s32.totalorder %s28, 0
      %p55 = por %p53, %p54
      %s57 = sadd.s32 %s56, 1
      %p60 = scmp.eq.s32.totalorder %s22, 1
      %p61 = scmp.ne.s32.totalorder %s56, %s58
      %p62 = scmp.eq.s32.totalorder %s22, 0
      %p63 = por %p61, %p62
      %p64 = scmp.ne.s32.totalorder %s56, %s58
      %p65 = scmp.eq.s32.totalorder %s27, 1
      %p66 = por %p64, %p65
      %p67 = scmp.ne.s32.totalorder %s58, %s59
      %p68 = scmp.eq.s32.totalorder %s27, 0
      %p69 = por %p67, %p68
      %p70 = scmp.ne.s32.totalorder %s58, %s59
      %p71 = scmp.eq.s32.totalorder %s28, 1
      %p72 = por %p70, %p71
      %p74 = scmp.ne.s32.totalorder %s59, %s73
      %p75 = scmp.eq.s32.totalorder %s28, 0
      %p76 = por %p74, %p75
      %s78 = sadd.s32 %s77, 1
      %p81 = scmp.eq.s32.totalorder %s22, 1
      %p82 = scmp.ne.s32.totalorder %s77, %s79
      %p83 = scmp.eq.s32.totalorder %s22, 0
      %p84 = por %p82, %p83
      %p85 = scmp.ne.s32.totalorder %s77, %s79
      %p86 = scmp.eq.s32.totalorder %s27, 1
      %p87 = por %p85, %p86
      %p88 = scmp.ne.s32.totalorder %s79, %s80
      %p89 = scmp.eq.s32.totalorder %s27, 0
      %p90 = por %p88, %p89
      %p91 = scmp.ne.s32.totalorder %s79, %s80
      %p92 = scmp.eq.s32.totalorder %s28, 1
      %p93 = por %p91, %p92
      %p95 = scmp.ne.s32.totalorder %s80, %s94
      %p96 = scmp.eq.s32.totalorder %s28, 0
      %p97 = por %p95, %p96
      %s99 = sadd.s32 %s98, 1
      %p102 = scmp.eq.s32.totalorder %s22, 1
      %p103 = scmp.ne.s32.totalorder %s98, %s100
      %p104 = scmp.eq.s32.totalorder %s22, 0
      %p105 = por %p103, %p104
      %p106 = scmp.ne.s32.totalorder %s98, %s100
      %p107 = scmp.eq.s32.totalorder %s27, 1
      %p108 = por %p106, %p107
      %p109 = scmp.ne.s32.totalorder %s100, %s101
      %p110 = scmp.eq.s32.totalorder %s27, 0
      %p111 = por %p109, %p110
      %p112 = scmp.ne.s32.totalorder %s100, %s101
      %p113 = scmp.eq.s32.totalorder %s28, 1
      %p114 = por %p112, %p113
      %p116 = scmp.ne.s32.totalorder %s101, %s115
      %p117 = scmp.eq.s32.totalorder %s28, 0
      %p118 = por %p116, %p117
      %s120 = sadd.s32 %s119, 1
      %p123 = scmp.eq.s32.totalorder %s22, 1
      %p124 = scmp.ne.s32.totalorder %s119, %s121
      %p125 = scmp.eq.s32.totalorder %s22, 0
      %p126 = por %p124, %p125
      %p127 = scmp.ne.s32.totalorder %s119, %s121
      %p128 = scmp.eq.s32.totalorder %s27, 1
      %p129 = por %p127, %p128
      %p130 = scmp.ne.s32.totalorder %s121, %s122
      %p131 = scmp.eq.s32.totalorder %s27, 0
      %p132 = por %p130, %p131
      %p133 = scmp.ne.s32.totalorder %s121, %s122
      %p134 = scmp.eq.s32.totalorder %s28, 1
      %p135 = por %p133, %p134
      %p137 = scmp.ne.s32.totalorder %s122, %s136
      %p138 = scmp.eq.s32.totalorder %s28, 0
      %p139 = por %p137, %p138
      %s141 = sadd.s32 %s140, 1
      %p144 = scmp.eq.s32.totalorder %s22, 1
      %p145 = scmp.ne.s32.totalorder %s140, %s142
      %p146 = scmp.eq.s32.totalorder %s22, 0
      %p147 = por %p145, %p146
      %p148 = scmp.ne.s32.totalorder %s140, %s142
      %p149 = scmp.eq.s32.totalorder %s27, 1
      %p150 = por %p148, %p149
      %p151 = scmp.ne.s32.totalorder %s142, %s143
      %p152 = scmp.eq.s32.totalorder %s27, 0
      %p153 = por %p151, %p152
      %p154 = scmp.ne.s32.totalorder %s142, %s143
      %p155 = scmp.eq.s32.totalorder %s28, 1
      %p156 = por %p154, %p155
      %p158 = scmp.ne.s32.totalorder %s143, %s157
      %p159 = scmp.eq.s32.totalorder %s28, 0
      %p160 = por %p158, %p159
      %s162 = sadd.s32 %s161, 1
      %p165 = scmp.eq.s32.totalorder %s22, 1
      %p166 = scmp.ne.s32.totalorder %s161, %s163
      %p167 = scmp.eq.s32.totalorder %s22, 0
      %p168 = por %p166, %p167
      %p169 = scmp.ne.s32.totalorder %s161, %s163
      %p170 = scmp.eq.s32.totalorder %s27, 1
      %p171 = por %p169, %p170
      %p172 = scmp.ne.s32.totalorder %s163, %s164
      %p173 = scmp.eq.s32.totalorder %s27, 0
      %p174 = por %p172, %p173
      %p175 = scmp.ne.s32.totalorder %s163, %s164
      %p176 = scmp.eq.s32.totalorder %s28, 1
      %p177 = por %p175, %p176
      %p179 = scmp.ne.s32.totalorder %s164, %s178
      %p180 = scmp.eq.s32.totalorder %s28, 0
      %p181 = por %p179, %p180
      %s183 = sadd.s32 %s182, 1
      %p186 = scmp.eq.s32.totalorder %s22, 1
      %p187 = scmp.ne.s32.totalorder %s182, %s184
      %p188 = scmp.eq.s32.totalorder %s22, 0
      %p189 = por %p187, %p188
      %p190 = scmp.ne.s32.totalorder %s182, %s184
      %p191 = scmp.eq.s32.totalorder %s27, 1
      %p192 = por %p190, %p191
      %p193 = scmp.ne.s32.totalorder %s184, %s185
      %p194 = scmp.eq.s32.totalorder %s27, 0
      %p195 = por %p193, %p194
      %p196 = scmp.ne.s32.totalorder %s184, %s185
      %p197 = scmp.eq.s32.totalorder %s28, 1
      %p198 = por %p196, %p197
      %p200 = scmp.ne.s32.totalorder %s185, %s199
      %p201 = scmp.eq.s32.totalorder %s28, 0
      %p202 = por %p200, %p201
      %s204 = sadd.s32 %s203, 1
      %p207 = scmp.eq.s32.totalorder %s22, 1
      %p208 = scmp.ne.s32.totalorder %s203, %s205
      %p209 = scmp.eq.s32.totalorder %s22, 0
      %p210 = por %p208, %p209
      %p211 = scmp.ne.s32.totalorder %s203, %s205
      %p212 = scmp.eq.s32.totalorder %s27, 1
      %p213 = por %p211, %p212
      %p214 = scmp.ne.s32.totalorder %s205, %s206
      %p215 = scmp.eq.s32.totalorder %s27, 0
      %p216 = por %p214, %p215
      %p217 = scmp.ne.s32.totalorder %s205, %s206
      %p218 = scmp.eq.s32.totalorder %s28, 1
      %p219 = por %p217, %p218
      %p221 = scmp.ne.s32.totalorder %s206, %s220
      %p222 = scmp.eq.s32.totalorder %s28, 0
      %p223 = por %p221, %p222
      %s225 = sadd.s32 %s224, 1
      %p228 = scmp.eq.s32.totalorder %s22, 1
      %p229 = scmp.ne.s32.totalorder %s224, %s226
      %p230 = scmp.eq.s32.totalorder %s22, 0
      %p231 = por %p229, %p230
      %p232 = scmp.ne.s32.totalorder %s224, %s226
      %p233 = scmp.eq.s32.totalorder %s27, 1
      %p234 = por %p232, %p233
      %p235 = scmp.ne.s32.totalorder %s226, %s227
      %p236 = scmp.eq.s32.totalorder %s27, 0
      %p237 = por %p235, %p236
      %p238 = scmp.ne.s32.totalorder %s226, %s227
      %p239 = scmp.eq.s32.totalorder %s28, 1
      %p240 = por %p238, %p239
      %p242 = scmp.ne.s32.totalorder %s227, %s241
      %p243 = scmp.eq.s32.totalorder %s28, 0
      %p244 = por %p242, %p243
      %s246 = sadd.s32 %s245, 1
      %p249 = scmp.eq.s32.totalorder %s22, 1
      %p250 = scmp.ne.s32.totalorder %s245, %s247
      %p251 = scmp.eq.s32.totalorder %s22, 0
      %p252 = por %p250, %p251
      %p253 = scmp.ne.s32.totalorder %s245, %s247
      %p254 = scmp.eq.s32.totalorder %s27, 1
      %p255 = por %p253, %p254
      %p256 = scmp.ne.s32.totalorder %s247, %s248
      %p257 = scmp.eq.s32.totalorder %s27, 0
      %p258 = por %p256, %p257
      %p259 = scmp.ne.s32.totalorder %s247, %s248
      %p260 = scmp.eq.s32.totalorder %s28, 1
      %p261 = por %p259, %p260
      %p263 = scmp.ne.s32.totalorder %s248, %s262
      %p264 = scmp.eq.s32.totalorder %s28, 0
      %p265 = por %p263, %p264
      %s267 = sadd.s32 %s266, 1
      %p270 = scmp.eq.s32.totalorder %s22, 1
      %p271 = scmp.ne.s32.totalorder %s266, %s268
      %p272 = scmp.eq.s32.totalorder %s22, 0
      %p273 = por %p271, %p272
      %p274 = scmp.ne.s32.totalorder %s266, %s268
      %p275 = scmp.eq.s32.totalorder %s27, 1
      %p276 = por %p274, %p275
      %p277 = scmp.ne.s32.totalorder %s268, %s269
      %p278 = scmp.eq.s32.totalorder %s27, 0
      %p279 = por %p277, %p278
      %p280 = scmp.ne.s32.totalorder %s268, %s269
      %p281 = scmp.eq.s32.totalorder %s28, 1
      %p282 = por %p280, %p281
      %p284 = scmp.ne.s32.totalorder %s269, %s283
      %p285 = scmp.eq.s32.totalorder %s28, 0
      %p286 = por %p284, %p285
      %s288 = sadd.s32 %s287, 1
      %p291 = scmp.eq.s32.totalorder %s22, 1
      %p292 = scmp.ne.s32.totalorder %s287, %s289
      %p293 = scmp.eq.s32.totalorder %s22, 0
      %p294 = por %p292, %p293
      %p295 = scmp.ne.s32.totalorder %s287, %s289
      %p296 = scmp.eq.s32.totalorder %s27, 1
      %p297 = por %p295, %p296
      %p298 = scmp.ne.s32.totalorder %s289, %s290
      %p299 = scmp.eq.s32.totalorder %s27, 0
      %p300 = por %p298, %p299
      %p301 = scmp.ne.s32.totalorder %s289, %s290
      %p302 = scmp.eq.s32.totalorder %s28, 1
      %p303 = por %p301, %p302
      %p305 = scmp.ne.s32.totalorder %s290, %s304
      %p306 = scmp.eq.s32.totalorder %s28, 0
      %p307 = por %p305, %p306
      %s308 = ssub.s32 %s22, %s29
      %p309 = scmp.eq.s32.totalorder %s308, 0
      %s311 = sadd.s32 %s310, 1
      %s312 = scalar_select %p309, %s310, %s311
      %p315 = pneg %p309
      %p316 = scmp.eq.s32.totalorder %s22, 1
      %p317 = por %p315, %p316
      %p318 = scmp.ne.s32.totalorder %s310, %s313
      %p319 = scmp.eq.s32.totalorder %s22, 0
      %p320 = por %p318, %p319
      %p321 = scmp.ne.s32.totalorder %s310, %s313
      %p322 = scmp.eq.s32.totalorder %s27, 1
      %p323 = por %p321, %p322
      %p324 = scmp.ne.s32.totalorder %s313, %s314
      %p325 = scmp.eq.s32.totalorder %s27, 0
      %p326 = por %p324, %p325
      %p327 = scmp.ne.s32.totalorder %s313, %s314
      %p328 = scmp.eq.s32.totalorder %s28, 1
      %p329 = por %p327, %p328
      %p331 = scmp.ne.s32.totalorder %s314, %s330
      %p332 = scmp.eq.s32.totalorder %s28, 0
      %p333 = por %p331, %p332
      %p334 = scmp.le.s32.totalorder 1, %s22
      %p335 = scmp.lt.s32.totalorder %s22, 3
      %p336 = pnand %p334, %p335
      %p337 = pneg %p336
      // Predicated region
      $region9: #{net_forward.1} parent=5 // pred_check
        _
      $region10: #{net_forward.1} parent=5 // pred_check_branch
        %339 = sbr.rel (%p336) target = $region12
      $region11: #{net_forward.1} parent=5 // pred_region
        %s340 = ssub.s32 %s22, 1
        // Predicated region
        $region13: #{net_forward.1} parent=11 // pred_check
          %p341 = pneg %p69
        $region14: #{net_forward.1} parent=11 // pred_check_branch
          %343 = sbr.rel (%p341) target = $region16
        $region15: #{net_forward.1} parent=11 // pred_region
          _
        $region16: #{net_forward.1} parent=11 // pred_fallthru
          _
        // Predicated region
        $region17: #{net_forward.1} parent=11 // pred_check
          %p344 = pneg %p90
        $region18: #{net_forward.1} parent=11 // pred_check_branch
          %346 = sbr.rel (%p344) target = $region20
        $region19: #{net_forward.1} parent=11 // pred_region
          _
        $region20: #{net_forward.1} parent=11 // pred_fallthru
          _
        // Predicated region
        $region21: #{net_forward.1} parent=11 // pred_check
          %p347 = pneg %p111
        $region22: #{net_forward.1} parent=11 // pred_check_branch
          %349 = sbr.rel (%p347) target = $region24
        $region23: #{net_forward.1} parent=11 // pred_region
          _
        $region24: #{net_forward.1} parent=11 // pred_fallthru
          _
        // Predicated region
        $region25: #{net_forward.1} parent=11 // pred_check
          %p350 = pneg %p132
        $region26: #{net_forward.1} parent=11 // pred_check_branch
          %352 = sbr.rel (%p350) target = $region28
        $region27: #{net_forward.1} parent=11 // pred_region
          _
        $region28: #{net_forward.1} parent=11 // pred_fallthru
          _
        // Predicated region
        $region29: #{net_forward.1} parent=11 // pred_check
          %p353 = pneg %p153
        $region30: #{net_forward.1} parent=11 // pred_check_branch
          %355 = sbr.rel (%p353) target = $region32
        $region31: #{net_forward.1} parent=11 // pred_region
          _
        $region32: #{net_forward.1} parent=11 // pred_fallthru
          _
        // Predicated region
        $region33: #{net_forward.1} parent=11 // pred_check
          %p356 = pneg %p174
        $region34: #{net_forward.1} parent=11 // pred_check_branch
          %358 = sbr.rel (%p356) target = $region36
        $region35: #{net_forward.1} parent=11 // pred_region
          _
        $region36: #{net_forward.1} parent=11 // pred_fallthru
          _
        // Predicated region
        $region37: #{net_forward.1} parent=11 // pred_check
          %p359 = pneg %p195
        $region38: #{net_forward.1} parent=11 // pred_check_branch
          %361 = sbr.rel (%p359) target = $region40
        $region39: #{net_forward.1} parent=11 // pred_region
          _
        $region40: #{net_forward.1} parent=11 // pred_fallthru
          _
        // Predicated region
        $region41: #{net_forward.1} parent=11 // pred_check
          %p362 = pneg %p216
        $region42: #{net_forward.1} parent=11 // pred_check_branch
          %364 = sbr.rel (%p362) target = $region44
        $region43: #{net_forward.1} parent=11 // pred_region
          _
        $region44: #{net_forward.1} parent=11 // pred_fallthru
          _
        // Predicated region
        $region45: #{net_forward.1} parent=11 // pred_check
          %p365 = pneg %p237
        $region46: #{net_forward.1} parent=11 // pred_check_branch
          %367 = sbr.rel (%p365) target = $region48
        $region47: #{net_forward.1} parent=11 // pred_region
          _
        $region48: #{net_forward.1} parent=11 // pred_fallthru
          _
        // Predicated region
        $region49: #{net_forward.1} parent=11 // pred_check
          %p368 = pneg %p258
        $region50: #{net_forward.1} parent=11 // pred_check_branch
          %370 = sbr.rel (%p368) target = $region52
        $region51: #{net_forward.1} parent=11 // pred_region
          _
        $region52: #{net_forward.1} parent=11 // pred_fallthru
          _
        // Predicated region
        $region53: #{net_forward.1} parent=11 // pred_check
          %p371 = pneg %p279
        $region54: #{net_forward.1} parent=11 // pred_check_branch
          %373 = sbr.rel (%p371) target = $region56
        $region55: #{net_forward.1} parent=11 // pred_region
          _
        $region56: #{net_forward.1} parent=11 // pred_fallthru
          _
        // Predicated region
        $region57: #{net_forward.1} parent=11 // pred_check
          %p374 = pneg %p300
        $region58: #{net_forward.1} parent=11 // pred_check_branch
          %376 = sbr.rel (%p374) target = $region60
        $region59: #{net_forward.1} parent=11 // pred_region
          _
        $region60: #{net_forward.1} parent=11 // pred_fallthru
          _
      $region12: #{net_forward.1} parent=5 // pred_fallthru
        _
      %p377 = scmp.lt.s32.totalorder %s22, 2
      // Predicated region
      $region61: #{net_forward.1} parent=5 // pred_check
        %p378 = pneg %p377
      $region62: #{net_forward.1} parent=5 // pred_check_branch
        %380 = sbr.rel (%p378) target = $region64
      $region63: #{net_forward.1} parent=5 // pred_region
        // Predicated region
        $region65: #{net_forward.1} parent=63 // pred_check
          %p381 = pneg %p42
        $region66: #{net_forward.1} parent=63 // pred_check_branch
          %383 = sbr.rel (%p381) target = $region68
        $region67: #{net_forward.1} parent=63 // pred_region
          %p384 = scmp.lt.s32.totalorder %s22, 1
          %s385 = scalar_select %p384, %s22, 1
          %s386 = smul.addr %s385, 8
          %s387 = smul.addr %s386, 4
          %s388 = scalar_lea.vmem %s0, %s387
        $region68: #{net_forward.1} parent=63 // pred_fallthru
          _
      $region64: #{net_forward.1} parent=5 // pred_fallthru
        _
      %p389 = scmp.le.s32.totalorder 1, %s22
      %p390 = scmp.lt.s32.totalorder %s22, 3
      %p391 = pnand %p389, %p390
      %p392 = pneg %p391
      // Predicated region
      $region69: #{net_forward.1} parent=5 // pred_check
        _
      $region70: #{net_forward.1} parent=5 // pred_check_branch
        %394 = sbr.rel (%p391) target = $region72
      $region71: #{net_forward.1} parent=5 // pred_region
        %s395 = ssub.s32 %s22, 1
        %p396 = scmp.lt.s32.totalorder %s27, 1
        %s397 = scalar_select %p396, %s27, 1
        %s398 = smul.addr %s397, 8
        %s399 = smul.addr %s398, 4
        %s400 = scalar_lea.vmem %s0, %s399
        %p401 = pneg %p48
        %p402 = pneg %p45
        %p403 = pneg %p69
        %p404 = pneg %p66
        %p405 = pneg %p90
        %p406 = pneg %p87
        %p407 = pneg %p111
        %p408 = pneg %p108
        %p409 = pneg %p132
        %p410 = pneg %p129
        %p411 = pneg %p153
        %p412 = pneg %p150
        %p413 = pneg %p174
        %p414 = pneg %p171
        %p415 = pneg %p195
        %p416 = pneg %p192
        %p417 = pneg %p216
        %p418 = pneg %p213
        %p419 = pneg %p237
        %p420 = pneg %p234
        %p421 = pneg %p258
        %p422 = pneg %p255
        %p423 = pneg %p279
        %p424 = pneg %p276
        %p425 = pneg %p300
        %p426 = pneg %p297
        %p427 = pneg %p326
        %p428 = pneg %p323
        %s429 = sand.u32 %s313, 1
        %s430 = scalar_lea.sflag [#allocation3], %s429
        %s431 = sand.u32 %s313, 1
        %s432 = scalar_lea.vmem [#allocation2], %s431
        %p433 = scmp.lt.s32.totalorder %s27, 1
        %s434 = scalar_select %p433, %s27, 1
        %s435 = smul.addr %s434, 8
        %s436 = smul.addr %s435, 4
        %s437 = scalar_lea.vmem %s0, %s436
        %v439 = vld [vmem:[%s437] sm:$0x77]
        %v440 = vld [vmem:[%s437 + $0x8] sm:$0x77]
        %v441 = vld [vmem:[%s437 + $0x10] sm:$0x77]
        %v442 = vld [vmem:[%s437 + $0x18] sm:$0x77]
        %447 = vst [vmem:[#allocation1] ss:$2 sm:$0xff] %v439
        %s448 = scalar_lea.vmem [#allocation1], 16
        %449 = vst [vmem:[%s448] ss:$2 sm:$0xff] %v440
        %s450 = scalar_lea.vmem [#allocation1], 32
        %451 = vst [vmem:[%s450] ss:$2 sm:$0xff] %v441
        %s452 = scalar_lea.vmem [#allocation1], 48
        %453 = vst [vmem:[%s452] ss:$2 sm:$0xff] %v442
        %v454 = vld.sshfl [vmem:[#allocation1] sm:$0xff pattern:$0x75316420]
        %v455 = vld.sshfl [vmem:[#allocation1 + $0x8] sm:$0xff pattern:$0x75316420]
        %v456 = vld.sshfl [vmem:[#allocation1 + $0x10] sm:$0xff pattern:$0x75316420]
        %v457 = vld.sshfl [vmem:[#allocation1 + $0x18] sm:$0xff pattern:$0x75316420]
        %v458 = vld.sshfl [vmem:[#allocation1 + $0x20] sm:$0xff pattern:$0x75316420]
        %v459 = vld.sshfl [vmem:[#allocation1 + $0x28] sm:$0xff pattern:$0x75316420]
        %v460 = vld.sshfl [vmem:[#allocation1 + $0x30] sm:$0xff pattern:$0x75316420]
        %v468 = vpack.c.bf16 %v454, %v454
        %v469 = vpack.c.bf16 %v455, %v455
        %v470 = vpack.c.bf16 %v456, %v456
        %v471 = vpack.c.bf16 %v457, %v457
        %v472 = vpack.c.bf16 %v458, %v458
        %v473 = vpack.c.bf16 %v459, %v459
        %v474 = vpack.c.bf16 %v460, %v460
        %v475 = vld [vmem:[%s1] sm:$0xf]
        %v476 = vld [vmem:[%s1 + $0x4] sm:$0x1]
        %477 = vst [vmem:[#allocation1] ss:$2 sm:$0xff] %v439
        %s478 = scalar_lea.vmem [#allocation1], 16
        %479 = vst [vmem:[%s478] ss:$2 sm:$0xff] %v440
        %s480 = scalar_lea.vmem [#allocation1], 32
        %481 = vst [vmem:[%s480] ss:$2 sm:$0xff] %v441
        %s482 = scalar_lea.vmem [#allocation1], 48
        %483 = vst [vmem:[%s482] ss:$2 sm:$0xff] %v442
        %v484 = vld.sshfl [vmem:[#allocation1] sm:$0xff pattern:$0x75316420]
        %v485 = vld.sshfl [vmem:[#allocation1 + $0x8] sm:$0xff pattern:$0x75316420]
        %v486 = vld.sshfl [vmem:[#allocation1 + $0x10] sm:$0xff pattern:$0x75316420]
        %v487 = vld.sshfl [vmem:[#allocation1 + $0x18] sm:$0xff pattern:$0x75316420]
        %v488 = vld.sshfl [vmem:[#allocation1 + $0x20] sm:$0xff pattern:$0x75316420]
        %v489 = vld.sshfl [vmem:[#allocation1 + $0x28] sm:$0xff pattern:$0x75316420]
        %v490 = vld.sshfl [vmem:[#allocation1 + $0x30] sm:$0xff pattern:$0x75316420]
        %v498 = vpack.c.bf16 %v484, %v484
        %v499 = vpack.c.bf16 %v485, %v485
        %v500 = vpack.c.bf16 %v486, %v486
        %v501 = vpack.c.bf16 %v487, %v487
        %v502 = vpack.c.bf16 %v488, %v488
        %v503 = vpack.c.bf16 %v489, %v489
        %v504 = vpack.c.bf16 %v490, %v490
        %s505 = scalar_lea.vmem %s1, 8
        %v506 = vld [vmem:[%s505] sm:$0xf]
        %v507 = vld [vmem:[%s505 + $0x4] sm:$0x1]
        %v510 = vunpack.c.l.b16 %v506
        %v511 = vunpack.c.l.b16 %v507
        %v512 = vpack.c.b16 %v511, %v510
        %520 = vrot.lane.b32.xlu0 %v498, 127
        %v521 = vpop.permute.xlu0 %520
        %522 = vrot.lane.b32.xlu0 %v499, 127
        %v523 = vpop.permute.xlu0 %522
        %524 = vrot.lane.b32.xlu0 %v500, 127
        %v525 = vpop.permute.xlu0 %524
        %526 = vrot.lane.b32.xlu0 %v501, 127
        %v527 = vpop.permute.xlu0 %526
        %528 = vrot.lane.b32.xlu0 %v502, 127
        %v529 = vpop.permute.xlu0 %528
        %530 = vrot.lane.b32.xlu0 %v503, 127
        %v531 = vpop.permute.xlu0 %530
        %532 = vrot.lane.b32.xlu0 %v504, 127
        %v533 = vpop.permute.xlu0 %532
        %vm534 = vcmask 1039360
        %v535 = vsel %vm534, %v521, %v523
        %v536 = vsel %vm534, %v523, %v525
        %v537 = vsel %vm534, %v525, %v527
        %v538 = vsel %vm534, %v527, %v529
        %v539 = vsel %vm534, %v529, %v531
        %v540 = vsel %vm534, %v531, %v533
        %vm541 = vcmask 23552
        %v543 = vsel %vm541, %v512, 0
        %vm545 = vcmask 1040384
        %vm546 = vcmask 1041408
        %v547 = vsel %vm545, 4294967295, 65535
        %v548 = vsel %vm546, %v547, 0
        %v550 = vand.u32 %v535, %v548
        %v553 = vand.u32 %v536, %v548
        %v556 = vand.u32 %v537, %v548
        %v559 = vand.u32 %v538, %v548
        %v562 = vand.u32 %v539, %v548
        %v565 = vand.u32 %v540, %v548
        %v568 = vand.u32 %v533, %v548
        %570 = vmatpush.bf16.msra.mxu0 0
        %571 = vmatpush.bf16.msra.mxu0 0
        %572 = vmatpush.bf16.msra.mxu0 0
        %573 = vmatpush.bf16.msra.mxu0 0
        %574 = vmatpush.bf16.msra.mxu0 0
        %575 = vmatpush.bf16.msra.mxu0 0
        %576 = vmatpush.bf16.msra.mxu0 0
        %577 = vmatpush.bf16.msra.mxu0 %v550
        %578 = vmatmul.bf16.gmra.mxu0 %v543
        %v579 = vpop.f32.mrf.mxu0
        %v580 = vadd.f32 0.0, %v579
        %v581 = vpop.f32.mrf.mxu0
        %v582 = vadd.f32 0.0, %v581
        %583 = vdwg.mxu0
        %584 = vmatpush.bf16.msra.mxu0 0
        %585 = vmatpush.bf16.msra.mxu0 0
        %586 = vmatpush.bf16.msra.mxu0 0
        %587 = vmatpush.bf16.msra.mxu0 0
        %588 = vmatpush.bf16.msra.mxu0 0
        %589 = vmatpush.bf16.msra.mxu0 0
        %590 = vmatpush.bf16.msra.mxu0 0
        %591 = vmatpush.bf16.msra.mxu0 %v553
        %592 = vmatmul.bf16.gmra.mxu0 %v543
        %v593 = vpop.f32.mrf.mxu0
        %v594 = vadd.f32 0.0, %v593
        %v595 = vpop.f32.mrf.mxu0
        %v596 = vadd.f32 0.0, %v595
        %597 = vdwg.mxu0
        %598 = vmatpush.bf16.msra.mxu0 0
        %599 = vmatpush.bf16.msra.mxu0 0
        %600 = vmatpush.bf16.msra.mxu0 0
        %601 = vmatpush.bf16.msra.mxu0 0
        %602 = vmatpush.bf16.msra.mxu0 0
        %603 = vmatpush.bf16.msra.mxu0 0
        %604 = vmatpush.bf16.msra.mxu0 0
        %605 = vmatpush.bf16.msra.mxu0 %v556
        %606 = vmatmul.bf16.gmra.mxu0 %v543
        %v607 = vpop.f32.mrf.mxu0
        %v608 = vadd.f32 0.0, %v607
        %v609 = vpop.f32.mrf.mxu0
        %v610 = vadd.f32 0.0, %v609
        %611 = vdwg.mxu0
        %612 = vmatpush.bf16.msra.mxu0 0
        %613 = vmatpush.bf16.msra.mxu0 0
        %614 = vmatpush.bf16.msra.mxu0 0
        %615 = vmatpush.bf16.msra.mxu0 0
        %616 = vmatpush.bf16.msra.mxu0 0
        %617 = vmatpush.bf16.msra.mxu0 0
        %618 = vmatpush.bf16.msra.mxu0 0
        %619 = vmatpush.bf16.msra.mxu0 %v559
        %620 = vmatmul.bf16.gmra.mxu0 %v543
        %v621 = vpop.f32.mrf.mxu0
        %v622 = vadd.f32 0.0, %v621
        %v623 = vpop.f32.mrf.mxu0
        %v624 = vadd.f32 0.0, %v623
        %625 = vdwg.mxu0
        %626 = vmatpush.bf16.msra.mxu0 0
        %627 = vmatpush.bf16.msra.mxu0 0
        %628 = vmatpush.bf16.msra.mxu0 0
        %629 = vmatpush.bf16.msra.mxu0 0
        %630 = vmatpush.bf16.msra.mxu0 0
        %631 = vmatpush.bf16.msra.mxu0 0
        %632 = vmatpush.bf16.msra.mxu0 0
        %633 = vmatpush.bf16.msra.mxu0 %v562
        %634 = vmatmul.bf16.gmra.mxu0 %v543
        %v635 = vpop.f32.mrf.mxu0
        %v636 = vadd.f32 0.0, %v635
        %v637 = vpop.f32.mrf.mxu0
        %v638 = vadd.f32 0.0, %v637
        %639 = vdwg.mxu0
        %640 = vmatpush.bf16.msra.mxu0 0
        %641 = vmatpush.bf16.msra.mxu0 0
        %642 = vmatpush.bf16.msra.mxu0 0
        %643 = vmatpush.bf16.msra.mxu0 0
        %644 = vmatpush.bf16.msra.mxu0 0
        %645 = vmatpush.bf16.msra.mxu0 0
        %646 = vmatpush.bf16.msra.mxu0 0
        %647 = vmatpush.bf16.msra.mxu0 %v565
        %648 = vmatmul.bf16.gmra.mxu0 %v543
        %v649 = vpop.f32.mrf.mxu0
        %v650 = vadd.f32 0.0, %v649
        %v651 = vpop.f32.mrf.mxu0
        %v652 = vadd.f32 0.0, %v651
        %653 = vdwg.mxu0
        %654 = vmatpush.bf16.msra.mxu0 0
        %655 = vmatpush.bf16.msra.mxu0 0
        %656 = vmatpush.bf16.msra.mxu0 0
        %657 = vmatpush.bf16.msra.mxu0 0
        %658 = vmatpush.bf16.msra.mxu0 0
        %659 = vmatpush.bf16.msra.mxu0 0
        %660 = vmatpush.bf16.msra.mxu0 0
        %661 = vmatpush.bf16.msra.mxu0 %v568
        %662 = vmatmul.bf16.gmra.mxu0 %v543
        %v663 = vpop.f32.mrf.mxu0
        %v664 = vadd.f32 0.0, %v663
        %v665 = vpop.f32.mrf.mxu0
        %v666 = vadd.f32 0.0, %v665
        %667 = vdwg.mxu0
        %v670 = vunpack.c.l.b16 %v475
        %v671 = vunpack.c.l.b16 %v476
        %v672 = vpack.c.b16 %v671, %v670
        %v674 = vsel %vm541, %v672, 0
        %v677 = vand.u32 %v468, %v548
        %v680 = vand.u32 %v469, %v548
        %v683 = vand.u32 %v470, %v548
        %v686 = vand.u32 %v471, %v548
        %v689 = vand.u32 %v472, %v548
        %v692 = vand.u32 %v473, %v548
        %v695 = vand.u32 %v474, %v548
        %697 = vmatpush.bf16.msra.mxu0 0
        %698 = vmatpush.bf16.msra.mxu0 0
        %699 = vmatpush.bf16.msra.mxu0 0
        %700 = vmatpush.bf16.msra.mxu0 0
        %701 = vmatpush.bf16.msra.mxu0 0
        %702 = vmatpush.bf16.msra.mxu0 0
        %703 = vmatpush.bf16.msra.mxu0 0
        %704 = vmatpush.bf16.msra.mxu0 %v677
        %705 = vmatmul.bf16.gmra.mxu0 %v674
        %v706 = vpop.f32.mrf.mxu0
        %v707 = vadd.f32 %v580, %v706
        %v708 = vpop.f32.mrf.mxu0
        %v709 = vadd.f32 %v582, %v708
        %710 = vdwg.mxu0
        %711 = vmatpush.bf16.msra.mxu0 0
        %712 = vmatpush.bf16.msra.mxu0 0
        %713 = vmatpush.bf16.msra.mxu0 0
        %714 = vmatpush.bf16.msra.mxu0 0
        %715 = vmatpush.bf16.msra.mxu0 0
        %716 = vmatpush.bf16.msra.mxu0 0
        %717 = vmatpush.bf16.msra.mxu0 0
        %718 = vmatpush.bf16.msra.mxu0 %v680
        %719 = vmatmul.bf16.gmra.mxu0 %v674
        %v720 = vpop.f32.mrf.mxu0
        %v721 = vadd.f32 %v594, %v720
        %v722 = vpop.f32.mrf.mxu0
        %v723 = vadd.f32 %v596, %v722
        %724 = vdwg.mxu0
        %725 = vmatpush.bf16.msra.mxu0 0
        %726 = vmatpush.bf16.msra.mxu0 0
        %727 = vmatpush.bf16.msra.mxu0 0
        %728 = vmatpush.bf16.msra.mxu0 0
        %729 = vmatpush.bf16.msra.mxu0 0
        %730 = vmatpush.bf16.msra.mxu0 0
        %731 = vmatpush.bf16.msra.mxu0 0
        %732 = vmatpush.bf16.msra.mxu0 %v683
        %733 = vmatmul.bf16.gmra.mxu0 %v674
        %v734 = vpop.f32.mrf.mxu0
        %v735 = vadd.f32 %v608, %v734
        %v736 = vpop.f32.mrf.mxu0
        %v737 = vadd.f32 %v610, %v736
        %738 = vdwg.mxu0
        %739 = vmatpush.bf16.msra.mxu0 0
        %740 = vmatpush.bf16.msra.mxu0 0
        %741 = vmatpush.bf16.msra.mxu0 0
        %742 = vmatpush.bf16.msra.mxu0 0
        %743 = vmatpush.bf16.msra.mxu0 0
        %744 = vmatpush.bf16.msra.mxu0 0
        %745 = vmatpush.bf16.msra.mxu0 0
        %746 = vmatpush.bf16.msra.mxu0 %v686
        %747 = vmatmul.bf16.gmra.mxu0 %v674
        %v748 = vpop.f32.mrf.mxu0
        %v749 = vadd.f32 %v622, %v748
        %v750 = vpop.f32.mrf.mxu0
        %v751 = vadd.f32 %v624, %v750
        %752 = vdwg.mxu0
        %753 = vmatpush.bf16.msra.mxu0 0
        %754 = vmatpush.bf16.msra.mxu0 0
        %755 = vmatpush.bf16.msra.mxu0 0
        %756 = vmatpush.bf16.msra.mxu0 0
        %757 = vmatpush.bf16.msra.mxu0 0
        %758 = vmatpush.bf16.msra.mxu0 0
        %759 = vmatpush.bf16.msra.mxu0 0
        %760 = vmatpush.bf16.msra.mxu0 %v689
        %761 = vmatmul.bf16.gmra.mxu0 %v674
        %v762 = vpop.f32.mrf.mxu0
        %v763 = vadd.f32 %v636, %v762
        %v764 = vpop.f32.mrf.mxu0
        %v765 = vadd.f32 %v638, %v764
        %766 = vdwg.mxu0
        %767 = vmatpush.bf16.msra.mxu0 0
        %768 = vmatpush.bf16.msra.mxu0 0
        %769 = vmatpush.bf16.msra.mxu0 0
        %770 = vmatpush.bf16.msra.mxu0 0
        %771 = vmatpush.bf16.msra.mxu0 0
        %772 = vmatpush.bf16.msra.mxu0 0
        %773 = vmatpush.bf16.msra.mxu0 0
        %774 = vmatpush.bf16.msra.mxu0 %v692
        %775 = vmatmul.bf16.gmra.mxu0 %v674
        %v776 = vpop.f32.mrf.mxu0
        %v777 = vadd.f32 %v650, %v776
        %v778 = vpop.f32.mrf.mxu0
        %v779 = vadd.f32 %v652, %v778
        %780 = vdwg.mxu0
        %781 = vmatpush.bf16.msra.mxu0 0
        %782 = vmatpush.bf16.msra.mxu0 0
        %783 = vmatpush.bf16.msra.mxu0 0
        %784 = vmatpush.bf16.msra.mxu0 0
        %785 = vmatpush.bf16.msra.mxu0 0
        %786 = vmatpush.bf16.msra.mxu0 0
        %787 = vmatpush.bf16.msra.mxu0 0
        %788 = vmatpush.bf16.msra.mxu0 %v695
        %789 = vmatmul.bf16.gmra.mxu0 %v674
        %v790 = vpop.f32.mrf.mxu0
        %v791 = vadd.f32 %v664, %v790
        %v792 = vpop.f32.mrf.mxu0
        %v793 = vadd.f32 %v666, %v792
        %794 = vdwg.mxu0
        %795 = vst [vmem:[#allocation1] ss:$2 sm:$0xff] %v439
        %s796 = scalar_lea.vmem [#allocation1], 16
        %797 = vst [vmem:[%s796] ss:$2 sm:$0xff] %v440
        %s798 = scalar_lea.vmem [#allocation1], 32
        %799 = vst [vmem:[%s798] ss:$2 sm:$0xff] %v441
        %s800 = scalar_lea.vmem [#allocation1], 48
        %801 = vst [vmem:[%s800] ss:$2 sm:$0xff] %v442
        %v802 = vld.sshfl [vmem:[#allocation1] sm:$0xff pattern:$0x75316420]
        %v803 = vld.sshfl [vmem:[#allocation1 + $0x8] sm:$0xff pattern:$0x75316420]
        %v804 = vld.sshfl [vmem:[#allocation1 + $0x10] sm:$0xff pattern:$0x75316420]
        %v805 = vld.sshfl [vmem:[#allocation1 + $0x18] sm:$0xff pattern:$0x75316420]
        %v806 = vld.sshfl [vmem:[#allocation1 + $0x20] sm:$0xff pattern:$0x75316420]
        %v807 = vld.sshfl [vmem:[#allocation1 + $0x28] sm:$0xff pattern:$0x75316420]
        %v808 = vld.sshfl [vmem:[#allocation1 + $0x30] sm:$0xff pattern:$0x75316420]
        %v816 = vpack.c.bf16 %v802, %v802
        %v817 = vpack.c.bf16 %v803, %v803
        %v818 = vpack.c.bf16 %v804, %v804
        %v819 = vpack.c.bf16 %v805, %v805
        %v820 = vpack.c.bf16 %v806, %v806
        %v821 = vpack.c.bf16 %v807, %v807
        %v822 = vpack.c.bf16 %v808, %v808
        %s823 = scalar_lea.vmem %s1, 16
        %v824 = vld [vmem:[%s823] sm:$0xf]
        %v825 = vld [vmem:[%s823 + $0x4] sm:$0x1]
        %v828 = vunpack.c.l.b16 %v824
        %v829 = vunpack.c.l.b16 %v825
        %v830 = vpack.c.b16 %v829, %v828
        %838 = vrot.lane.b32.xlu0 %v816, 126
        %v839 = vpop.permute.xlu0 %838
        %840 = vrot.lane.b32.xlu0 %v817, 126
        %v841 = vpop.permute.xlu0 %840
        %842 = vrot.lane.b32.xlu0 %v818, 126
        %v843 = vpop.permute.xlu0 %842
        %844 = vrot.lane.b32.xlu0 %v819, 126
        %v845 = vpop.permute.xlu0 %844
        %846 = vrot.lane.b32.xlu0 %v820, 126
        %v847 = vpop.permute.xlu0 %846
        %848 = vrot.lane.b32.xlu0 %v821, 126
        %v849 = vpop.permute.xlu0 %848
        %850 = vrot.lane.b32.xlu0 %v822, 126
        %v851 = vpop.permute.xlu0 %850
        %vm852 = vcmask 1031168
        %v853 = vsel %vm852, %v839, %v841
        %v854 = vsel %vm852, %v841, %v843
        %v855 = vsel %vm852, %v843, %v845
        %v856 = vsel %vm852, %v845, %v847
        %v857 = vsel %vm852, %v847, %v849
        %v858 = vsel %vm852, %v849, %v851
        %v860 = vsel %vm541, %v830, 0
        %v863 = vand.u32 %v853, %v548
        %v866 = vand.u32 %v854, %v548
        %v869 = vand.u32 %v855, %v548
        %v872 = vand.u32 %v856, %v548
        %v875 = vand.u32 %v857, %v548
        %v878 = vand.u32 %v858, %v548
        %v881 = vand.u32 %v851, %v548
        %883 = vmatpush.bf16.msra.mxu0 0
        %884 = vmatpush.bf16.msra.mxu0 0
        %885 = vmatpush.bf16.msra.mxu0 0
        %886 = vmatpush.bf16.msra.mxu0 0
        %887 = vmatpush.bf16.msra.mxu0 0
        %888 = vmatpush.bf16.msra.mxu0 0
        %889 = vmatpush.bf16.msra.mxu0 0
        %890 = vmatpush.bf16.msra.mxu0 %v863
        %891 = vmatmul.bf16.gmra.mxu0 %v860
        %v892 = vpop.f32.mrf.mxu0
        %v893 = vadd.f32 0.0, %v892
        %v894 = vpop.f32.mrf.mxu0
        %v895 = vadd.f32 0.0, %v894
        %896 = vdwg.mxu0
        %897 = vmatpush.bf16.msra.mxu0 0
        %898 = vmatpush.bf16.msra.mxu0 0
        %899 = vmatpush.bf16.msra.mxu0 0
        %900 = vmatpush.bf16.msra.mxu0 0
        %901 = vmatpush.bf16.msra.mxu0 0
        %902 = vmatpush.bf16.msra.mxu0 0
        %903 = vmatpush.bf16.msra.mxu0 0
        %904 = vmatpush.bf16.msra.mxu0 %v866
        %905 = vmatmul.bf16.gmra.mxu0 %v860
        %v906 = vpop.f32.mrf.mxu0
        %v907 = vadd.f32 0.0, %v906
        %v908 = vpop.f32.mrf.mxu0
        %v909 = vadd.f32 0.0, %v908
        %910 = vdwg.mxu0
        %911 = vmatpush.bf16.msra.mxu0 0
        %912 = vmatpush.bf16.msra.mxu0 0
        %913 = vmatpush.bf16.msra.mxu0 0
        %914 = vmatpush.bf16.msra.mxu0 0
        %915 = vmatpush.bf16.msra.mxu0 0
        %916 = vmatpush.bf16.msra.mxu0 0
        %917 = vmatpush.bf16.msra.mxu0 0
        %918 = vmatpush.bf16.msra.mxu0 %v869
        %919 = vmatmul.bf16.gmra.mxu0 %v860
        %v920 = vpop.f32.mrf.mxu0
        %v921 = vadd.f32 0.0, %v920
        %v922 = vpop.f32.mrf.mxu0
        %v923 = vadd.f32 0.0, %v922
        %924 = vdwg.mxu0
        %925 = vmatpush.bf16.msra.mxu0 0
        %926 = vmatpush.bf16.msra.mxu0 0
        %927 = vmatpush.bf16.msra.mxu0 0
        %928 = vmatpush.bf16.msra.mxu0 0
        %929 = vmatpush.bf16.msra.mxu0 0
        %930 = vmatpush.bf16.msra.mxu0 0
        %931 = vmatpush.bf16.msra.mxu0 0
        %932 = vmatpush.bf16.msra.mxu0 %v872
        %933 = vmatmul.bf16.gmra.mxu0 %v860
        %v934 = vpop.f32.mrf.mxu0
        %v935 = vadd.f32 0.0, %v934
        %v936 = vpop.f32.mrf.mxu0
        %v937 = vadd.f32 0.0, %v936
        %938 = vdwg.mxu0
        %939 = vmatpush.bf16.msra.mxu0 0
        %940 = vmatpush.bf16.msra.mxu0 0
        %941 = vmatpush.bf16.msra.mxu0 0
        %942 = vmatpush.bf16.msra.mxu0 0
        %943 = vmatpush.bf16.msra.mxu0 0
        %944 = vmatpush.bf16.msra.mxu0 0
        %945 = vmatpush.bf16.msra.mxu0 0
        %946 = vmatpush.bf16.msra.mxu0 %v875
        %947 = vmatmul.bf16.gmra.mxu0 %v860
        %v948 = vpop.f32.mrf.mxu0
        %v949 = vadd.f32 0.0, %v948
        %v950 = vpop.f32.mrf.mxu0
        %v951 = vadd.f32 0.0, %v950
        %952 = vdwg.mxu0
        %953 = vmatpush.bf16.msra.mxu0 0
        %954 = vmatpush.bf16.msra.mxu0 0
        %955 = vmatpush.bf16.msra.mxu0 0
        %956 = vmatpush.bf16.msra.mxu0 0
        %957 = vmatpush.bf16.msra.mxu0 0
        %958 = vmatpush.bf16.msra.mxu0 0
        %959 = vmatpush.bf16.msra.mxu0 0
        %960 = vmatpush.bf16.msra.mxu0 %v878
        %961 = vmatmul.bf16.gmra.mxu0 %v860
        %v962 = vpop.f32.mrf.mxu0
        %v963 = vadd.f32 0.0, %v962
        %v964 = vpop.f32.mrf.mxu0
        %v965 = vadd.f32 0.0, %v964
        %966 = vdwg.mxu0
        %967 = vmatpush.bf16.msra.mxu0 0
        %968 = vmatpush.bf16.msra.mxu0 0
        %969 = vmatpush.bf16.msra.mxu0 0
        %970 = vmatpush.bf16.msra.mxu0 0
        %971 = vmatpush.bf16.msra.mxu0 0
        %972 = vmatpush.bf16.msra.mxu0 0
        %973 = vmatpush.bf16.msra.mxu0 0
        %974 = vmatpush.bf16.msra.mxu0 %v881
        %975 = vmatmul.bf16.gmra.mxu0 %v860
        %v976 = vpop.f32.mrf.mxu0
        %v977 = vadd.f32 0.0, %v976
        %v978 = vpop.f32.mrf.mxu0
        %v979 = vadd.f32 0.0, %v978
        %980 = vdwg.mxu0
        %v981 = vadd.f32 %v707, %v893
        %v982 = vadd.f32 %v721, %v907
        %v983 = vadd.f32 %v735, %v921
        %v984 = vadd.f32 %v749, %v935
        %v985 = vadd.f32 %v763, %v949
        %v986 = vadd.f32 %v777, %v963
        %v987 = vadd.f32 %v791, %v977
        %v988 = vadd.f32 %v709, %v895
        %v989 = vadd.f32 %v723, %v909
        %v990 = vadd.f32 %v737, %v923
        %v991 = vadd.f32 %v751, %v937
        %v992 = vadd.f32 %v765, %v951
        %v993 = vadd.f32 %v779, %v965
        %v994 = vadd.f32 %v793, %v979
        %995 = vst [vmem:[#allocation1] ss:$2 sm:$0xff] %v439
        %s996 = scalar_lea.vmem [#allocation1], 16
        %997 = vst [vmem:[%s996] ss:$2 sm:$0xff] %v440
        %s998 = scalar_lea.vmem [#allocation1], 32
        %999 = vst [vmem:[%s998] ss:$2 sm:$0xff] %v441
        %s1000 = scalar_lea.vmem [#allocation1], 48
        %1001 = vst [vmem:[%s1000] ss:$2 sm:$0xff] %v442
        %v1002 = vld.sshfl [vmem:[#allocation1] sm:$0xff pattern:$0x75316420]
        %v1003 = vld.sshfl [vmem:[#allocation1 + $0x8] sm:$0xff pattern:$0x75316420]
        %v1004 = vld.sshfl [vmem:[#allocation1 + $0x10] sm:$0xff pattern:$0x75316420]
        %v1005 = vld.sshfl [vmem:[#allocation1 + $0x18] sm:$0xff pattern:$0x75316420]
        %v1006 = vld.sshfl [vmem:[#allocation1 + $0x20] sm:$0xff pattern:$0x75316420]
        %v1007 = vld.sshfl [vmem:[#allocation1 + $0x28] sm:$0xff pattern:$0x75316420]
        %v1008 = vld.sshfl [vmem:[#allocation1 + $0x30] sm:$0xff pattern:$0x75316420]
        %v1016 = vpack.c.bf16 %v1002, %v1002
        %v1017 = vpack.c.bf16 %v1003, %v1003
        %v1018 = vpack.c.bf16 %v1004, %v1004
        %v1019 = vpack.c.bf16 %v1005, %v1005
        %v1020 = vpack.c.bf16 %v1006, %v1006
        %v1021 = vpack.c.bf16 %v1007, %v1007
        %v1022 = vpack.c.bf16 %v1008, %v1008
        %s1023 = scalar_lea.vmem %s1, 24
        %v1024 = vld [vmem:[%s1023] sm:$0xf]
        %v1025 = vld [vmem:[%s1023 + $0x4] sm:$0x1]
        %v1028 = vunpack.c.l.b16 %v1024
        %v1029 = vunpack.c.l.b16 %v1025
        %v1030 = vpack.c.b16 %v1029, %v1028
        %1038 = vrot.lane.b32.xlu0 %v1016, 98
        %v1039 = vpop.permute.xlu0 %1038
        %1040 = vrot.lane.b32.xlu0 %v1017, 98
        %v1041 = vpop.permute.xlu0 %1040
        %1042 = vrot.lane.b32.xlu0 %v1018, 98
        %v1043 = vpop.permute.xlu0 %1042
        %1044 = vrot.lane.b32.xlu0 %v1019, 98
        %v1045 = vpop.permute.xlu0 %1044
        %1046 = vrot.lane.b32.xlu0 %v1020, 98
        %v1047 = vpop.permute.xlu0 %1046
        %1048 = vrot.lane.b32.xlu0 %v1021, 98
        %v1049 = vpop.permute.xlu0 %1048
        %1050 = vrot.lane.b32.xlu0 %v1022, 98
        %v1051 = vpop.permute.xlu0 %1050
        %vm1052 = vcmask 801792
        %v1053 = vsel %vm1052, %v1039, %v1041
        %v1054 = vsel %vm1052, %v1041, %v1043
        %v1055 = vsel %vm1052, %v1043, %v1045
        %v1056 = vsel %vm1052, %v1045, %v1047
        %v1057 = vsel %vm1052, %v1047, %v1049
        %v1058 = vsel %vm1052, %v1049, %v1051
        %v1060 = vsel %vm541, %v1030, 0
        %v1063 = vand.u32 %v1053, %v548
        %v1066 = vand.u32 %v1054, %v548
        %v1069 = vand.u32 %v1055, %v548
        %v1072 = vand.u32 %v1056, %v548
        %v1075 = vand.u32 %v1057, %v548
        %v1078 = vand.u32 %v1058, %v548
        %v1081 = vand.u32 %v1051, %v548
        %1083 = vmatpush.bf16.msra.mxu0 0
        %1084 = vmatpush.bf16.msra.mxu0 0
        %1085 = vmatpush.bf16.msra.mxu0 0
        %1086 = vmatpush.bf16.msra.mxu0 0
        %1087 = vmatpush.bf16.msra.mxu0 0
        %1088 = vmatpush.bf16.msra.mxu0 0
        %1089 = vmatpush.bf16.msra.mxu0 0
        %1090 = vmatpush.bf16.msra.mxu0 %v1063
        %1091 = vmatmul.bf16.gmra.mxu0 %v1060
        %v1092 = vpop.f32.mrf.mxu0
        %v1093 = vadd.f32 0.0, %v1092
        %v1094 = vpop.f32.mrf.mxu0
        %v1095 = vadd.f32 0.0, %v1094
        %1096 = vdwg.mxu0
        %1097 = vmatpush.bf16.msra.mxu0 0
        %1098 = vmatpush.bf16.msra.mxu0 0
        %1099 = vmatpush.bf16.msra.mxu0 0
        %1100 = vmatpush.bf16.msra.mxu0 0
        %1101 = vmatpush.bf16.msra.mxu0 0
        %1102 = vmatpush.bf16.msra.mxu0 0
        %1103 = vmatpush.bf16.msra.mxu0 0
        %1104 = vmatpush.bf16.msra.mxu0 %v1066
        %1105 = vmatmul.bf16.gmra.mxu0 %v1060
        %v1106 = vpop.f32.mrf.mxu0
        %v1107 = vadd.f32 0.0, %v1106
        %v1108 = vpop.f32.mrf.mxu0
        %v1109 = vadd.f32 0.0, %v1108
        %1110 = vdwg.mxu0
        %1111 = vmatpush.bf16.msra.mxu0 0
        %1112 = vmatpush.bf16.msra.mxu0 0
        %1113 = vmatpush.bf16.msra.mxu0 0
        %1114 = vmatpush.bf16.msra.mxu0 0
        %1115 = vmatpush.bf16.msra.mxu0 0
        %1116 = vmatpush.bf16.msra.mxu0 0
        %1117 = vmatpush.bf16.msra.mxu0 0
        %1118 = vmatpush.bf16.msra.mxu0 %v1069
        %1119 = vmatmul.bf16.gmra.mxu0 %v1060
        %v1120 = vpop.f32.mrf.mxu0
        %v1121 = vadd.f32 0.0, %v1120
        %v1122 = vpop.f32.mrf.mxu0
        %v1123 = vadd.f32 0.0, %v1122
        %1124 = vdwg.mxu0
        %1125 = vmatpush.bf16.msra.mxu0 0
        %1126 = vmatpush.bf16.msra.mxu0 0
        %1127 = vmatpush.bf16.msra.mxu0 0
        %1128 = vmatpush.bf16.msra.mxu0 0
        %1129 = vmatpush.bf16.msra.mxu0 0
        %1130 = vmatpush.bf16.msra.mxu0 0
        %1131 = vmatpush.bf16.msra.mxu0 0
        %1132 = vmatpush.bf16.msra.mxu0 %v1072
        %1133 = vmatmul.bf16.gmra.mxu0 %v1060
        %v1134 = vpop.f32.mrf.mxu0
        %v1135 = vadd.f32 0.0, %v1134
        %v1136 = vpop.f32.mrf.mxu0
        %v1137 = vadd.f32 0.0, %v1136
        %1138 = vdwg.mxu0
        %1139 = vmatpush.bf16.msra.mxu0 0
        %1140 = vmatpush.bf16.msra.mxu0 0
        %1141 = vmatpush.bf16.msra.mxu0 0
        %1142 = vmatpush.bf16.msra.mxu0 0
        %1143 = vmatpush.bf16.msra.mxu0 0
        %1144 = vmatpush.bf16.msra.mxu0 0
        %1145 = vmatpush.bf16.msra.mxu0 0
        %1146 = vmatpush.bf16.msra.mxu0 %v1075
        %1147 = vmatmul.bf16.gmra.mxu0 %v1060
        %v1148 = vpop.f32.mrf.mxu0
        %v1149 = vadd.f32 0.0, %v1148
        %v1150 = vpop.f32.mrf.mxu0
        %v1151 = vadd.f32 0.0, %v1150
        %1152 = vdwg.mxu0
        %1153 = vmatpush.bf16.msra.mxu0 0
        %1154 = vmatpush.bf16.msra.mxu0 0
        %1155 = vmatpush.bf16.msra.mxu0 0
        %1156 = vmatpush.bf16.msra.mxu0 0
        %1157 = vmatpush.bf16.msra.mxu0 0
        %1158 = vmatpush.bf16.msra.mxu0 0
        %1159 = vmatpush.bf16.msra.mxu0 0
        %1160 = vmatpush.bf16.msra.mxu0 %v1078
        %1161 = vmatmul.bf16.gmra.mxu0 %v1060
        %v1162 = vpop.f32.mrf.mxu0
        %v1163 = vadd.f32 0.0, %v1162
        %v1164 = vpop.f32.mrf.mxu0
        %v1165 = vadd.f32 0.0, %v1164
        %1166 = vdwg.mxu0
        %1167 = vmatpush.bf16.msra.mxu0 0
        %1168 = vmatpush.bf16.msra.mxu0 0
        %1169 = vmatpush.bf16.msra.mxu0 0
        %1170 = vmatpush.bf16.msra.mxu0 0
        %1171 = vmatpush.bf16.msra.mxu0 0
        %1172 = vmatpush.bf16.msra.mxu0 0
        %1173 = vmatpush.bf16.msra.mxu0 0
        %1174 = vmatpush.bf16.msra.mxu0 %v1081
        %1175 = vmatmul.bf16.gmra.mxu0 %v1060
        %v1176 = vpop.f32.mrf.mxu0
        %v1177 = vadd.f32 0.0, %v1176
        %v1178 = vpop.f32.mrf.mxu0
        %v1179 = vadd.f32 0.0, %v1178
        %1180 = vdwg.mxu0
        %v1181 = vadd.f32 %v981, %v1093
        %v1182 = vadd.f32 %v982, %v1107
        %v1183 = vadd.f32 %v983, %v1121
        %v1184 = vadd.f32 %v984, %v1135
        %v1185 = vadd.f32 %v985, %v1149
        %v1186 = vadd.f32 %v986, %v1163
        %v1187 = vadd.f32 %v987, %v1177
        %v1188 = vadd.f32 %v988, %v1095
        %v1189 = vadd.f32 %v989, %v1109
        %v1190 = vadd.f32 %v990, %v1123
        %v1191 = vadd.f32 %v991, %v1137
        %v1192 = vadd.f32 %v992, %v1151
        %v1193 = vadd.f32 %v993, %v1165
        %v1194 = vadd.f32 %v994, %v1179
        %1195 = vst [vmem:[#allocation1] ss:$2 sm:$0xff] %v439
        %s1196 = scalar_lea.vmem [#allocation1], 16
        %1197 = vst [vmem:[%s1196] ss:$2 sm:$0xff] %v440
        %s1198 = scalar_lea.vmem [#allocation1], 32
        %1199 = vst [vmem:[%s1198] ss:$2 sm:$0xff] %v441
        %s1200 = scalar_lea.vmem [#allocation1], 48
        %1201 = vst [vmem:[%s1200] ss:$2 sm:$0xff] %v442
        %v1202 = vld.sshfl [vmem:[#allocation1] sm:$0xff pattern:$0x75316420]
        %v1203 = vld.sshfl [vmem:[#allocation1 + $0x8] sm:$0xff pattern:$0x75316420]
        %v1204 = vld.sshfl [vmem:[#allocation1 + $0x10] sm:$0xff pattern:$0x75316420]
        %v1205 = vld.sshfl [vmem:[#allocation1 + $0x18] sm:$0xff pattern:$0x75316420]
        %v1206 = vld.sshfl [vmem:[#allocation1 + $0x20] sm:$0xff pattern:$0x75316420]
        %v1207 = vld.sshfl [vmem:[#allocation1 + $0x28] sm:$0xff pattern:$0x75316420]
        %v1208 = vld.sshfl [vmem:[#allocation1 + $0x30] sm:$0xff pattern:$0x75316420]
        %v1216 = vpack.c.bf16 %v1202, %v1202
        %v1217 = vpack.c.bf16 %v1203, %v1203
        %v1218 = vpack.c.bf16 %v1204, %v1204
        %v1219 = vpack.c.bf16 %v1205, %v1205
        %v1220 = vpack.c.bf16 %v1206, %v1206
        %v1221 = vpack.c.bf16 %v1207, %v1207
        %v1222 = vpack.c.bf16 %v1208, %v1208
        %s1223 = scalar_lea.vmem %s1, 32
        %v1224 = vld [vmem:[%s1223] sm:$0xf]
        %v1225 = vld [vmem:[%s1223 + $0x4] sm:$0x1]
        %v1228 = vunpack.c.l.b16 %v1224
        %v1229 = vunpack.c.l.b16 %v1225
        %v1230 = vpack.c.b16 %v1229, %v1228
        %1238 = vrot.lane.b32.xlu0 %v1216, 97
        %v1239 = vpop.permute.xlu0 %1238
        %1240 = vrot.lane.b32.xlu0 %v1217, 97
        %v1241 = vpop.permute.xlu0 %1240
        %1242 = vrot.lane.b32.xlu0 %v1218, 97
        %v1243 = vpop.permute.xlu0 %1242
        %1244 = vrot.lane.b32.xlu0 %v1219, 97
        %v1245 = vpop.permute.xlu0 %1244
        %1246 = vrot.lane.b32.xlu0 %v1220, 97
        %v1247 = vpop.permute.xlu0 %1246
        %1248 = vrot.lane.b32.xlu0 %v1221, 97
        %v1249 = vpop.permute.xlu0 %1248
        %1250 = vrot.lane.b32.xlu0 %v1222, 97
        %v1251 = vpop.permute.xlu0 %1250
        %vm1252 = vcmask 793600
        %v1253 = vsel %vm1252, %v1239, %v1241
        %v1254 = vsel %vm1252, %v1241, %v1243
        %v1255 = vsel %vm1252, %v1243, %v1245
        %v1256 = vsel %vm1252, %v1245, %v1247
        %v1257 = vsel %vm1252, %v1247, %v1249
        %v1258 = vsel %vm1252, %v1249, %v1251
        %v1260 = vsel %vm541, %v1230, 0
        %v1263 = vand.u32 %v1253, %v548
        %v1266 = vand.u32 %v1254, %v548
        %v1269 = vand.u32 %v1255, %v548
        %v1272 = vand.u32 %v1256, %v548
        %v1275 = vand.u32 %v1257, %v548
        %v1278 = vand.u32 %v1258, %v548
        %v1281 = vand.u32 %v1251, %v548
        %1283 = vmatpush.bf16.msra.mxu0 0
        %1284 = vmatpush.bf16.msra.mxu0 0
        %1285 = vmatpush.bf16.msra.mxu0 0
        %1286 = vmatpush.bf16.msra.mxu0 0
        %1287 = vmatpush.bf16.msra.mxu0 0
        %1288 = vmatpush.bf16.msra.mxu0 0
        %1289 = vmatpush.bf16.msra.mxu0 0
        %1290 = vmatpush.bf16.msra.mxu0 %v1263
        %1291 = vmatmul.bf16.gmra.mxu0 %v1260
        %v1292 = vpop.f32.mrf.mxu0
        %v1293 = vadd.f32 0.0, %v1292
        %v1294 = vpop.f32.mrf.mxu0
        %v1295 = vadd.f32 0.0, %v1294
        %1296 = vdwg.mxu0
        %1297 = vmatpush.bf16.msra.mxu0 0
        %1298 = vmatpush.bf16.msra.mxu0 0
        %1299 = vmatpush.bf16.msra.mxu0 0
        %1300 = vmatpush.bf16.msra.mxu0 0
        %1301 = vmatpush.bf16.msra.mxu0 0
        %1302 = vmatpush.bf16.msra.mxu0 0
        %1303 = vmatpush.bf16.msra.mxu0 0
        %1304 = vmatpush.bf16.msra.mxu0 %v1266
        %1305 = vmatmul.bf16.gmra.mxu0 %v1260
        %v1306 = vpop.f32.mrf.mxu0
        %v1307 = vadd.f32 0.0, %v1306
        %v1308 = vpop.f32.mrf.mxu0
        %v1309 = vadd.f32 0.0, %v1308
        %1310 = vdwg.mxu0
        %1311 = vmatpush.bf16.msra.mxu0 0
        %1312 = vmatpush.bf16.msra.mxu0 0
        %1313 = vmatpush.bf16.msra.mxu0 0
        %1314 = vmatpush.bf16.msra.mxu0 0
        %1315 = vmatpush.bf16.msra.mxu0 0
        %1316 = vmatpush.bf16.msra.mxu0 0
        %1317 = vmatpush.bf16.msra.mxu0 0
        %1318 = vmatpush.bf16.msra.mxu0 %v1269
        %1319 = vmatmul.bf16.gmra.mxu0 %v1260
        %v1320 = vpop.f32.mrf.mxu0
        %v1321 = vadd.f32 0.0, %v1320
        %v1322 = vpop.f32.mrf.mxu0
        %v1323 = vadd.f32 0.0, %v1322
        %1324 = vdwg.mxu0
        %1325 = vmatpush.bf16.msra.mxu0 0
        %1326 = vmatpush.bf16.msra.mxu0 0
        %1327 = vmatpush.bf16.msra.mxu0 0
        %1328 = vmatpush.bf16.msra.mxu0 0
        %1329 = vmatpush.bf16.msra.mxu0 0
        %1330 = vmatpush.bf16.msra.mxu0 0
        %1331 = vmatpush.bf16.msra.mxu0 0
        %1332 = vmatpush.bf16.msra.mxu0 %v1272
        %1333 = vmatmul.bf16.gmra.mxu0 %v1260
        %v1334 = vpop.f32.mrf.mxu0
        %v1335 = vadd.f32 0.0, %v1334
        %v1336 = vpop.f32.mrf.mxu0
        %v1337 = vadd.f32 0.0, %v1336
        %1338 = vdwg.mxu0
        %1339 = vmatpush.bf16.msra.mxu0 0
        %1340 = vmatpush.bf16.msra.mxu0 0
        %1341 = vmatpush.bf16.msra.mxu0 0
        %1342 = vmatpush.bf16.msra.mxu0 0
        %1343 = vmatpush.bf16.msra.mxu0 0
        %1344 = vmatpush.bf16.msra.mxu0 0
        %1345 = vmatpush.bf16.msra.mxu0 0
        %1346 = vmatpush.bf16.msra.mxu0 %v1275
        %1347 = vmatmul.bf16.gmra.mxu0 %v1260
        %v1348 = vpop.f32.mrf.mxu0
        %v1349 = vadd.f32 0.0, %v1348
        %v1350 = vpop.f32.mrf.mxu0
        %v1351 = vadd.f32 0.0, %v1350
        %1352 = vdwg.mxu0
        %1353 = vmatpush.bf16.msra.mxu0 0
        %1354 = vmatpush.bf16.msra.mxu0 0
        %1355 = vmatpush.bf16.msra.mxu0 0
        %1356 = vmatpush.bf16.msra.mxu0 0
        %1357 = vmatpush.bf16.msra.mxu0 0
        %1358 = vmatpush.bf16.msra.mxu0 0
        %1359 = vmatpush.bf16.msra.mxu0 0
        %1360 = vmatpush.bf16.msra.mxu0 %v1278
        %1361 = vmatmul.bf16.gmra.mxu0 %v1260
        %v1362 = vpop.f32.mrf.mxu0
        %v1363 = vadd.f32 0.0, %v1362
        %v1364 = vpop.f32.mrf.mxu0
        %v1365 = vadd.f32 0.0, %v1364
        %1366 = vdwg.mxu0
        %1367 = vmatpush.bf16.msra.mxu0 0
        %1368 = vmatpush.bf16.msra.mxu0 0
        %1369 = vmatpush.bf16.msra.mxu0 0
        %1370 = vmatpush.bf16.msra.mxu0 0
        %1371 = vmatpush.bf16.msra.mxu0 0
        %1372 = vmatpush.bf16.msra.mxu0 0
        %1373 = vmatpush.bf16.msra.mxu0 0
        %1374 = vmatpush.bf16.msra.mxu0 %v1281
        %1375 = vmatmul.bf16.gmra.mxu0 %v1260
        %v1376 = vpop.f32.mrf.mxu0
        %v1377 = vadd.f32 0.0, %v1376
        %v1378 = vpop.f32.mrf.mxu0
        %v1379 = vadd.f32 0.0, %v1378
        %1380 = vdwg.mxu0
        %v1381 = vadd.f32 %v1181, %v1293
        %v1382 = vadd.f32 %v1182, %v1307
        %v1383 = vadd.f32 %v1183, %v1321
        %v1384 = vadd.f32 %v1184, %v1335
        %v1385 = vadd.f32 %v1185, %v1349
        %v1386 = vadd.f32 %v1186, %v1363
        %v1387 = vadd.f32 %v1187, %v1377
        %v1388 = vadd.f32 %v1188, %v1295
        %v1389 = vadd.f32 %v1189, %v1309
        %v1390 = vadd.f32 %v1190, %v1323
        %v1391 = vadd.f32 %v1191, %v1337
        %v1392 = vadd.f32 %v1192, %v1351
        %v1393 = vadd.f32 %v1193, %v1365
        %v1394 = vadd.f32 %v1194, %v1379
        %1395 = vst [vmem:[#allocation1] ss:$2 sm:$0xff] %v439
        %s1396 = scalar_lea.vmem [#allocation1], 16
        %1397 = vst [vmem:[%s1396] ss:$2 sm:$0xff] %v440
        %s1398 = scalar_lea.vmem [#allocation1], 32
        %1399 = vst [vmem:[%s1398] ss:$2 sm:$0xff] %v441
        %s1400 = scalar_lea.vmem [#allocation1], 48
        %1401 = vst [vmem:[%s1400] ss:$2 sm:$0xff] %v442
        %v1402 = vld.sshfl [vmem:[#allocation1] sm:$0xff pattern:$0x75316420]
        %v1403 = vld.sshfl [vmem:[#allocation1 + $0x8] sm:$0xff pattern:$0x75316420]
        %v1404 = vld.sshfl [vmem:[#allocation1 + $0x10] sm:$0xff pattern:$0x75316420]
        %v1405 = vld.sshfl [vmem:[#allocation1 + $0x18] sm:$0xff pattern:$0x75316420]
        %v1406 = vld.sshfl [vmem:[#allocation1 + $0x20] sm:$0xff pattern:$0x75316420]
        %v1407 = vld.sshfl [vmem:[#allocation1 + $0x28] sm:$0xff pattern:$0x75316420]
        %v1408 = vld.sshfl [vmem:[#allocation1 + $0x30] sm:$0xff pattern:$0x75316420]
        %v1416 = vpack.c.bf16 %v1402, %v1402
        %v1417 = vpack.c.bf16 %v1403, %v1403
        %v1418 = vpack.c.bf16 %v1404, %v1404
        %v1419 = vpack.c.bf16 %v1405, %v1405
        %v1420 = vpack.c.bf16 %v1406, %v1406
        %v1421 = vpack.c.bf16 %v1407, %v1407
        %v1422 = vpack.c.bf16 %v1408, %v1408
        %s1423 = scalar_lea.vmem %s1, 40
        %v1424 = vld [vmem:[%s1423] sm:$0xf]
        %v1425 = vld [vmem:[%s1423 + $0x4] sm:$0x1]
        %v1428 = vunpack.c.l.b16 %v1424
        %v1429 = vunpack.c.l.b16 %v1425
        %v1430 = vpack.c.b16 %v1429, %v1428
        %1438 = vrot.lane.b32.xlu0 %v1416, 96
        %v1439 = vpop.permute.xlu0 %1438
        %1440 = vrot.lane.b32.xlu0 %v1417, 96
        %v1441 = vpop.permute.xlu0 %1440
        %1442 = vrot.lane.b32.xlu0 %v1418, 96
        %v1443 = vpop.permute.xlu0 %1442
        %1444 = vrot.lane.b32.xlu0 %v1419, 96
        %v1445 = vpop.permute.xlu0 %1444
        %1446 = vrot.lane.b32.xlu0 %v1420, 96
        %v1447 = vpop.permute.xlu0 %1446
        %1448 = vrot.lane.b32.xlu0 %v1421, 96
        %v1449 = vpop.permute.xlu0 %1448
        %1450 = vrot.lane.b32.xlu0 %v1422, 96
        %v1451 = vpop.permute.xlu0 %1450
        %vm1452 = vcmask 785408
        %v1453 = vsel %vm1452, %v1439, %v1441
        %v1454 = vsel %vm1452, %v1441, %v1443
        %v1455 = vsel %vm1452, %v1443, %v1445
        %v1456 = vsel %vm1452, %v1445, %v1447
        %v1457 = vsel %vm1452, %v1447, %v1449
        %v1458 = vsel %vm1452, %v1449, %v1451
        %v1460 = vsel %vm541, %v1430, 0
        %v1463 = vand.u32 %v1453, %v548
        %v1466 = vand.u32 %v1454, %v548
        %v1469 = vand.u32 %v1455, %v548
        %v1472 = vand.u32 %v1456, %v548
        %v1475 = vand.u32 %v1457, %v548
        %v1478 = vand.u32 %v1458, %v548
        %v1481 = vand.u32 %v1451, %v548
        %1483 = vmatpush.bf16.msra.mxu0 0
        %1484 = vmatpush.bf16.msra.mxu0 0
        %1485 = vmatpush.bf16.msra.mxu0 0
        %1486 = vmatpush.bf16.msra.mxu0 0
        %1487 = vmatpush.bf16.msra.mxu0 0
        %1488 = vmatpush.bf16.msra.mxu0 0
        %1489 = vmatpush.bf16.msra.mxu0 0
        %1490 = vmatpush.bf16.msra.mxu0 %v1463
        %1491 = vmatmul.bf16.gmra.mxu0 %v1460
        %v1492 = vpop.f32.mrf.mxu0
        %v1493 = vadd.f32 0.0, %v1492
        %v1494 = vpop.f32.mrf.mxu0
        %v1495 = vadd.f32 0.0, %v1494
        %1496 = vdwg.mxu0
        %1497 = vmatpush.bf16.msra.mxu0 0
        %1498 = vmatpush.bf16.msra.mxu0 0
        %1499 = vmatpush.bf16.msra.mxu0 0
        %1500 = vmatpush.bf16.msra.mxu0 0
        %1501 = vmatpush.bf16.msra.mxu0 0
        %1502 = vmatpush.bf16.msra.mxu0 0
        %1503 = vmatpush.bf16.msra.mxu0 0
        %1504 = vmatpush.bf16.msra.mxu0 %v1466
        %1505 = vmatmul.bf16.gmra.mxu0 %v1460
        %v1506 = vpop.f32.mrf.mxu0
        %v1507 = vadd.f32 0.0, %v1506
        %v1508 = vpop.f32.mrf.mxu0
        %v1509 = vadd.f32 0.0, %v1508
        %1510 = vdwg.mxu0
        %1511 = vmatpush.bf16.msra.mxu0 0
        %1512 = vmatpush.bf16.msra.mxu0 0
        %1513 = vmatpush.bf16.msra.mxu0 0
        %1514 = vmatpush.bf16.msra.mxu0 0
        %1515 = vmatpush.bf16.msra.mxu0 0
        %1516 = vmatpush.bf16.msra.mxu0 0
        %1517 = vmatpush.bf16.msra.mxu0 0
        %1518 = vmatpush.bf16.msra.mxu0 %v1469
        %1519 = vmatmul.bf16.gmra.mxu0 %v1460
        %v1520 = vpop.f32.mrf.mxu0
        %v1521 = vadd.f32 0.0, %v1520
        %v1522 = vpop.f32.mrf.mxu0
        %v1523 = vadd.f32 0.0, %v1522
        %1524 = vdwg.mxu0
        %1525 = vmatpush.bf16.msra.mxu0 0
        %1526 = vmatpush.bf16.msra.mxu0 0
        %1527 = vmatpush.bf16.msra.mxu0 0
        %1528 = vmatpush.bf16.msra.mxu0 0
        %1529 = vmatpush.bf16.msra.mxu0 0
        %1530 = vmatpush.bf16.msra.mxu0 0
        %1531 = vmatpush.bf16.msra.mxu0 0
        %1532 = vmatpush.bf16.msra.mxu0 %v1472
        %1533 = vmatmul.bf16.gmra.mxu0 %v1460
        %v1534 = vpop.f32.mrf.mxu0
        %v1535 = vadd.f32 0.0, %v1534
        %v1536 = vpop.f32.mrf.mxu0
        %v1537 = vadd.f32 0.0, %v1536
        %1538 = vdwg.mxu0
        %1539 = vmatpush.bf16.msra.mxu0 0
        %1540 = vmatpush.bf16.msra.mxu0 0
        %1541 = vmatpush.bf16.msra.mxu0 0
        %1542 = vmatpush.bf16.msra.mxu0 0
        %1543 = vmatpush.bf16.msra.mxu0 0
        %1544 = vmatpush.bf16.msra.mxu0 0
        %1545 = vmatpush.bf16.msra.mxu0 0
        %1546 = vmatpush.bf16.msra.mxu0 %v1475
        %1547 = vmatmul.bf16.gmra.mxu0 %v1460
        %v1548 = vpop.f32.mrf.mxu0
        %v1549 = vadd.f32 0.0, %v1548
        %v1550 = vpop.f32.mrf.mxu0
        %v1551 = vadd.f32 0.0, %v1550
        %1552 = vdwg.mxu0
        %1553 = vmatpush.bf16.msra.mxu0 0
        %1554 = vmatpush.bf16.msra.mxu0 0
        %1555 = vmatpush.bf16.msra.mxu0 0
        %1556 = vmatpush.bf16.msra.mxu0 0
        %1557 = vmatpush.bf16.msra.mxu0 0
        %1558 = vmatpush.bf16.msra.mxu0 0
        %1559 = vmatpush.bf16.msra.mxu0 0
        %1560 = vmatpush.bf16.msra.mxu0 %v1478
        %1561 = vmatmul.bf16.gmra.mxu0 %v1460
        %v1562 = vpop.f32.mrf.mxu0
        %v1563 = vadd.f32 0.0, %v1562
        %v1564 = vpop.f32.mrf.mxu0
        %v1565 = vadd.f32 0.0, %v1564
        %1566 = vdwg.mxu0
        %1567 = vmatpush.bf16.msra.mxu0 0
        %1568 = vmatpush.bf16.msra.mxu0 0
        %1569 = vmatpush.bf16.msra.mxu0 0
        %1570 = vmatpush.bf16.msra.mxu0 0
        %1571 = vmatpush.bf16.msra.mxu0 0
        %1572 = vmatpush.bf16.msra.mxu0 0
        %1573 = vmatpush.bf16.msra.mxu0 0
        %1574 = vmatpush.bf16.msra.mxu0 %v1481
        %1575 = vmatmul.bf16.gmra.mxu0 %v1460
        %v1576 = vpop.f32.mrf.mxu0
        %v1577 = vadd.f32 0.0, %v1576
        %v1578 = vpop.f32.mrf.mxu0
        %v1579 = vadd.f32 0.0, %v1578
        %1580 = vdwg.mxu0
        %v1581 = vadd.f32 %v1381, %v1493
        %v1582 = vadd.f32 %v1382, %v1507
        %v1583 = vadd.f32 %v1383, %v1521
        %v1584 = vadd.f32 %v1384, %v1535
        %v1585 = vadd.f32 %v1385, %v1549
        %v1586 = vadd.f32 %v1386, %v1563
        %v1587 = vadd.f32 %v1387, %v1577
        %v1588 = vadd.f32 %v1388, %v1495
        %v1589 = vadd.f32 %v1389, %v1509
        %v1590 = vadd.f32 %v1390, %v1523
        %v1591 = vadd.f32 %v1391, %v1537
        %v1592 = vadd.f32 %v1392, %v1551
        %v1593 = vadd.f32 %v1393, %v1565
        %v1594 = vadd.f32 %v1394, %v1579
        %1595 = vst [vmem:[#allocation1] ss:$2 sm:$0xff] %v439
        %s1596 = scalar_lea.vmem [#allocation1], 16
        %1597 = vst [vmem:[%s1596] ss:$2 sm:$0xff] %v440
        %s1598 = scalar_lea.vmem [#allocation1], 32
        %1599 = vst [vmem:[%s1598] ss:$2 sm:$0xff] %v441
        %s1600 = scalar_lea.vmem [#allocation1], 48
        %1601 = vst [vmem:[%s1600] ss:$2 sm:$0xff] %v442
        %v1602 = vld.sshfl [vmem:[#allocation1] sm:$0xff pattern:$0x75316420]
        %v1603 = vld.sshfl [vmem:[#allocation1 + $0x8] sm:$0xff pattern:$0x75316420]
        %v1604 = vld.sshfl [vmem:[#allocation1 + $0x10] sm:$0xff pattern:$0x75316420]
        %v1605 = vld.sshfl [vmem:[#allocation1 + $0x18] sm:$0xff pattern:$0x75316420]
        %v1606 = vld.sshfl [vmem:[#allocation1 + $0x20] sm:$0xff pattern:$0x75316420]
        %v1607 = vld.sshfl [vmem:[#allocation1 + $0x28] sm:$0xff pattern:$0x75316420]
        %v1608 = vld.sshfl [vmem:[#allocation1 + $0x30] sm:$0xff pattern:$0x75316420]
        %v1609 = vld.sshfl [vmem:[#allocation1 + $0x38] sm:$0xff pattern:$0x75316420]
        %v1618 = vpack.c.bf16 %v1602, %v1602
        %v1619 = vpack.c.bf16 %v1603, %v1603
        %v1620 = vpack.c.bf16 %v1604, %v1604
        %v1621 = vpack.c.bf16 %v1605, %v1605
        %v1622 = vpack.c.bf16 %v1606, %v1606
        %v1623 = vpack.c.bf16 %v1607, %v1607
        %v1624 = vpack.c.bf16 %v1608, %v1608
        %v1625 = vpack.c.bf16 %v1609, %v1609
        %s1626 = scalar_lea.vmem %s1, 48
        %v1627 = vld [vmem:[%s1626] sm:$0xf]
        %v1628 = vld [vmem:[%s1626 + $0x4] sm:$0x1]
        %v1631 = vunpack.c.l.b16 %v1627
        %v1632 = vunpack.c.l.b16 %v1628
        %v1633 = vpack.c.b16 %v1632, %v1631
        %1642 = vrot.lane.b32.xlu0 %v1618, 68
        %v1643 = vpop.permute.xlu0 %1642
        %1644 = vrot.lane.b32.xlu0 %v1619, 68
        %v1645 = vpop.permute.xlu0 %1644
        %1646 = vrot.lane.b32.xlu0 %v1620, 68
        %v1647 = vpop.permute.xlu0 %1646
        %1648 = vrot.lane.b32.xlu0 %v1621, 68
        %v1649 = vpop.permute.xlu0 %1648
        %1650 = vrot.lane.b32.xlu0 %v1622, 68
        %v1651 = vpop.permute.xlu0 %1650
        %1652 = vrot.lane.b32.xlu0 %v1623, 68
        %v1653 = vpop.permute.xlu0 %1652
        %1654 = vrot.lane.b32.xlu0 %v1624, 68
        %v1655 = vpop.permute.xlu0 %1654
        %1656 = vrot.lane.b32.xlu0 %v1625, 68
        %v1657 = vpop.permute.xlu0 %1656
        %vm1658 = vcmask 556032
        %v1659 = vsel %vm1658, %v1643, %v1645
        %v1660 = vsel %vm1658, %v1645, %v1647
        %v1661 = vsel %vm1658, %v1647, %v1649
        %v1662 = vsel %vm1658, %v1649, %v1651
        %v1663 = vsel %vm1658, %v1651, %v1653
        %v1664 = vsel %vm1658, %v1653, %v1655
        %v1665 = vsel %vm1658, %v1655, %v1657
        %v1667 = vsel %vm541, %v1633, 0
        %v1670 = vand.u32 %v1659, %v548
        %v1673 = vand.u32 %v1660, %v548
        %v1676 = vand.u32 %v1661, %v548
        %v1679 = vand.u32 %v1662, %v548
        %v1682 = vand.u32 %v1663, %v548
        %v1685 = vand.u32 %v1664, %v548
        %v1688 = vand.u32 %v1665, %v548
        %1690 = vmatpush.bf16.msra.mxu0 0
        %1691 = vmatpush.bf16.msra.mxu0 0
        %1692 = vmatpush.bf16.msra.mxu0 0
        %1693 = vmatpush.bf16.msra.mxu0 0
        %1694 = vmatpush.bf16.msra.mxu0 0
        %1695 = vmatpush.bf16.msra.mxu0 0
        %1696 = vmatpush.bf16.msra.mxu0 0
        %1697 = vmatpush.bf16.msra.mxu0 %v1670
        %1698 = vmatmul.bf16.gmra.mxu0 %v1667
        %v1699 = vpop.f32.mrf.mxu0
        %v1700 = vadd.f32 0.0, %v1699
        %v1701 = vpop.f32.mrf.mxu0
        %v1702 = vadd.f32 0.0, %v1701
        %1703 = vdwg.mxu0
        %1704 = vmatpush.bf16.msra.mxu0 0
        %1705 = vmatpush.bf16.msra.mxu0 0
        %1706 = vmatpush.bf16.msra.mxu0 0
        %1707 = vmatpush.bf16.msra.mxu0 0
        %1708 = vmatpush.bf16.msra.mxu0 0
        %1709 = vmatpush.bf16.msra.mxu0 0
        %1710 = vmatpush.bf16.msra.mxu0 0
        %1711 = vmatpush.bf16.msra.mxu0 %v1673
        %1712 = vmatmul.bf16.gmra.mxu0 %v1667
        %v1713 = vpop.f32.mrf.mxu0
        %v1714 = vadd.f32 0.0, %v1713
        %v1715 = vpop.f32.mrf.mxu0
        %v1716 = vadd.f32 0.0, %v1715
        %1717 = vdwg.mxu0
        %1718 = vmatpush.bf16.msra.mxu0 0
        %1719 = vmatpush.bf16.msra.mxu0 0
        %1720 = vmatpush.bf16.msra.mxu0 0
        %1721 = vmatpush.bf16.msra.mxu0 0
        %1722 = vmatpush.bf16.msra.mxu0 0
        %1723 = vmatpush.bf16.msra.mxu0 0
        %1724 = vmatpush.bf16.msra.mxu0 0
        %1725 = vmatpush.bf16.msra.mxu0 %v1676
        %1726 = vmatmul.bf16.gmra.mxu0 %v1667
        %v1727 = vpop.f32.mrf.mxu0
        %v1728 = vadd.f32 0.0, %v1727
        %v1729 = vpop.f32.mrf.mxu0
        %v1730 = vadd.f32 0.0, %v1729
        %1731 = vdwg.mxu0
        %1732 = vmatpush.bf16.msra.mxu0 0
        %1733 = vmatpush.bf16.msra.mxu0 0
        %1734 = vmatpush.bf16.msra.mxu0 0
        %1735 = vmatpush.bf16.msra.mxu0 0
        %1736 = vmatpush.bf16.msra.mxu0 0
        %1737 = vmatpush.bf16.msra.mxu0 0
        %1738 = vmatpush.bf16.msra.mxu0 0
        %1739 = vmatpush.bf16.msra.mxu0 %v1679
        %1740 = vmatmul.bf16.gmra.mxu0 %v1667
        %v1741 = vpop.f32.mrf.mxu0
        %v1742 = vadd.f32 0.0, %v1741
        %v1743 = vpop.f32.mrf.mxu0
        %v1744 = vadd.f32 0.0, %v1743
        %1745 = vdwg.mxu0
        %1746 = vmatpush.bf16.msra.mxu0 0
        %1747 = vmatpush.bf16.msra.mxu0 0
        %1748 = vmatpush.bf16.msra.mxu0 0
        %1749 = vmatpush.bf16.msra.mxu0 0
        %1750 = vmatpush.bf16.msra.mxu0 0
        %1751 = vmatpush.bf16.msra.mxu0 0
        %1752 = vmatpush.bf16.msra.mxu0 0
        %1753 = vmatpush.bf16.msra.mxu0 %v1682
        %1754 = vmatmul.bf16.gmra.mxu0 %v1667
        %v1755 = vpop.f32.mrf.mxu0
        %v1756 = vadd.f32 0.0, %v1755
        %v1757 = vpop.f32.mrf.mxu0
        %v1758 = vadd.f32 0.0, %v1757
        %1759 = vdwg.mxu0
        %1760 = vmatpush.bf16.msra.mxu0 0
        %1761 = vmatpush.bf16.msra.mxu0 0
        %1762 = vmatpush.bf16.msra.mxu0 0
        %1763 = vmatpush.bf16.msra.mxu0 0
        %1764 = vmatpush.bf16.msra.mxu0 0
        %1765 = vmatpush.bf16.msra.mxu0 0
        %1766 = vmatpush.bf16.msra.mxu0 0
        %1767 = vmatpush.bf16.msra.mxu0 %v1685
        %1768 = vmatmul.bf16.gmra.mxu0 %v1667
        %v1769 = vpop.f32.mrf.mxu0
        %v1770 = vadd.f32 0.0, %v1769
        %v1771 = vpop.f32.mrf.mxu0
        %v1772 = vadd.f32 0.0, %v1771
        %1773 = vdwg.mxu0
        %1774 = vmatpush.bf16.msra.mxu0 0
        %1775 = vmatpush.bf16.msra.mxu0 0
        %1776 = vmatpush.bf16.msra.mxu0 0
        %1777 = vmatpush.bf16.msra.mxu0 0
        %1778 = vmatpush.bf16.msra.mxu0 0
        %1779 = vmatpush.bf16.msra.mxu0 0
        %1780 = vmatpush.bf16.msra.mxu0 0
        %1781 = vmatpush.bf16.msra.mxu0 %v1688
        %1782 = vmatmul.bf16.gmra.mxu0 %v1667
        %v1783 = vpop.f32.mrf.mxu0
        %v1784 = vadd.f32 0.0, %v1783
        %v1785 = vpop.f32.mrf.mxu0
        %v1786 = vadd.f32 0.0, %v1785
        %1787 = vdwg.mxu0
        %v1788 = vadd.f32 %v1581, %v1700
        %v1789 = vadd.f32 %v1582, %v1714
        %v1790 = vadd.f32 %v1583, %v1728
        %v1791 = vadd.f32 %v1584, %v1742
        %v1792 = vadd.f32 %v1585, %v1756
        %v1793 = vadd.f32 %v1586, %v1770
        %v1794 = vadd.f32 %v1587, %v1784
        %v1795 = vadd.f32 %v1588, %v1702
        %v1796 = vadd.f32 %v1589, %v1716
        %v1797 = vadd.f32 %v1590, %v1730
        %v1798 = vadd.f32 %v1591, %v1744
        %v1799 = vadd.f32 %v1592, %v1758
        %v1800 = vadd.f32 %v1593, %v1772
        %v1801 = vadd.f32 %v1594, %v1786
        %1802 = vst [vmem:[#allocation1] ss:$2 sm:$0xff] %v439
        %s1803 = scalar_lea.vmem [#allocation1], 16
        %1804 = vst [vmem:[%s1803] ss:$2 sm:$0xff] %v440
        %s1805 = scalar_lea.vmem [#allocation1], 32
        %1806 = vst [vmem:[%s1805] ss:$2 sm:$0xff] %v441
        %s1807 = scalar_lea.vmem [#allocation1], 48
        %1808 = vst [vmem:[%s1807] ss:$2 sm:$0xff] %v442
        %v1809 = vld.sshfl [vmem:[#allocation1] sm:$0xff pattern:$0x75316420]
        %v1810 = vld.sshfl [vmem:[#allocation1 + $0x8] sm:$0xff pattern:$0x75316420]
        %v1811 = vld.sshfl [vmem:[#allocation1 + $0x10] sm:$0xff pattern:$0x75316420]
        %v1812 = vld.sshfl [vmem:[#allocation1 + $0x18] sm:$0xff pattern:$0x75316420]
        %v1813 = vld.sshfl [vmem:[#allocation1 + $0x20] sm:$0xff pattern:$0x75316420]
        %v1814 = vld.sshfl [vmem:[#allocation1 + $0x28] sm:$0xff pattern:$0x75316420]
        %v1815 = vld.sshfl [vmem:[#allocation1 + $0x30] sm:$0xff pattern:$0x75316420]
        %v1816 = vld.sshfl [vmem:[#allocation1 + $0x38] sm:$0xff pattern:$0x75316420]
        %v1825 = vpack.c.bf16 %v1809, %v1809
        %v1826 = vpack.c.bf16 %v1810, %v1810
        %v1827 = vpack.c.bf16 %v1811, %v1811
        %v1828 = vpack.c.bf16 %v1812, %v1812
        %v1829 = vpack.c.bf16 %v1813, %v1813
        %v1830 = vpack.c.bf16 %v1814, %v1814
        %v1831 = vpack.c.bf16 %v1815, %v1815
        %v1832 = vpack.c.bf16 %v1816, %v1816
        %s1833 = scalar_lea.vmem %s1, 56
        %v1834 = vld [vmem:[%s1833] sm:$0xf]
        %v1835 = vld [vmem:[%s1833 + $0x4] sm:$0x1]
        %v1838 = vunpack.c.l.b16 %v1834
        %v1839 = vunpack.c.l.b16 %v1835
        %v1840 = vpack.c.b16 %v1839, %v1838
        %1849 = vrot.lane.b32.xlu0 %v1825, 67
        %v1850 = vpop.permute.xlu0 %1849
        %1851 = vrot.lane.b32.xlu0 %v1826, 67
        %v1852 = vpop.permute.xlu0 %1851
        %1853 = vrot.lane.b32.xlu0 %v1827, 67
        %v1854 = vpop.permute.xlu0 %1853
        %1855 = vrot.lane.b32.xlu0 %v1828, 67
        %v1856 = vpop.permute.xlu0 %1855
        %1857 = vrot.lane.b32.xlu0 %v1829, 67
        %v1858 = vpop.permute.xlu0 %1857
        %1859 = vrot.lane.b32.xlu0 %v1830, 67
        %v1860 = vpop.permute.xlu0 %1859
        %1861 = vrot.lane.b32.xlu0 %v1831, 67
        %v1862 = vpop.permute.xlu0 %1861
        %1863 = vrot.lane.b32.xlu0 %v1832, 67
        %v1864 = vpop.permute.xlu0 %1863
        %vm1865 = vcmask 547840
        %v1866 = vsel %vm1865, %v1850, %v1852
        %v1867 = vsel %vm1865, %v1852, %v1854
        %v1868 = vsel %vm1865, %v1854, %v1856
        %v1869 = vsel %vm1865, %v1856, %v1858
        %v1870 = vsel %vm1865, %v1858, %v1860
        %v1871 = vsel %vm1865, %v1860, %v1862
        %v1872 = vsel %vm1865, %v1862, %v1864
        %v1874 = vsel %vm541, %v1840, 0
        %v1877 = vand.u32 %v1866, %v548
        %v1880 = vand.u32 %v1867, %v548
        %v1883 = vand.u32 %v1868, %v548
        %v1886 = vand.u32 %v1869, %v548
        %v1889 = vand.u32 %v1870, %v548
        %v1892 = vand.u32 %v1871, %v548
        %v1895 = vand.u32 %v1872, %v548
        %1897 = vmatpush.bf16.msra.mxu0 0
        %1898 = vmatpush.bf16.msra.mxu0 0
        %1899 = vmatpush.bf16.msra.mxu0 0
        %1900 = vmatpush.bf16.msra.mxu0 0
        %1901 = vmatpush.bf16.msra.mxu0 0
        %1902 = vmatpush.bf16.msra.mxu0 0
        %1903 = vmatpush.bf16.msra.mxu0 0
        %1904 = vmatpush.bf16.msra.mxu0 %v1877
        %1905 = vmatmul.bf16.gmra.mxu0 %v1874
        %v1906 = vpop.f32.mrf.mxu0
        %v1907 = vadd.f32 0.0, %v1906
        %v1908 = vpop.f32.mrf.mxu0
        %v1909 = vadd.f32 0.0, %v1908
        %1910 = vdwg.mxu0
        %1911 = vmatpush.bf16.msra.mxu0 0
        %1912 = vmatpush.bf16.msra.mxu0 0
        %1913 = vmatpush.bf16.msra.mxu0 0
        %1914 = vmatpush.bf16.msra.mxu0 0
        %1915 = vmatpush.bf16.msra.mxu0 0
        %1916 = vmatpush.bf16.msra.mxu0 0
        %1917 = vmatpush.bf16.msra.mxu0 0
        %1918 = vmatpush.bf16.msra.mxu0 %v1880
        %1919 = vmatmul.bf16.gmra.mxu0 %v1874
        %v1920 = vpop.f32.mrf.mxu0
        %v1921 = vadd.f32 0.0, %v1920
        %v1922 = vpop.f32.mrf.mxu0
        %v1923 = vadd.f32 0.0, %v1922
        %1924 = vdwg.mxu0
        %1925 = vmatpush.bf16.msra.mxu0 0
        %1926 = vmatpush.bf16.msra.mxu0 0
        %1927 = vmatpush.bf16.msra.mxu0 0
        %1928 = vmatpush.bf16.msra.mxu0 0
        %1929 = vmatpush.bf16.msra.mxu0 0
        %1930 = vmatpush.bf16.msra.mxu0 0
        %1931 = vmatpush.bf16.msra.mxu0 0
        %1932 = vmatpush.bf16.msra.mxu0 %v1883
        %1933 = vmatmul.bf16.gmra.mxu0 %v1874
        %v1934 = vpop.f32.mrf.mxu0
        %v1935 = vadd.f32 0.0, %v1934
        %v1936 = vpop.f32.mrf.mxu0
        %v1937 = vadd.f32 0.0, %v1936
        %1938 = vdwg.mxu0
        %1939 = vmatpush.bf16.msra.mxu0 0
        %1940 = vmatpush.bf16.msra.mxu0 0
        %1941 = vmatpush.bf16.msra.mxu0 0
        %1942 = vmatpush.bf16.msra.mxu0 0
        %1943 = vmatpush.bf16.msra.mxu0 0
        %1944 = vmatpush.bf16.msra.mxu0 0
        %1945 = vmatpush.bf16.msra.mxu0 0
        %1946 = vmatpush.bf16.msra.mxu0 %v1886
        %1947 = vmatmul.bf16.gmra.mxu0 %v1874
        %v1948 = vpop.f32.mrf.mxu0
        %v1949 = vadd.f32 0.0, %v1948
        %v1950 = vpop.f32.mrf.mxu0
        %v1951 = vadd.f32 0.0, %v1950
        %1952 = vdwg.mxu0
        %1953 = vmatpush.bf16.msra.mxu0 0
        %1954 = vmatpush.bf16.msra.mxu0 0
        %1955 = vmatpush.bf16.msra.mxu0 0
        %1956 = vmatpush.bf16.msra.mxu0 0
        %1957 = vmatpush.bf16.msra.mxu0 0
        %1958 = vmatpush.bf16.msra.mxu0 0
        %1959 = vmatpush.bf16.msra.mxu0 0
        %1960 = vmatpush.bf16.msra.mxu0 %v1889
        %1961 = vmatmul.bf16.gmra.mxu0 %v1874
        %v1962 = vpop.f32.mrf.mxu0
        %v1963 = vadd.f32 0.0, %v1962
        %v1964 = vpop.f32.mrf.mxu0
        %v1965 = vadd.f32 0.0, %v1964
        %1966 = vdwg.mxu0
        %1967 = vmatpush.bf16.msra.mxu0 0
        %1968 = vmatpush.bf16.msra.mxu0 0
        %1969 = vmatpush.bf16.msra.mxu0 0
        %1970 = vmatpush.bf16.msra.mxu0 0
        %1971 = vmatpush.bf16.msra.mxu0 0
        %1972 = vmatpush.bf16.msra.mxu0 0
        %1973 = vmatpush.bf16.msra.mxu0 0
        %1974 = vmatpush.bf16.msra.mxu0 %v1892
        %1975 = vmatmul.bf16.gmra.mxu0 %v1874
        %v1976 = vpop.f32.mrf.mxu0
        %v1977 = vadd.f32 0.0, %v1976
        %v1978 = vpop.f32.mrf.mxu0
        %v1979 = vadd.f32 0.0, %v1978
        %1980 = vdwg.mxu0
        %1981 = vmatpush.bf16.msra.mxu0 0
        %1982 = vmatpush.bf16.msra.mxu0 0
        %1983 = vmatpush.bf16.msra.mxu0 0
        %1984 = vmatpush.bf16.msra.mxu0 0
        %1985 = vmatpush.bf16.msra.mxu0 0
        %1986 = vmatpush.bf16.msra.mxu0 0
        %1987 = vmatpush.bf16.msra.mxu0 0
        %1988 = vmatpush.bf16.msra.mxu0 %v1895
        %1989 = vmatmul.bf16.gmra.mxu0 %v1874
        %v1990 = vpop.f32.mrf.mxu0
        %v1991 = vadd.f32 0.0, %v1990
        %v1992 = vpop.f32.mrf.mxu0
        %v1993 = vadd.f32 0.0, %v1992
        %1994 = vdwg.mxu0
        %v1995 = vadd.f32 %v1788, %v1907
        %v1996 = vadd.f32 %v1789, %v1921
        %v1997 = vadd.f32 %v1790, %v1935
        %v1998 = vadd.f32 %v1791, %v1949
        %v1999 = vadd.f32 %v1792, %v1963
        %v2000 = vadd.f32 %v1793, %v1977
        %v2001 = vadd.f32 %v1794, %v1991
        %v2002 = vadd.f32 %v1795, %v1909
        %v2003 = vadd.f32 %v1796, %v1923
        %v2004 = vadd.f32 %v1797, %v1937
        %v2005 = vadd.f32 %v1798, %v1951
        %v2006 = vadd.f32 %v1799, %v1965
        %v2007 = vadd.f32 %v1800, %v1979
        %v2008 = vadd.f32 %v1801, %v1993
        %2009 = vst [vmem:[#allocation1] ss:$2 sm:$0xff] %v439
        %s2010 = scalar_lea.vmem [#allocation1], 16
        %2011 = vst [vmem:[%s2010] ss:$2 sm:$0xff] %v440
        %s2012 = scalar_lea.vmem [#allocation1], 32
        %2013 = vst [vmem:[%s2012] ss:$2 sm:$0xff] %v441
        %s2014 = scalar_lea.vmem [#allocation1], 48
        %2015 = vst [vmem:[%s2014] ss:$2 sm:$0xff] %v442
        %v2016 = vld.sshfl [vmem:[#allocation1] sm:$0xff pattern:$0x75316420]
        %v2017 = vld.sshfl [vmem:[#allocation1 + $0x8] sm:$0xff pattern:$0x75316420]
        %v2018 = vld.sshfl [vmem:[#allocation1 + $0x10] sm:$0xff pattern:$0x75316420]
        %v2019 = vld.sshfl [vmem:[#allocation1 + $0x18] sm:$0xff pattern:$0x75316420]
        %v2020 = vld.sshfl [vmem:[#allocation1 + $0x20] sm:$0xff pattern:$0x75316420]
        %v2021 = vld.sshfl [vmem:[#allocation1 + $0x28] sm:$0xff pattern:$0x75316420]
        %v2022 = vld.sshfl [vmem:[#allocation1 + $0x30] sm:$0xff pattern:$0x75316420]
        %v2023 = vld.sshfl [vmem:[#allocation1 + $0x38] sm:$0xff pattern:$0x75316420]
        %v2032 = vpack.c.bf16 %v2016, %v2016
        %v2033 = vpack.c.bf16 %v2017, %v2017
        %v2034 = vpack.c.bf16 %v2018, %v2018
        %v2035 = vpack.c.bf16 %v2019, %v2019
        %v2036 = vpack.c.bf16 %v2020, %v2020
        %v2037 = vpack.c.bf16 %v2021, %v2021
        %v2038 = vpack.c.bf16 %v2022, %v2022
        %v2039 = vpack.c.bf16 %v2023, %v2023
        %s2040 = scalar_lea.vmem %s1, 64
        %v2041 = vld [vmem:[%s2040] sm:$0xf]
        %v2042 = vld [vmem:[%s2040 + $0x4] sm:$0x1]
        %v2045 = vunpack.c.l.b16 %v2041
        %v2046 = vunpack.c.l.b16 %v2042
        %v2047 = vpack.c.b16 %v2046, %v2045
        %2056 = vrot.lane.b32.xlu0 %v2032, 66
        %v2057 = vpop.permute.xlu0 %2056
        %2058 = vrot.lane.b32.xlu0 %v2033, 66
        %v2059 = vpop.permute.xlu0 %2058
        %2060 = vrot.lane.b32.xlu0 %v2034, 66
        %v2061 = vpop.permute.xlu0 %2060
        %2062 = vrot.lane.b32.xlu0 %v2035, 66
        %v2063 = vpop.permute.xlu0 %2062
        %2064 = vrot.lane.b32.xlu0 %v2036, 66
        %v2065 = vpop.permute.xlu0 %2064
        %2066 = vrot.lane.b32.xlu0 %v2037, 66
        %v2067 = vpop.permute.xlu0 %2066
        %2068 = vrot.lane.b32.xlu0 %v2038, 66
        %v2069 = vpop.permute.xlu0 %2068
        %2070 = vrot.lane.b32.xlu0 %v2039, 66
        %v2071 = vpop.permute.xlu0 %2070
        %vm2072 = vcmask 539648
        %v2073 = vsel %vm2072, %v2057, %v2059
        %v2074 = vsel %vm2072, %v2059, %v2061
        %v2075 = vsel %vm2072, %v2061, %v2063
        %v2076 = vsel %vm2072, %v2063, %v2065
        %v2077 = vsel %vm2072, %v2065, %v2067
        %v2078 = vsel %vm2072, %v2067, %v2069
        %v2079 = vsel %vm2072, %v2069, %v2071
        %v2081 = vsel %vm541, %v2047, 0
        %v2084 = vand.u32 %v2073, %v548
        %v2087 = vand.u32 %v2074, %v548
        %v2090 = vand.u32 %v2075, %v548
        %v2093 = vand.u32 %v2076, %v548
        %v2096 = vand.u32 %v2077, %v548
        %v2099 = vand.u32 %v2078, %v548
        %v2102 = vand.u32 %v2079, %v548
        %2104 = vmatpush.bf16.msra.mxu0 0
        %2105 = vmatpush.bf16.msra.mxu0 0
        %2106 = vmatpush.bf16.msra.mxu0 0
        %2107 = vmatpush.bf16.msra.mxu0 0
        %2108 = vmatpush.bf16.msra.mxu0 0
        %2109 = vmatpush.bf16.msra.mxu0 0
        %2110 = vmatpush.bf16.msra.mxu0 0
        %2111 = vmatpush.bf16.msra.mxu0 %v2084
        %2112 = vmatmul.bf16.gmra.mxu0 %v2081
        %v2113 = vpop.f32.mrf.mxu0
        %v2114 = vadd.f32 0.0, %v2113
        %v2115 = vpop.f32.mrf.mxu0
        %v2116 = vadd.f32 0.0, %v2115
        %2117 = vdwg.mxu0
        %2118 = vmatpush.bf16.msra.mxu0 0
        %2119 = vmatpush.bf16.msra.mxu0 0
        %2120 = vmatpush.bf16.msra.mxu0 0
        %2121 = vmatpush.bf16.msra.mxu0 0
        %2122 = vmatpush.bf16.msra.mxu0 0
        %2123 = vmatpush.bf16.msra.mxu0 0
        %2124 = vmatpush.bf16.msra.mxu0 0
        %2125 = vmatpush.bf16.msra.mxu0 %v2087
        %2126 = vmatmul.bf16.gmra.mxu0 %v2081
        %v2127 = vpop.f32.mrf.mxu0
        %v2128 = vadd.f32 0.0, %v2127
        %v2129 = vpop.f32.mrf.mxu0
        %v2130 = vadd.f32 0.0, %v2129
        %2131 = vdwg.mxu0
        %2132 = vmatpush.bf16.msra.mxu0 0
        %2133 = vmatpush.bf16.msra.mxu0 0
        %2134 = vmatpush.bf16.msra.mxu0 0
        %2135 = vmatpush.bf16.msra.mxu0 0
        %2136 = vmatpush.bf16.msra.mxu0 0
        %2137 = vmatpush.bf16.msra.mxu0 0
        %2138 = vmatpush.bf16.msra.mxu0 0
        %2139 = vmatpush.bf16.msra.mxu0 %v2090
        %2140 = vmatmul.bf16.gmra.mxu0 %v2081
        %v2141 = vpop.f32.mrf.mxu0
        %v2142 = vadd.f32 0.0, %v2141
        %v2143 = vpop.f32.mrf.mxu0
        %v2144 = vadd.f32 0.0, %v2143
        %2145 = vdwg.mxu0
        %2146 = vmatpush.bf16.msra.mxu0 0
        %2147 = vmatpush.bf16.msra.mxu0 0
        %2148 = vmatpush.bf16.msra.mxu0 0
        %2149 = vmatpush.bf16.msra.mxu0 0
        %2150 = vmatpush.bf16.msra.mxu0 0
        %2151 = vmatpush.bf16.msra.mxu0 0
        %2152 = vmatpush.bf16.msra.mxu0 0
        %2153 = vmatpush.bf16.msra.mxu0 %v2093
        %2154 = vmatmul.bf16.gmra.mxu0 %v2081
        %v2155 = vpop.f32.mrf.mxu0
        %v2156 = vadd.f32 0.0, %v2155
        %v2157 = vpop.f32.mrf.mxu0
        %v2158 = vadd.f32 0.0, %v2157
        %2159 = vdwg.mxu0
        %2160 = vmatpush.bf16.msra.mxu0 0
        %2161 = vmatpush.bf16.msra.mxu0 0
        %2162 = vmatpush.bf16.msra.mxu0 0
        %2163 = vmatpush.bf16.msra.mxu0 0
        %2164 = vmatpush.bf16.msra.mxu0 0
        %2165 = vmatpush.bf16.msra.mxu0 0
        %2166 = vmatpush.bf16.msra.mxu0 0
        %2167 = vmatpush.bf16.msra.mxu0 %v2096
        %2168 = vmatmul.bf16.gmra.mxu0 %v2081
        %v2169 = vpop.f32.mrf.mxu0
        %v2170 = vadd.f32 0.0, %v2169
        %v2171 = vpop.f32.mrf.mxu0
        %v2172 = vadd.f32 0.0, %v2171
        %2173 = vdwg.mxu0
        %2174 = vmatpush.bf16.msra.mxu0 0
        %2175 = vmatpush.bf16.msra.mxu0 0
        %2176 = vmatpush.bf16.msra.mxu0 0
        %2177 = vmatpush.bf16.msra.mxu0 0
        %2178 = vmatpush.bf16.msra.mxu0 0
        %2179 = vmatpush.bf16.msra.mxu0 0
        %2180 = vmatpush.bf16.msra.mxu0 0
        %2181 = vmatpush.bf16.msra.mxu0 %v2099
        %2182 = vmatmul.bf16.gmra.mxu0 %v2081
        %v2183 = vpop.f32.mrf.mxu0
        %v2184 = vadd.f32 0.0, %v2183
        %v2185 = vpop.f32.mrf.mxu0
        %v2186 = vadd.f32 0.0, %v2185
        %2187 = vdwg.mxu0
        %2188 = vmatpush.bf16.msra.mxu0 0
        %2189 = vmatpush.bf16.msra.mxu0 0
        %2190 = vmatpush.bf16.msra.mxu0 0
        %2191 = vmatpush.bf16.msra.mxu0 0
        %2192 = vmatpush.bf16.msra.mxu0 0
        %2193 = vmatpush.bf16.msra.mxu0 0
        %2194 = vmatpush.bf16.msra.mxu0 0
        %2195 = vmatpush.bf16.msra.mxu0 %v2102
        %2196 = vmatmul.bf16.gmra.mxu0 %v2081
        %v2197 = vpop.f32.mrf.mxu0
        %v2198 = vadd.f32 0.0, %v2197
        %v2199 = vpop.f32.mrf.mxu0
        %v2200 = vadd.f32 0.0, %v2199
        %2201 = vdwg.mxu0
        %v2202 = vadd.f32 %v1995, %v2114
        %v2203 = vadd.f32 %v1996, %v2128
        %v2204 = vadd.f32 %v1997, %v2142
        %v2205 = vadd.f32 %v1998, %v2156
        %v2206 = vadd.f32 %v1999, %v2170
        %v2207 = vadd.f32 %v2000, %v2184
        %v2208 = vadd.f32 %v2001, %v2198
        %v2209 = vadd.f32 %v2002, %v2116
        %v2210 = vadd.f32 %v2003, %v2130
        %v2211 = vadd.f32 %v2004, %v2144
        %v2212 = vadd.f32 %v2005, %v2158
        %v2213 = vadd.f32 %v2006, %v2172
        %v2214 = vadd.f32 %v2007, %v2186
        %v2215 = vadd.f32 %v2008, %v2200
        %2230 = vrot.lane.b32.xlu0 %v2202, 127
        %v2231 = vpop.permute.xlu0 %2230
        %2232 = vrot.lane.b32.xlu0 %v2203, 127
        %v2233 = vpop.permute.xlu0 %2232
        %2234 = vrot.lane.b32.xlu0 %v2204, 127
        %v2235 = vpop.permute.xlu0 %2234
        %2236 = vrot.lane.b32.xlu0 %v2205, 127
        %v2237 = vpop.permute.xlu0 %2236
        %2238 = vrot.lane.b32.xlu0 %v2206, 127
        %v2239 = vpop.permute.xlu0 %2238
        %2240 = vrot.lane.b32.xlu0 %v2207, 127
        %v2241 = vpop.permute.xlu0 %2240
        %2242 = vrot.lane.b32.xlu0 %v2208, 127
        %v2243 = vpop.permute.xlu0 %2242
        %2244 = vrot.lane.b32.xlu0 %v2209, 127
        %v2245 = vpop.permute.xlu0 %2244
        %2246 = vrot.lane.b32.xlu0 %v2210, 127
        %v2247 = vpop.permute.xlu0 %2246
        %2248 = vrot.lane.b32.xlu0 %v2211, 127
        %v2249 = vpop.permute.xlu0 %2248
        %2250 = vrot.lane.b32.xlu0 %v2212, 127
        %v2251 = vpop.permute.xlu0 %2250
        %2252 = vrot.lane.b32.xlu0 %v2213, 127
        %v2253 = vpop.permute.xlu0 %2252
        %2254 = vrot.lane.b32.xlu0 %v2214, 127
        %v2255 = vpop.permute.xlu0 %2254
        %2256 = vrot.lane.b32.xlu0 %v2215, 127
        %v2257 = vpop.permute.xlu0 %2256
        %vm2258 = vcmask 1039360
        %v2259 = vsel %vm2258, %v2231, %v2233
        %v2260 = vsel %vm2258, %v2233, %v2235
        %v2261 = vsel %vm2258, %v2235, %v2237
        %v2262 = vsel %vm2258, %v2237, %v2239
        %v2263 = vsel %vm2258, %v2239, %v2241
        %v2264 = vsel %vm2258, %v2241, %v2243
        %v2265 = vsel %vm2258, %v2245, %v2247
        %v2266 = vsel %vm2258, %v2247, %v2249
        %v2267 = vsel %vm2258, %v2249, %v2251
        %v2268 = vsel %vm2258, %v2251, %v2253
        %v2269 = vsel %vm2258, %v2253, %v2255
        %v2270 = vsel %vm2258, %v2255, %v2257
        %v2285 = vmax.f32 %v2202, %v2259
        %v2286 = vmax.f32 %v2203, %v2260
        %v2287 = vmax.f32 %v2204, %v2261
        %v2288 = vmax.f32 %v2205, %v2262
        %v2289 = vmax.f32 %v2206, %v2263
        %v2290 = vmax.f32 %v2207, %v2264
        %v2291 = vmax.f32 %v2208, %v2243
        %v2292 = vmax.f32 %v2209, %v2265
        %v2293 = vmax.f32 %v2210, %v2266
        %v2294 = vmax.f32 %v2211, %v2267
        %v2295 = vmax.f32 %v2212, %v2268
        %v2296 = vmax.f32 %v2213, %v2269
        %v2297 = vmax.f32 %v2214, %v2270
        %v2298 = vmax.f32 %v2215, %v2257
        %2313 = vrot.lane.b32.xlu0 %v2285, 98
        %v2314 = vpop.permute.xlu0 %2313
        %2315 = vrot.lane.b32.xlu0 %v2286, 98
        %v2316 = vpop.permute.xlu0 %2315
        %2317 = vrot.lane.b32.xlu0 %v2287, 98
        %v2318 = vpop.permute.xlu0 %2317
        %2319 = vrot.lane.b32.xlu0 %v2288, 98
        %v2320 = vpop.permute.xlu0 %2319
        %2321 = vrot.lane.b32.xlu0 %v2289, 98
        %v2322 = vpop.permute.xlu0 %2321
        %2323 = vrot.lane.b32.xlu0 %v2290, 98
        %v2324 = vpop.permute.xlu0 %2323
        %2325 = vrot.lane.b32.xlu0 %v2291, 98
        %v2326 = vpop.permute.xlu0 %2325
        %2327 = vrot.lane.b32.xlu0 %v2292, 98
        %v2328 = vpop.permute.xlu0 %2327
        %2329 = vrot.lane.b32.xlu0 %v2293, 98
        %v2330 = vpop.permute.xlu0 %2329
        %2331 = vrot.lane.b32.xlu0 %v2294, 98
        %v2332 = vpop.permute.xlu0 %2331
        %2333 = vrot.lane.b32.xlu0 %v2295, 98
        %v2334 = vpop.permute.xlu0 %2333
        %2335 = vrot.lane.b32.xlu0 %v2296, 98
        %v2336 = vpop.permute.xlu0 %2335
        %2337 = vrot.lane.b32.xlu0 %v2297, 98
        %v2338 = vpop.permute.xlu0 %2337
        %2339 = vrot.lane.b32.xlu0 %v2298, 98
        %v2340 = vpop.permute.xlu0 %2339
        %vm2341 = vcmask 801792
        %v2342 = vsel %vm2341, %v2314, %v2316
        %v2343 = vsel %vm2341, %v2316, %v2318
        %v2344 = vsel %vm2341, %v2318, %v2320
        %v2345 = vsel %vm2341, %v2320, %v2322
        %v2346 = vsel %vm2341, %v2322, %v2324
        %v2347 = vsel %vm2341, %v2324, %v2326
        %v2348 = vsel %vm2341, %v2328, %v2330
        %v2349 = vsel %vm2341, %v2330, %v2332
        %v2350 = vsel %vm2341, %v2332, %v2334
        %v2351 = vsel %vm2341, %v2334, %v2336
        %v2352 = vsel %vm2341, %v2336, %v2338
        %v2353 = vsel %vm2341, %v2338, %v2340
        %v2368 = vmax.f32 %v2285, %v2342
        %v2369 = vmax.f32 %v2286, %v2343
        %v2370 = vmax.f32 %v2287, %v2344
        %v2371 = vmax.f32 %v2288, %v2345
        %v2372 = vmax.f32 %v2289, %v2346
        %v2373 = vmax.f32 %v2290, %v2347
        %v2374 = vmax.f32 %v2291, %v2326
        %v2375 = vmax.f32 %v2292, %v2348
        %v2376 = vmax.f32 %v2293, %v2349
        %v2377 = vmax.f32 %v2294, %v2350
        %v2378 = vmax.f32 %v2295, %v2351
        %v2379 = vmax.f32 %v2296, %v2352
        %v2380 = vmax.f32 %v2297, %v2353
        %v2381 = vmax.f32 %v2298, %v2340
        %v2382 = vld [vmem:[%s3] sm:$0xff]
        %v2383 = vld [vmem:[%s3 + $0x8] sm:$0xff]
        %v2384 = vld [vmem:[%s3 + $0x10] sm:$0xff]
        %v2385 = vld [vmem:[%s3 + $0x18] sm:$0xff]
        %v2386 = vld [vmem:[%s3 + $0x20] sm:$0xff]
        %v2387 = vld [vmem:[%s3 + $0x28] sm:$0xff]
        %v2388 = vld [vmem:[%s3 + $0x30] sm:$0xff]
        %v2389 = vld [vmem:[%s3 + $0x38] sm:$0xff]
        %v2390 = vld [vmem:[%s3 + $0x40] sm:$0xff]
        %v2391 = vld [vmem:[%s3 + $0x48] sm:$0xff]
        %v2392 = vld [vmem:[%s3 + $0x50] sm:$0xff]
        %v2393 = vld [vmem:[%s3 + $0x58] sm:$0xff]
        %v2394 = vld [vmem:[%s3 + $0x60] sm:$0xff]
        %v2395 = vld [vmem:[%s3 + $0x68] sm:$0xff]
        %v2396 = vld [vmem:[%s3 + $0x70] sm:$0xff]
        %v2397 = vld [vmem:[%s3 + $0x78] sm:$0xff]
        %v2398 = vld [vmem:[%s3 + $0x80] sm:$0xff]
        %v2399 = vld [vmem:[%s3 + $0x88] sm:$0xff]
        %v2400 = vld [vmem:[%s3 + $0x90] sm:$0xff]
        %v2401 = vld [vmem:[%s3 + $0x98] sm:$0xff]
        %v2402 = vld [vmem:[%s3 + $0xa0] sm:$0xff]
        %v2403 = vld [vmem:[%s3 + $0xa8] sm:$0xff]
        %v2404 = vld [vmem:[%s3 + $0xb0] sm:$0xff]
        %v2405 = vld [vmem:[%s3 + $0xb8] sm:$0xff]
        %v2406 = vld [vmem:[%s3 + $0xc0] sm:$0xff]
        %v2407 = vld [vmem:[%s3 + $0xc8] sm:$0xff]
        %v2408 = vld [vmem:[%s3 + $0xd0] sm:$0xff]
        %v2409 = vld [vmem:[%s3 + $0xd8] sm:$0xff]
        %v2410 = vld [vmem:[%s3 + $0xe0] sm:$0xff]
        %v2411 = vld [vmem:[%s3 + $0xe8] sm:$0xff]
        %v2412 = vld [vmem:[%s3 + $0xf0] sm:$0xff]
        %v2413 = vld [vmem:[%s3 + $0xf8] sm:$0xff]
        %v2414 = vld [vmem:[%s3 + $0x100] sm:$0xff]
        %v2415 = vld [vmem:[%s3 + $0x108] sm:$0xff]
        %v2416 = vld [vmem:[%s3 + $0x110] sm:$0xff]
        %v2417 = vld [vmem:[%s3 + $0x118] sm:$0xff]
        %v2418 = vld [vmem:[%s3 + $0x120] sm:$0xff]
        %v2419 = vld [vmem:[%s3 + $0x128] sm:$0xff]
        %v2420 = vld [vmem:[%s3 + $0x130] sm:$0xff]
        %v2421 = vld [vmem:[%s3 + $0x138] sm:$0xff]
        %v2422 = vld [vmem:[%s3 + $0x140] sm:$0xff]
        %v2423 = vld [vmem:[%s3 + $0x148] sm:$0xff]
        %v2424 = vld [vmem:[%s3 + $0x150] sm:$0xff]
        %v2425 = vld [vmem:[%s3 + $0x158] sm:$0xff]
        %v2426 = vld [vmem:[%s3 + $0x160] sm:$0xff]
        %v2427 = vld [vmem:[%s3 + $0x168] sm:$0xff]
        %v2428 = vld [vmem:[%s3 + $0x170] sm:$0xff]
        %v2429 = vld [vmem:[%s3 + $0x178] sm:$0xff]
        %v2430 = vld [vmem:[%s3 + $0x180] sm:$0xff]
        %v2431 = vld [vmem:[%s3 + $0x188] sm:$0xff]
        %v2432 = vld [vmem:[%s3 + $0x190] sm:$0xff]
        %v2433 = vld [vmem:[%s3 + $0x198] sm:$0xff]
        %v2434 = vld [vmem:[%s3 + $0x1a0] sm:$0xff]
        %v2435 = vld [vmem:[%s3 + $0x1a8] sm:$0xff]
        %v2436 = vld [vmem:[%s3 + $0x1b0] sm:$0xff]
        %v2437 = vld [vmem:[%s3 + $0x1b8] sm:$0xff]
        %v2438 = vld [vmem:[%s3 + $0x1c0] sm:$0xff]
        %v2439 = vld [vmem:[%s3 + $0x1c8] sm:$0xff]
        %v2440 = vld [vmem:[%s3 + $0x1d0] sm:$0xff]
        %v2441 = vld [vmem:[%s3 + $0x1d8] sm:$0xff]
        %v2442 = vld [vmem:[%s3 + $0x1e0] sm:$0xff]
        %v2443 = vld [vmem:[%s3 + $0x1e8] sm:$0xff]
        %v2444 = vld [vmem:[%s3 + $0x1f0] sm:$0xff]
        %v2445 = vld [vmem:[%s3 + $0x1f8] sm:$0xff]
        %v2446 = vld [vmem:[%s3 + $0x200] sm:$0xff]
        %v2447 = vld [vmem:[%s3 + $0x208] sm:$0xff]
        %v2448 = vld [vmem:[%s3 + $0x210] sm:$0xff]
        %v2449 = vld [vmem:[%s3 + $0x218] sm:$0xff]
        %v2450 = vld [vmem:[%s3 + $0x220] sm:$0xff]
        %v2451 = vld [vmem:[%s3 + $0x228] sm:$0xff]
        %v2452 = vld [vmem:[%s3 + $0x230] sm:$0xff]
        %v2453 = vld [vmem:[%s3 + $0x238] sm:$0xff]
        %v2454 = vld [vmem:[%s3 + $0x240] sm:$0xff]
        %v2455 = vld [vmem:[%s3 + $0x248] sm:$0xff]
        %v2456 = vld [vmem:[%s3 + $0x250] sm:$0xff]
        %v2457 = vld [vmem:[%s3 + $0x258] sm:$0xff]
        %v2458 = vld [vmem:[%s3 + $0x260] sm:$0xff]
        %v2459 = vld [vmem:[%s3 + $0x268] sm:$0xff]
        %v2460 = vld [vmem:[%s3 + $0x270] sm:$0xff]
        %v2461 = vld [vmem:[%s3 + $0x278] sm:$0xff]
        %v2462 = vld [vmem:[%s3 + $0x280] sm:$0xff]
        %v2463 = vld [vmem:[%s3 + $0x288] sm:$0xff]
        %v2464 = vld [vmem:[%s3 + $0x290] sm:$0xff]
        %v2465 = vld [vmem:[%s3 + $0x298] sm:$0xff]
        %v2466 = vld [vmem:[%s3 + $0x2a0] sm:$0xff]
        %v2467 = vld [vmem:[%s3 + $0x2a8] sm:$0xff]
        %v2468 = vld [vmem:[%s3 + $0x2b0] sm:$0xff]
        %v2469 = vld [vmem:[%s3 + $0x2b8] sm:$0xff]
        %v2470 = vld [vmem:[%s3 + $0x2c0] sm:$0xff]
        %v2471 = vld [vmem:[%s3 + $0x2c8] sm:$0xff]
        %v2472 = vld [vmem:[%s3 + $0x2d0] sm:$0xff]
        %v2473 = vld [vmem:[%s3 + $0x2d8] sm:$0xff]
        %v2474 = vld [vmem:[%s3 + $0x2e0] sm:$0xff]
        %v2475 = vld [vmem:[%s3 + $0x2e8] sm:$0xff]
        %v2476 = vld [vmem:[%s3 + $0x2f0] sm:$0xff]
        %v2477 = vld [vmem:[%s3 + $0x2f8] sm:$0xff]
        %v2478 = vld [vmem:[%s3 + $0x300] sm:$0xff]
        %v2479 = vld [vmem:[%s3 + $0x308] sm:$0xff]
        %v2480 = vld [vmem:[%s3 + $0x310] sm:$0xff]
        %v2481 = vld [vmem:[%s3 + $0x318] sm:$0xff]
        %v2482 = vld [vmem:[%s3 + $0x320] sm:$0xff]
        %v2483 = vld [vmem:[%s3 + $0x328] sm:$0xff]
        %v2484 = vld [vmem:[%s3 + $0x330] sm:$0xff]
        %v2485 = vld [vmem:[%s3 + $0x338] sm:$0xff]
        %v2486 = vld [vmem:[%s3 + $0x340] sm:$0xff]
        %v2487 = vld [vmem:[%s3 + $0x348] sm:$0xff]
        %v2488 = vld [vmem:[%s3 + $0x350] sm:$0xff]
        %v2489 = vld [vmem:[%s3 + $0x358] sm:$0xff]
        %v2490 = vld [vmem:[%s3 + $0x360] sm:$0xff]
        %v2491 = vld [vmem:[%s3 + $0x368] sm:$0xff]
        %v2492 = vld [vmem:[%s3 + $0x370] sm:$0xff]
        %v2493 = vld [vmem:[%s3 + $0x378] sm:$0xff]
        %v2494 = vld [vmem:[%s3 + $0x380] sm:$0xff]
        %v2495 = vld [vmem:[%s3 + $0x388] sm:$0xff]
        %v2496 = vld [vmem:[%s3 + $0x390] sm:$0xff]
        %v2497 = vld [vmem:[%s3 + $0x398] sm:$0xff]
        %v2498 = vld [vmem:[%s3 + $0x3a0] sm:$0xff]
        %v2499 = vld [vmem:[%s3 + $0x3a8] sm:$0xff]
        %v2500 = vld [vmem:[%s3 + $0x3b0] sm:$0xff]
        %v2501 = vld [vmem:[%s3 + $0x3b8] sm:$0xff]
        %v2502 = vld [vmem:[%s3 + $0x3c0] sm:$0xff]
        %v2503 = vld [vmem:[%s3 + $0x3c8] sm:$0xff]
        %v2504 = vld [vmem:[%s3 + $0x3d0] sm:$0xff]
        %v2505 = vld [vmem:[%s3 + $0x3d8] sm:$0xff]
        %v2506 = vld [vmem:[%s3 + $0x3e0] sm:$0xff]
        %v2507 = vld [vmem:[%s3 + $0x3e8] sm:$0xff]
        %v2508 = vld [vmem:[%s3 + $0x3f0] sm:$0xff]
        %v2509 = vld [vmem:[%s3 + $0x3f8] sm:$0xff]
        %v2510 = vld [vmem:[%s3 + $0x400] sm:$0xff]
        %v2511 = vld [vmem:[%s3 + $0x408] sm:$0xff]
        %v2512 = vld [vmem:[%s3 + $0x410] sm:$0xff]
        %v2513 = vld [vmem:[%s3 + $0x418] sm:$0xff]
        %v2514 = vld [vmem:[%s3 + $0x420] sm:$0xff]
        %v2515 = vld [vmem:[%s3 + $0x428] sm:$0xff]
        %v2516 = vld [vmem:[%s3 + $0x430] sm:$0xff]
        %v2517 = vld [vmem:[%s3 + $0x438] sm:$0xff]
        %v2518 = vld [vmem:[%s3 + $0x440] sm:$0xff]
        %v2519 = vld [vmem:[%s3 + $0x448] sm:$0xff]
        %v2520 = vld [vmem:[%s3 + $0x450] sm:$0xff]
        %v2521 = vld [vmem:[%s3 + $0x458] sm:$0xff]
        %v2522 = vld [vmem:[%s3 + $0x460] sm:$0xff]
        %v2523 = vld [vmem:[%s3 + $0x468] sm:$0xff]
        %v2524 = vld [vmem:[%s3 + $0x470] sm:$0xff]
        %v2525 = vld [vmem:[%s3 + $0x478] sm:$0xff]
        %v2526 = vld [vmem:[%s3 + $0x480] sm:$0xff]
        %v2527 = vld [vmem:[%s3 + $0x488] sm:$0xff]
        %v2528 = vld [vmem:[%s3 + $0x490] sm:$0xff]
        %v2529 = vld [vmem:[%s3 + $0x498] sm:$0xff]
        %v2530 = vld [vmem:[%s3 + $0x4a0] sm:$0xff]
        %v2531 = vld [vmem:[%s3 + $0x4a8] sm:$0xff]
        %v2532 = vld [vmem:[%s3 + $0x4b0] sm:$0xff]
        %v2533 = vld [vmem:[%s3 + $0x4b8] sm:$0xff]
        %v2534 = vld [vmem:[%s3 + $0x4c0] sm:$0xff]
        %v2535 = vld [vmem:[%s3 + $0x4c8] sm:$0xff]
        %v2536 = vld [vmem:[%s3 + $0x4d0] sm:$0xff]
        %v2537 = vld [vmem:[%s3 + $0x4d8] sm:$0xff]
        %v2538 = vld [vmem:[%s3 + $0x4e0] sm:$0xff]
        %v2539 = vld [vmem:[%s3 + $0x4e8] sm:$0xff]
        %v2540 = vld [vmem:[%s3 + $0x4f0] sm:$0xff]
        %v2541 = vld [vmem:[%s3 + $0x4f8] sm:$0xff]
        %v2542 = vld [vmem:[%s3 + $0x500] sm:$0xff]
        %v2543 = vld [vmem:[%s3 + $0x508] sm:$0xff]
        %v2544 = vld [vmem:[%s3 + $0x510] sm:$0xff]
        %v2545 = vld [vmem:[%s3 + $0x518] sm:$0xff]
        %v2546 = vld [vmem:[%s3 + $0x520] sm:$0xff]
        %v2547 = vld [vmem:[%s3 + $0x528] sm:$0xff]
        %v2548 = vld [vmem:[%s3 + $0x530] sm:$0xff]
        %v2549 = vld [vmem:[%s3 + $0x538] sm:$0xff]
        %v2550 = vld [vmem:[%s3 + $0x540] sm:$0xff]
        %v2551 = vld [vmem:[%s3 + $0x548] sm:$0xff]
        %v2552 = vld [vmem:[%s3 + $0x550] sm:$0xff]
        %v2553 = vld [vmem:[%s3 + $0x558] sm:$0xff]
        %v2554 = vld [vmem:[%s3 + $0x560] sm:$0xff]
        %v2555 = vld [vmem:[%s3 + $0x568] sm:$0xff]
        %v2556 = vld [vmem:[%s3 + $0x570] sm:$0xff]
        %v2557 = vld [vmem:[%s3 + $0x578] sm:$0xff]
        %v2558 = vld [vmem:[%s3 + $0x580] sm:$0xff]
        %v2559 = vld [vmem:[%s3 + $0x588] sm:$0xff]
        %v2560 = vld [vmem:[%s3 + $0x590] sm:$0xff]
        %v2561 = vld [vmem:[%s3 + $0x598] sm:$0xff]
        %v2562 = vld [vmem:[%s3 + $0x5a0] sm:$0xff]
        %v2563 = vld [vmem:[%s3 + $0x5a8] sm:$0xff]
        %v2564 = vld [vmem:[%s3 + $0x5b0] sm:$0xff]
        %v2565 = vld [vmem:[%s3 + $0x5b8] sm:$0xff]
        %v2566 = vld [vmem:[%s3 + $0x5c0] sm:$0xff]
        %v2567 = vld [vmem:[%s3 + $0x5c8] sm:$0xff]
        %v2568 = vld [vmem:[%s3 + $0x5d0] sm:$0xff]
        %v2569 = vld [vmem:[%s3 + $0x5d8] sm:$0xff]
        %v2570 = vld [vmem:[%s3 + $0x5e0] sm:$0xff]
        %v2571 = vld [vmem:[%s3 + $0x5e8] sm:$0xff]
        %v2572 = vld [vmem:[%s3 + $0x5f0] sm:$0xff]
        %v2573 = vld [vmem:[%s3 + $0x5f8] sm:$0xff]
        %v2574 = vld [vmem:[%s3 + $0x600] sm:$0xff]
        %v2575 = vld [vmem:[%s3 + $0x608] sm:$0xff]
        %v2576 = vld [vmem:[%s3 + $0x610] sm:$0xff]
        %v2577 = vld [vmem:[%s3 + $0x618] sm:$0xff]
        %v2578 = vld [vmem:[%s3 + $0x620] sm:$0xff]
        %v2579 = vld [vmem:[%s3 + $0x628] sm:$0xff]
        %v2580 = vld [vmem:[%s3 + $0x630] sm:$0xff]
        %v2581 = vld [vmem:[%s3 + $0x638] sm:$0xff]
        %v2582 = vld [vmem:[%s3 + $0x640] sm:$0x7f]
        %v2583 = vld [vmem:[%s3 + $0x648] sm:$0x7f]
        %v2584 = vld [vmem:[%s2] sm:$0xff]
        %v2585 = vld [vmem:[%s2 + $0x8] sm:$0x1]
        %2587 = vset.pattern.permute.xlu0 0
        %2588 = vperm.xlu0 %2587, %v2584
        %v2589 = vpop.permute.xlu0 %2588
        %2592 = vset.pattern.permute.xlu0 0
        %2593 = vperm.xlu0 %2592, %v2585
        %v2594 = vpop.permute.xlu0 %2593
        %vm2596 = vcmask 318464
        %v2598 = vsel %vm2596, %v2374, 0
        %v2601 = vsel %vm2596, %v2381, 0
        %vm2603 = vcmask 1046528
        %v2605 = vsel %vm2603, %v2582, 0
        %v2608 = vsel %vm2603, %v2583, 0
        %2610 = vmatpush.msra.mxu0 %v2412
        %2611 = vmatpush.msra.mxu0 %v2410
        %2612 = vmatpush.msra.mxu0 %v2408
        %2613 = vmatpush.msra.mxu0 %v2406
        %2614 = vmatpush.msra.mxu0 %v2404
        %2615 = vmatpush.msra.mxu0 %v2402
        %2616 = vmatpush.msra.mxu0 %v2400
        %2617 = vmatpush.msra.mxu0 %v2398
        %2618 = vmatpush.msra.mxu0 %v2396
        %2619 = vmatpush.msra.mxu0 %v2394
        %2620 = vmatpush.msra.mxu0 %v2392
        %2621 = vmatpush.msra.mxu0 %v2390
        %2622 = vmatpush.msra.mxu0 %v2388
        %2623 = vmatpush.msra.mxu0 %v2386
        %2624 = vmatpush.msra.mxu0 %v2384
        %2625 = vmatpush.msra.mxu0 %v2382
        %2626 = vmatmul.f32.gmra.mxu0 %v2368
        %v2627 = vpop.f32.mrf.mxu0
        %v2628 = vadd.f32 %v2589, %v2627
        %2629 = vmatmul.f32.gmra.mxu0 %v2375
        %v2630 = vpop.f32.mrf.mxu0
        %v2631 = vadd.f32 %v2594, %v2630
        %2632 = vdwg.mxu0
        %2633 = vmatpush.msra.mxu0 %v2444
        %2634 = vmatpush.msra.mxu0 %v2442
        %2635 = vmatpush.msra.mxu0 %v2440
        %2636 = vmatpush.msra.mxu0 %v2438
        %2637 = vmatpush.msra.mxu0 %v2436
        %2638 = vmatpush.msra.mxu0 %v2434
        %2639 = vmatpush.msra.mxu0 %v2432
        %2640 = vmatpush.msra.mxu0 %v2430
        %2641 = vmatpush.msra.mxu0 %v2428
        %2642 = vmatpush.msra.mxu0 %v2426
        %2643 = vmatpush.msra.mxu0 %v2424
        %2644 = vmatpush.msra.mxu0 %v2422
        %2645 = vmatpush.msra.mxu0 %v2420
        %2646 = vmatpush.msra.mxu0 %v2418
        %2647 = vmatpush.msra.mxu0 %v2416
        %2648 = vmatpush.msra.mxu0 %v2414
        %2649 = vmatmul.f32.gmra.mxu0 %v2369
        %v2650 = vpop.f32.mrf.mxu0
        %v2651 = vadd.f32 %v2628, %v2650
        %2652 = vmatmul.f32.gmra.mxu0 %v2376
        %v2653 = vpop.f32.mrf.mxu0
        %v2654 = vadd.f32 %v2631, %v2653
        %2655 = vdwg.mxu0
        %2656 = vmatpush.msra.mxu0 %v2476
        %2657 = vmatpush.msra.mxu0 %v2474
        %2658 = vmatpush.msra.mxu0 %v2472
        %2659 = vmatpush.msra.mxu0 %v2470
        %2660 = vmatpush.msra.mxu0 %v2468
        %2661 = vmatpush.msra.mxu0 %v2466
        %2662 = vmatpush.msra.mxu0 %v2464
        %2663 = vmatpush.msra.mxu0 %v2462
        %2664 = vmatpush.msra.mxu0 %v2460
        %2665 = vmatpush.msra.mxu0 %v2458
        %2666 = vmatpush.msra.mxu0 %v2456
        %2667 = vmatpush.msra.mxu0 %v2454
        %2668 = vmatpush.msra.mxu0 %v2452
        %2669 = vmatpush.msra.mxu0 %v2450
        %2670 = vmatpush.msra.mxu0 %v2448
        %2671 = vmatpush.msra.mxu0 %v2446
        %2672 = vmatmul.f32.gmra.mxu0 %v2370
        %v2673 = vpop.f32.mrf.mxu0
        %v2674 = vadd.f32 %v2651, %v2673
        %2675 = vmatmul.f32.gmra.mxu0 %v2377
        %v2676 = vpop.f32.mrf.mxu0
        %v2677 = vadd.f32 %v2654, %v2676
        %2678 = vdwg.mxu0
        %2679 = vmatpush.msra.mxu0 %v2508
        %2680 = vmatpush.msra.mxu0 %v2506
        %2681 = vmatpush.msra.mxu0 %v2504
        %2682 = vmatpush.msra.mxu0 %v2502
        %2683 = vmatpush.msra.mxu0 %v2500
        %2684 = vmatpush.msra.mxu0 %v2498
        %2685 = vmatpush.msra.mxu0 %v2496
        %2686 = vmatpush.msra.mxu0 %v2494
        %2687 = vmatpush.msra.mxu0 %v2492
        %2688 = vmatpush.msra.mxu0 %v2490
        %2689 = vmatpush.msra.mxu0 %v2488
        %2690 = vmatpush.msra.mxu0 %v2486
        %2691 = vmatpush.msra.mxu0 %v2484
        %2692 = vmatpush.msra.mxu0 %v2482
        %2693 = vmatpush.msra.mxu0 %v2480
        %2694 = vmatpush.msra.mxu0 %v2478
        %2695 = vmatmul.f32.gmra.mxu0 %v2371
        %v2696 = vpop.f32.mrf.mxu0
        %v2697 = vadd.f32 %v2674, %v2696
        %2698 = vmatmul.f32.gmra.mxu0 %v2378
        %v2699 = vpop.f32.mrf.mxu0
        %v2700 = vadd.f32 %v2677, %v2699
        %2701 = vdwg.mxu0
        %2702 = vmatpush.msra.mxu0 %v2540
        %2703 = vmatpush.msra.mxu0 %v2538
        %2704 = vmatpush.msra.mxu0 %v2536
        %2705 = vmatpush.msra.mxu0 %v2534
        %2706 = vmatpush.msra.mxu0 %v2532
        %2707 = vmatpush.msra.mxu0 %v2530
        %2708 = vmatpush.msra.mxu0 %v2528
        %2709 = vmatpush.msra.mxu0 %v2526
        %2710 = vmatpush.msra.mxu0 %v2524
        %2711 = vmatpush.msra.mxu0 %v2522
        %2712 = vmatpush.msra.mxu0 %v2520
        %2713 = vmatpush.msra.mxu0 %v2518
        %2714 = vmatpush.msra.mxu0 %v2516
        %2715 = vmatpush.msra.mxu0 %v2514
        %2716 = vmatpush.msra.mxu0 %v2512
        %2717 = vmatpush.msra.mxu0 %v2510
        %2718 = vmatmul.f32.gmra.mxu0 %v2372
        %v2719 = vpop.f32.mrf.mxu0
        %v2720 = vadd.f32 %v2697, %v2719
        %2721 = vmatmul.f32.gmra.mxu0 %v2379
        %v2722 = vpop.f32.mrf.mxu0
        %v2723 = vadd.f32 %v2700, %v2722
        %2724 = vdwg.mxu0
        %2725 = vmatpush.msra.mxu0 %v2572
        %2726 = vmatpush.msra.mxu0 %v2570
        %2727 = vmatpush.msra.mxu0 %v2568
        %2728 = vmatpush.msra.mxu0 %v2566
        %2729 = vmatpush.msra.mxu0 %v2564
        %2730 = vmatpush.msra.mxu0 %v2562
        %2731 = vmatpush.msra.mxu0 %v2560
        %2732 = vmatpush.msra.mxu0 %v2558
        %2733 = vmatpush.msra.mxu0 %v2556
        %2734 = vmatpush.msra.mxu0 %v2554
        %2735 = vmatpush.msra.mxu0 %v2552
        %2736 = vmatpush.msra.mxu0 %v2550
        %2737 = vmatpush.msra.mxu0 %v2548
        %2738 = vmatpush.msra.mxu0 %v2546
        %2739 = vmatpush.msra.mxu0 %v2544
        %2740 = vmatpush.msra.mxu0 %v2542
        %2741 = vmatmul.f32.gmra.mxu0 %v2373
        %v2742 = vpop.f32.mrf.mxu0
        %v2743 = vadd.f32 %v2720, %v2742
        %2744 = vmatmul.f32.gmra.mxu0 %v2380
        %v2745 = vpop.f32.mrf.mxu0
        %v2746 = vadd.f32 %v2723, %v2745
        %2747 = vdwg.mxu0
        %2748 = vmatpush.msra.mxu0 0.0
        %2749 = vmatpush.msra.mxu0 0.0
        %2750 = vmatpush.msra.mxu0 0.0
        %2751 = vmatpush.msra.mxu0 0.0
        %2752 = vmatpush.msra.mxu0 0.0
        %2753 = vmatpush.msra.mxu0 0.0
        %2754 = vmatpush.msra.mxu0 0.0
        %2755 = vmatpush.msra.mxu0 0.0
        %2756 = vmatpush.msra.mxu0 0.0
        %2757 = vmatpush.msra.mxu0 0.0
        %2758 = vmatpush.msra.mxu0 0.0
        %2759 = vmatpush.msra.mxu0 %v2605
        %2760 = vmatpush.msra.mxu0 %v2580
        %2761 = vmatpush.msra.mxu0 %v2578
        %2762 = vmatpush.msra.mxu0 %v2576
        %2763 = vmatpush.msra.mxu0 %v2574
        %2764 = vmatmul.f32.gmra.mxu0 %v2598
        %v2765 = vpop.f32.mrf.mxu0
        %v2766 = vadd.f32 %v2743, %v2765
        %2767 = vmatmul.f32.gmra.mxu0 %v2601
        %v2768 = vpop.f32.mrf.mxu0
        %v2769 = vadd.f32 %v2746, %v2768
        %2770 = vdwg.mxu0
        %2771 = vmatpush.msra.mxu0 %v2413
        %2772 = vmatpush.msra.mxu0 %v2411
        %2773 = vmatpush.msra.mxu0 %v2409
        %2774 = vmatpush.msra.mxu0 %v2407
        %2775 = vmatpush.msra.mxu0 %v2405
        %2776 = vmatpush.msra.mxu0 %v2403
        %2777 = vmatpush.msra.mxu0 %v2401
        %2778 = vmatpush.msra.mxu0 %v2399
        %2779 = vmatpush.msra.mxu0 %v2397
        %2780 = vmatpush.msra.mxu0 %v2395
        %2781 = vmatpush.msra.mxu0 %v2393
        %2782 = vmatpush.msra.mxu0 %v2391
        %2783 = vmatpush.msra.mxu0 %v2389
        %2784 = vmatpush.msra.mxu0 %v2387
        %2785 = vmatpush.msra.mxu0 %v2385
        %2786 = vmatpush.msra.mxu0 %v2383
        %2787 = vmatmul.f32.gmra.mxu0 %v2368
        %v2788 = vpop.f32.mrf.mxu0
        %v2789 = vadd.f32 %v2589, %v2788
        %2790 = vmatmul.f32.gmra.mxu0 %v2375
        %v2791 = vpop.f32.mrf.mxu0
        %v2792 = vadd.f32 %v2594, %v2791
        %2793 = vdwg.mxu0
        %2794 = vmatpush.msra.mxu0 %v2445
        %2795 = vmatpush.msra.mxu0 %v2443
        %2796 = vmatpush.msra.mxu0 %v2441
        %2797 = vmatpush.msra.mxu0 %v2439
        %2798 = vmatpush.msra.mxu0 %v2437
        %2799 = vmatpush.msra.mxu0 %v2435
        %2800 = vmatpush.msra.mxu0 %v2433
        %2801 = vmatpush.msra.mxu0 %v2431
        %2802 = vmatpush.msra.mxu0 %v2429
        %2803 = vmatpush.msra.mxu0 %v2427
        %2804 = vmatpush.msra.mxu0 %v2425
        %2805 = vmatpush.msra.mxu0 %v2423
        %2806 = vmatpush.msra.mxu0 %v2421
        %2807 = vmatpush.msra.mxu0 %v2419
        %2808 = vmatpush.msra.mxu0 %v2417
        %2809 = vmatpush.msra.mxu0 %v2415
        %2810 = vmatmul.f32.gmra.mxu0 %v2369
        %v2811 = vpop.f32.mrf.mxu0
        %v2812 = vadd.f32 %v2789, %v2811
        %2813 = vmatmul.f32.gmra.mxu0 %v2376
        %v2814 = vpop.f32.mrf.mxu0
        %v2815 = vadd.f32 %v2792, %v2814
        %2816 = vdwg.mxu0
        %2817 = vmatpush.msra.mxu0 %v2477
        %2818 = vmatpush.msra.mxu0 %v2475
        %2819 = vmatpush.msra.mxu0 %v2473
        %2820 = vmatpush.msra.mxu0 %v2471
        %2821 = vmatpush.msra.mxu0 %v2469
        %2822 = vmatpush.msra.mxu0 %v2467
        %2823 = vmatpush.msra.mxu0 %v2465
        %2824 = vmatpush.msra.mxu0 %v2463
        %2825 = vmatpush.msra.mxu0 %v2461
        %2826 = vmatpush.msra.mxu0 %v2459
        %2827 = vmatpush.msra.mxu0 %v2457
        %2828 = vmatpush.msra.mxu0 %v2455
        %2829 = vmatpush.msra.mxu0 %v2453
        %2830 = vmatpush.msra.mxu0 %v2451
        %2831 = vmatpush.msra.mxu0 %v2449
        %2832 = vmatpush.msra.mxu0 %v2447
        %2833 = vmatmul.f32.gmra.mxu0 %v2370
        %v2834 = vpop.f32.mrf.mxu0
        %v2835 = vadd.f32 %v2812, %v2834
        %2836 = vmatmul.f32.gmra.mxu0 %v2377
        %v2837 = vpop.f32.mrf.mxu0
        %v2838 = vadd.f32 %v2815, %v2837
        %2839 = vdwg.mxu0
        %2840 = vmatpush.msra.mxu0 %v2509
        %2841 = vmatpush.msra.mxu0 %v2507
        %2842 = vmatpush.msra.mxu0 %v2505
        %2843 = vmatpush.msra.mxu0 %v2503
        %2844 = vmatpush.msra.mxu0 %v2501
        %2845 = vmatpush.msra.mxu0 %v2499
        %2846 = vmatpush.msra.mxu0 %v2497
        %2847 = vmatpush.msra.mxu0 %v2495
        %2848 = vmatpush.msra.mxu0 %v2493
        %2849 = vmatpush.msra.mxu0 %v2491
        %2850 = vmatpush.msra.mxu0 %v2489
        %2851 = vmatpush.msra.mxu0 %v2487
        %2852 = vmatpush.msra.mxu0 %v2485
        %2853 = vmatpush.msra.mxu0 %v2483
        %2854 = vmatpush.msra.mxu0 %v2481
        %2855 = vmatpush.msra.mxu0 %v2479
        %2856 = vmatmul.f32.gmra.mxu0 %v2371
        %v2857 = vpop.f32.mrf.mxu0
        %v2858 = vadd.f32 %v2835, %v2857
        %2859 = vmatmul.f32.gmra.mxu0 %v2378
        %v2860 = vpop.f32.mrf.mxu0
        %v2861 = vadd.f32 %v2838, %v2860
        %2862 = vdwg.mxu0
        %2863 = vmatpush.msra.mxu0 %v2541
        %2864 = vmatpush.msra.mxu0 %v2539
        %2865 = vmatpush.msra.mxu0 %v2537
        %2866 = vmatpush.msra.mxu0 %v2535
        %2867 = vmatpush.msra.mxu0 %v2533
        %2868 = vmatpush.msra.mxu0 %v2531
        %2869 = vmatpush.msra.mxu0 %v2529
        %2870 = vmatpush.msra.mxu0 %v2527
        %2871 = vmatpush.msra.mxu0 %v2525
        %2872 = vmatpush.msra.mxu0 %v2523
        %2873 = vmatpush.msra.mxu0 %v2521
        %2874 = vmatpush.msra.mxu0 %v2519
        %2875 = vmatpush.msra.mxu0 %v2517
        %2876 = vmatpush.msra.mxu0 %v2515
        %2877 = vmatpush.msra.mxu0 %v2513
        %2878 = vmatpush.msra.mxu0 %v2511
        %2879 = vmatmul.f32.gmra.mxu0 %v2372
        %v2880 = vpop.f32.mrf.mxu0
        %v2881 = vadd.f32 %v2858, %v2880
        %2882 = vmatmul.f32.gmra.mxu0 %v2379
        %v2883 = vpop.f32.mrf.mxu0
        %v2884 = vadd.f32 %v2861, %v2883
        %2885 = vdwg.mxu0
        %2886 = vmatpush.msra.mxu0 %v2573
        %2887 = vmatpush.msra.mxu0 %v2571
        %2888 = vmatpush.msra.mxu0 %v2569
        %2889 = vmatpush.msra.mxu0 %v2567
        %2890 = vmatpush.msra.mxu0 %v2565
        %2891 = vmatpush.msra.mxu0 %v2563
        %2892 = vmatpush.msra.mxu0 %v2561
        %2893 = vmatpush.msra.mxu0 %v2559
        %2894 = vmatpush.msra.mxu0 %v2557
        %2895 = vmatpush.msra.mxu0 %v2555
        %2896 = vmatpush.msra.mxu0 %v2553
        %2897 = vmatpush.msra.mxu0 %v2551
        %2898 = vmatpush.msra.mxu0 %v2549
        %2899 = vmatpush.msra.mxu0 %v2547
        %2900 = vmatpush.msra.mxu0 %v2545
        %2901 = vmatpush.msra.mxu0 %v2543
        %2902 = vmatmul.f32.gmra.mxu0 %v2373
        %v2903 = vpop.f32.mrf.mxu0
        %v2904 = vadd.f32 %v2881, %v2903
        %2905 = vmatmul.f32.gmra.mxu0 %v2380
        %v2906 = vpop.f32.mrf.mxu0
        %v2907 = vadd.f32 %v2884, %v2906
        %2908 = vdwg.mxu0
        %2909 = vmatpush.msra.mxu0 0.0
        %2910 = vmatpush.msra.mxu0 0.0
        %2911 = vmatpush.msra.mxu0 0.0
        %2912 = vmatpush.msra.mxu0 0.0
        %2913 = vmatpush.msra.mxu0 0.0
        %2914 = vmatpush.msra.mxu0 0.0
        %2915 = vmatpush.msra.mxu0 0.0
        %2916 = vmatpush.msra.mxu0 0.0
        %2917 = vmatpush.msra.mxu0 0.0
        %2918 = vmatpush.msra.mxu0 0.0
        %2919 = vmatpush.msra.mxu0 0.0
        %2920 = vmatpush.msra.mxu0 %v2608
        %2921 = vmatpush.msra.mxu0 %v2581
        %2922 = vmatpush.msra.mxu0 %v2579
        %2923 = vmatpush.msra.mxu0 %v2577
        %2924 = vmatpush.msra.mxu0 %v2575
        %2925 = vmatmul.f32.gmra.mxu0 %v2598
        %v2926 = vpop.f32.mrf.mxu0
        %v2927 = vadd.f32 %v2904, %v2926
        %2928 = vmatmul.f32.gmra.mxu0 %v2601
        %v2929 = vpop.f32.mrf.mxu0
        %v2930 = vadd.f32 %v2907, %v2929
        %2931 = vdwg.mxu0
        %v2932 = vmax.f32 %v2766, 0.0
        %v2933 = vmax.f32 %v2927, 0.0
        %v2934 = vmax.f32 %v2769, 0.0
        %v2935 = vmax.f32 %v2930, 0.0
        %v2936 = vpack.c.bf16 %v2934, %v2932
        %v2937 = vpack.c.bf16 %v2935, %v2933
        %v2938 = vld [vmem:[%s4] sm:$0xf]
        %v2939 = vld [vmem:[%s4 + $0x4] sm:$0xf]
        %v2940 = vld [vmem:[%s4 + $0x8] sm:$0xf]
        %v2941 = vld [vmem:[%s4 + $0xc] sm:$0x1]
        %s2942 = scalar_lea.vmem %s4, 16
        %v2943 = vld [vmem:[%s2942] sm:$0xf]
        %v2944 = vld [vmem:[%s2942 + $0x4] sm:$0xf]
        %v2945 = vld [vmem:[%s2942 + $0x8] sm:$0xf]
        %v2946 = vld [vmem:[%s2942 + $0xc] sm:$0x1]
        %v2951 = vunpack.c.l.b16 %v2943
        %v2952 = vunpack.c.l.b16 %v2944
        %v2953 = vunpack.c.l.b16 %v2945
        %v2954 = vunpack.c.l.b16 %v2946
        %v2955 = vpack.c.b16 %v2952, %v2951
        %v2956 = vpack.c.b16 %v2954, %v2953
        %2959 = vrot.lane.b32.xlu0 %v2936, 127
        %v2960 = vpop.permute.xlu0 %2959
        %2961 = vrot.lane.b32.xlu0 %v2937, 127
        %v2962 = vpop.permute.xlu0 %2961
        %v2963 = vsel %vm534, %v2960, %v2962
        %vm2964 = vcmask 72704
        %v2966 = vsel %vm2964, %v2955, 0
        %v2969 = vsel %vm2964, %v2956, 0
        %vm2971 = vcmask 1043456
        %vm2972 = vcmask 1044480
        %v2973 = vsel %vm2971, 4294967295, 65535
        %v2974 = vsel %vm2972, %v2973, 0
        %v2976 = vand.u32 %v2963, %v2974
        %v2979 = vand.u32 %v2962, %v2974
        %2981 = vmatpush.bf16.msra.mxu0 0
        %2982 = vmatpush.bf16.msra.mxu0 0
        %2983 = vmatpush.bf16.msra.mxu0 0
        %2984 = vmatpush.bf16.msra.mxu0 0
        %2985 = vmatpush.bf16.msra.mxu0 0
        %2986 = vmatpush.bf16.msra.mxu0 0
        %2987 = vmatpush.bf16.msra.mxu0 0
        %2988 = vmatpush.bf16.msra.mxu0 %v2976
        %2989 = vmatmul.bf16.gmra.mxu0 %v2966
        %v2990 = vpop.f32.mrf.mxu0
        %v2991 = vadd.f32 0.0, %v2990
        %v2992 = vpop.f32.mrf.mxu0
        %v2993 = vadd.f32 0.0, %v2992
        %2994 = vmatmul.bf16.gmra.mxu0 %v2969
        %v2995 = vpop.f32.mrf.mxu0
        %v2996 = vadd.f32 0.0, %v2995
        %v2997 = vpop.f32.mrf.mxu0
        %v2998 = vadd.f32 0.0, %v2997
        %2999 = vdwg.mxu0
        %3000 = vmatpush.bf16.msra.mxu0 0
        %3001 = vmatpush.bf16.msra.mxu0 0
        %3002 = vmatpush.bf16.msra.mxu0 0
        %3003 = vmatpush.bf16.msra.mxu0 0
        %3004 = vmatpush.bf16.msra.mxu0 0
        %3005 = vmatpush.bf16.msra.mxu0 0
        %3006 = vmatpush.bf16.msra.mxu0 0
        %3007 = vmatpush.bf16.msra.mxu0 %v2979
        %3008 = vmatmul.bf16.gmra.mxu0 %v2966
        %v3009 = vpop.f32.mrf.mxu0
        %v3010 = vadd.f32 0.0, %v3009
        %v3011 = vpop.f32.mrf.mxu0
        %v3012 = vadd.f32 0.0, %v3011
        %3013 = vmatmul.bf16.gmra.mxu0 %v2969
        %v3014 = vpop.f32.mrf.mxu0
        %v3015 = vadd.f32 0.0, %v3014
        %v3016 = vpop.f32.mrf.mxu0
        %v3017 = vadd.f32 0.0, %v3016
        %3018 = vdwg.mxu0
        %v3023 = vunpack.c.l.b16 %v2938
        %v3024 = vunpack.c.l.b16 %v2939
        %v3025 = vunpack.c.l.b16 %v2940
        %v3026 = vunpack.c.l.b16 %v2941
        %v3027 = vpack.c.b16 %v3024, %v3023
        %v3028 = vpack.c.b16 %v3026, %v3025
        %v3030 = vsel %vm2964, %v3027, 0
        %v3033 = vsel %vm2964, %v3028, 0
        %v3036 = vand.u32 %v2936, %v2974
        %v3039 = vand.u32 %v2937, %v2974
        %3041 = vmatpush.bf16.msra.mxu0 0
        %3042 = vmatpush.bf16.msra.mxu0 0
        %3043 = vmatpush.bf16.msra.mxu0 0
        %3044 = vmatpush.bf16.msra.mxu0 0
        %3045 = vmatpush.bf16.msra.mxu0 0
        %3046 = vmatpush.bf16.msra.mxu0 0
        %3047 = vmatpush.bf16.msra.mxu0 0
        %3048 = vmatpush.bf16.msra.mxu0 %v3036
        %3049 = vmatmul.bf16.gmra.mxu0 %v3030
        %v3050 = vpop.f32.mrf.mxu0
        %v3051 = vadd.f32 %v2991, %v3050
        %v3052 = vpop.f32.mrf.mxu0
        %v3053 = vadd.f32 %v2993, %v3052
        %3054 = vmatmul.bf16.gmra.mxu0 %v3033
        %v3055 = vpop.f32.mrf.mxu0
        %v3056 = vadd.f32 %v2996, %v3055
        %v3057 = vpop.f32.mrf.mxu0
        %v3058 = vadd.f32 %v2998, %v3057
        %3059 = vdwg.mxu0
        %3060 = vmatpush.bf16.msra.mxu0 0
        %3061 = vmatpush.bf16.msra.mxu0 0
        %3062 = vmatpush.bf16.msra.mxu0 0
        %3063 = vmatpush.bf16.msra.mxu0 0
        %3064 = vmatpush.bf16.msra.mxu0 0
        %3065 = vmatpush.bf16.msra.mxu0 0
        %3066 = vmatpush.bf16.msra.mxu0 0
        %3067 = vmatpush.bf16.msra.mxu0 %v3039
        %3068 = vmatmul.bf16.gmra.mxu0 %v3030
        %v3069 = vpop.f32.mrf.mxu0
        %v3070 = vadd.f32 %v3010, %v3069
        %v3071 = vpop.f32.mrf.mxu0
        %v3072 = vadd.f32 %v3012, %v3071
        %3073 = vmatmul.bf16.gmra.mxu0 %v3033
        %v3074 = vpop.f32.mrf.mxu0
        %v3075 = vadd.f32 %v3015, %v3074
        %v3076 = vpop.f32.mrf.mxu0
        %v3077 = vadd.f32 %v3017, %v3076
        %3078 = vdwg.mxu0
        %s3079 = scalar_lea.vmem %s4, 32
        %v3080 = vld [vmem:[%s3079] sm:$0xf]
        %v3081 = vld [vmem:[%s3079 + $0x4] sm:$0xf]
        %v3082 = vld [vmem:[%s3079 + $0x8] sm:$0xf]
        %v3083 = vld [vmem:[%s3079 + $0xc] sm:$0x1]
        %v3088 = vunpack.c.l.b16 %v3080
        %v3089 = vunpack.c.l.b16 %v3081
        %v3090 = vunpack.c.l.b16 %v3082
        %v3091 = vunpack.c.l.b16 %v3083
        %v3092 = vpack.c.b16 %v3089, %v3088
        %v3093 = vpack.c.b16 %v3091, %v3090
        %3094 = vrot.lane.b32.xlu0 %v2936, 126
        %v3095 = vpop.permute.xlu0 %3094
        %3096 = vrot.lane.b32.xlu0 %v2937, 126
        %v3097 = vpop.permute.xlu0 %3096
        %v3098 = vsel %vm852, %v3095, %v3097
        %v3100 = vsel %vm2964, %v3092, 0
        %v3103 = vsel %vm2964, %v3093, 0
        %v3106 = vand.u32 %v3098, %v2974
        %v3109 = vand.u32 %v3097, %v2974
        %3111 = vmatpush.bf16.msra.mxu0 0
        %3112 = vmatpush.bf16.msra.mxu0 0
        %3113 = vmatpush.bf16.msra.mxu0 0
        %3114 = vmatpush.bf16.msra.mxu0 0
        %3115 = vmatpush.bf16.msra.mxu0 0
        %3116 = vmatpush.bf16.msra.mxu0 0
        %3117 = vmatpush.bf16.msra.mxu0 0
        %3118 = vmatpush.bf16.msra.mxu0 %v3106
        %3119 = vmatmul.bf16.gmra.mxu0 %v3100
        %v3120 = vpop.f32.mrf.mxu0
        %v3121 = vadd.f32 0.0, %v3120
        %v3122 = vpop.f32.mrf.mxu0
        %v3123 = vadd.f32 0.0, %v3122
        %3124 = vmatmul.bf16.gmra.mxu0 %v3103
        %v3125 = vpop.f32.mrf.mxu0
        %v3126 = vadd.f32 0.0, %v3125
        %v3127 = vpop.f32.mrf.mxu0
        %v3128 = vadd.f32 0.0, %v3127
        %3129 = vdwg.mxu0
        %3130 = vmatpush.bf16.msra.mxu0 0
        %3131 = vmatpush.bf16.msra.mxu0 0
        %3132 = vmatpush.bf16.msra.mxu0 0
        %3133 = vmatpush.bf16.msra.mxu0 0
        %3134 = vmatpush.bf16.msra.mxu0 0
        %3135 = vmatpush.bf16.msra.mxu0 0
        %3136 = vmatpush.bf16.msra.mxu0 0
        %3137 = vmatpush.bf16.msra.mxu0 %v3109
        %3138 = vmatmul.bf16.gmra.mxu0 %v3100
        %v3139 = vpop.f32.mrf.mxu0
        %v3140 = vadd.f32 0.0, %v3139
        %v3141 = vpop.f32.mrf.mxu0
        %v3142 = vadd.f32 0.0, %v3141
        %3143 = vmatmul.bf16.gmra.mxu0 %v3103
        %v3144 = vpop.f32.mrf.mxu0
        %v3145 = vadd.f32 0.0, %v3144
        %v3146 = vpop.f32.mrf.mxu0
        %v3147 = vadd.f32 0.0, %v3146
        %3148 = vdwg.mxu0
        %v3149 = vadd.f32 %v3051, %v3121
        %v3150 = vadd.f32 %v3070, %v3140
        %v3151 = vadd.f32 %v3053, %v3123
        %v3152 = vadd.f32 %v3072, %v3142
        %v3153 = vadd.f32 %v3056, %v3126
        %v3154 = vadd.f32 %v3075, %v3145
        %v3155 = vadd.f32 %v3058, %v3128
        %v3156 = vadd.f32 %v3077, %v3147
        %s3157 = scalar_lea.vmem %s4, 48
        %v3158 = vld [vmem:[%s3157] sm:$0xf]
        %v3159 = vld [vmem:[%s3157 + $0x4] sm:$0xf]
        %v3160 = vld [vmem:[%s3157 + $0x8] sm:$0xf]
        %v3161 = vld [vmem:[%s3157 + $0xc] sm:$0x1]
        %v3166 = vunpack.c.l.b16 %v3158
        %v3167 = vunpack.c.l.b16 %v3159
        %v3168 = vunpack.c.l.b16 %v3160
        %v3169 = vunpack.c.l.b16 %v3161
        %v3170 = vpack.c.b16 %v3167, %v3166
        %v3171 = vpack.c.b16 %v3169, %v3168
        %3172 = vrot.lane.b32.xlu0 %v2936, 114
        %v3173 = vpop.permute.xlu0 %3172
        %3174 = vrot.lane.b32.xlu0 %v2937, 114
        %v3175 = vpop.permute.xlu0 %3174
        %vm3176 = vcmask 932864
        %v3177 = vsel %vm3176, %v3173, %v3175
        %v3179 = vsel %vm2964, %v3170, 0
        %v3182 = vsel %vm2964, %v3171, 0
        %v3185 = vand.u32 %v3177, %v2974
        %v3188 = vand.u32 %v3175, %v2974
        %3190 = vmatpush.bf16.msra.mxu0 0
        %3191 = vmatpush.bf16.msra.mxu0 0
        %3192 = vmatpush.bf16.msra.mxu0 0
        %3193 = vmatpush.bf16.msra.mxu0 0
        %3194 = vmatpush.bf16.msra.mxu0 0
        %3195 = vmatpush.bf16.msra.mxu0 0
        %3196 = vmatpush.bf16.msra.mxu0 0
        %3197 = vmatpush.bf16.msra.mxu0 %v3185
        %3198 = vmatmul.bf16.gmra.mxu0 %v3179
        %v3199 = vpop.f32.mrf.mxu0
        %v3200 = vadd.f32 0.0, %v3199
        %v3201 = vpop.f32.mrf.mxu0
        %v3202 = vadd.f32 0.0, %v3201
        %3203 = vmatmul.bf16.gmra.mxu0 %v3182
        %v3204 = vpop.f32.mrf.mxu0
        %v3205 = vadd.f32 0.0, %v3204
        %v3206 = vpop.f32.mrf.mxu0
        %v3207 = vadd.f32 0.0, %v3206
        %3208 = vdwg.mxu0
        %3209 = vmatpush.bf16.msra.mxu0 0
        %3210 = vmatpush.bf16.msra.mxu0 0
        %3211 = vmatpush.bf16.msra.mxu0 0
        %3212 = vmatpush.bf16.msra.mxu0 0
        %3213 = vmatpush.bf16.msra.mxu0 0
        %3214 = vmatpush.bf16.msra.mxu0 0
        %3215 = vmatpush.bf16.msra.mxu0 0
        %3216 = vmatpush.bf16.msra.mxu0 %v3188
        %3217 = vmatmul.bf16.gmra.mxu0 %v3179
        %v3218 = vpop.f32.mrf.mxu0
        %v3219 = vadd.f32 0.0, %v3218
        %v3220 = vpop.f32.mrf.mxu0
        %v3221 = vadd.f32 0.0, %v3220
        %3222 = vmatmul.bf16.gmra.mxu0 %v3182
        %v3223 = vpop.f32.mrf.mxu0
        %v3224 = vadd.f32 0.0, %v3223
        %v3225 = vpop.f32.mrf.mxu0
        %v3226 = vadd.f32 0.0, %v3225
        %3227 = vdwg.mxu0
        %v3228 = vadd.f32 %v3149, %v3200
        %v3229 = vadd.f32 %v3150, %v3219
        %v3230 = vadd.f32 %v3151, %v3202
        %v3231 = vadd.f32 %v3152, %v3221
        %v3232 = vadd.f32 %v3153, %v3205
        %v3233 = vadd.f32 %v3154, %v3224
        %v3234 = vadd.f32 %v3155, %v3207
        %v3235 = vadd.f32 %v3156, %v3226
        %s3236 = scalar_lea.vmem %s4, 64
        %v3237 = vld [vmem:[%s3236] sm:$0xf]
        %v3238 = vld [vmem:[%s3236 + $0x4] sm:$0xf]
        %v3239 = vld [vmem:[%s3236 + $0x8] sm:$0xf]
        %v3240 = vld [vmem:[%s3236 + $0xc] sm:$0x1]
        %v3245 = vunpack.c.l.b16 %v3237
        %v3246 = vunpack.c.l.b16 %v3238
        %v3247 = vunpack.c.l.b16 %v3239
        %v3248 = vunpack.c.l.b16 %v3240
        %v3249 = vpack.c.b16 %v3246, %v3245
        %v3250 = vpack.c.b16 %v3248, %v3247
        %3251 = vrot.lane.b32.xlu0 %v2936, 113
        %v3252 = vpop.permute.xlu0 %3251
        %3253 = vrot.lane.b32.xlu0 %v2937, 113
        %v3254 = vpop.permute.xlu0 %3253
        %vm3255 = vcmask 924672
        %v3256 = vsel %vm3255, %v3252, %v3254
        %v3258 = vsel %vm2964, %v3249, 0
        %v3261 = vsel %vm2964, %v3250, 0
        %v3264 = vand.u32 %v3256, %v2974
        %v3267 = vand.u32 %v3254, %v2974
        %3269 = vmatpush.bf16.msra.mxu0 0
        %3270 = vmatpush.bf16.msra.mxu0 0
        %3271 = vmatpush.bf16.msra.mxu0 0
        %3272 = vmatpush.bf16.msra.mxu0 0
        %3273 = vmatpush.bf16.msra.mxu0 0
        %3274 = vmatpush.bf16.msra.mxu0 0
        %3275 = vmatpush.bf16.msra.mxu0 0
        %3276 = vmatpush.bf16.msra.mxu0 %v3264
        %3277 = vmatmul.bf16.gmra.mxu0 %v3258
        %v3278 = vpop.f32.mrf.mxu0
        %v3279 = vadd.f32 0.0, %v3278
        %v3280 = vpop.f32.mrf.mxu0
        %v3281 = vadd.f32 0.0, %v3280
        %3282 = vmatmul.bf16.gmra.mxu0 %v3261
        %v3283 = vpop.f32.mrf.mxu0
        %v3284 = vadd.f32 0.0, %v3283
        %v3285 = vpop.f32.mrf.mxu0
        %v3286 = vadd.f32 0.0, %v3285
        %3287 = vdwg.mxu0
        %3288 = vmatpush.bf16.msra.mxu0 0
        %3289 = vmatpush.bf16.msra.mxu0 0
        %3290 = vmatpush.bf16.msra.mxu0 0
        %3291 = vmatpush.bf16.msra.mxu0 0
        %3292 = vmatpush.bf16.msra.mxu0 0
        %3293 = vmatpush.bf16.msra.mxu0 0
        %3294 = vmatpush.bf16.msra.mxu0 0
        %3295 = vmatpush.bf16.msra.mxu0 %v3267
        %3296 = vmatmul.bf16.gmra.mxu0 %v3258
        %v3297 = vpop.f32.mrf.mxu0
        %v3298 = vadd.f32 0.0, %v3297
        %v3299 = vpop.f32.mrf.mxu0
        %v3300 = vadd.f32 0.0, %v3299
        %3301 = vmatmul.bf16.gmra.mxu0 %v3261
        %v3302 = vpop.f32.mrf.mxu0
        %v3303 = vadd.f32 0.0, %v3302
        %v3304 = vpop.f32.mrf.mxu0
        %v3305 = vadd.f32 0.0, %v3304
        %3306 = vdwg.mxu0
        %v3307 = vadd.f32 %v3228, %v3279
        %v3308 = vadd.f32 %v3229, %v3298
        %v3309 = vadd.f32 %v3230, %v3281
        %v3310 = vadd.f32 %v3231, %v3300
        %v3311 = vadd.f32 %v3232, %v3284
        %v3312 = vadd.f32 %v3233, %v3303
        %v3313 = vadd.f32 %v3234, %v3286
        %v3314 = vadd.f32 %v3235, %v3305
        %s3315 = scalar_lea.vmem %s4, 80
        %v3316 = vld [vmem:[%s3315] sm:$0xf]
        %v3317 = vld [vmem:[%s3315 + $0x4] sm:$0xf]
        %v3318 = vld [vmem:[%s3315 + $0x8] sm:$0xf]
        %v3319 = vld [vmem:[%s3315 + $0xc] sm:$0x1]
        %v3324 = vunpack.c.l.b16 %v3316
        %v3325 = vunpack.c.l.b16 %v3317
        %v3326 = vunpack.c.l.b16 %v3318
        %v3327 = vunpack.c.l.b16 %v3319
        %v3328 = vpack.c.b16 %v3325, %v3324
        %v3329 = vpack.c.b16 %v3327, %v3326
        %3330 = vrot.lane.b32.xlu0 %v2936, 112
        %v3331 = vpop.permute.xlu0 %3330
        %3332 = vrot.lane.b32.xlu0 %v2937, 112
        %v3333 = vpop.permute.xlu0 %3332
        %vm3334 = vcmask 916480
        %v3335 = vsel %vm3334, %v3331, %v3333
        %v3337 = vsel %vm2964, %v3328, 0
        %v3340 = vsel %vm2964, %v3329, 0
        %v3343 = vand.u32 %v3335, %v2974
        %v3346 = vand.u32 %v3333, %v2974
        %3348 = vmatpush.bf16.msra.mxu0 0
        %3349 = vmatpush.bf16.msra.mxu0 0
        %3350 = vmatpush.bf16.msra.mxu0 0
        %3351 = vmatpush.bf16.msra.mxu0 0
        %3352 = vmatpush.bf16.msra.mxu0 0
        %3353 = vmatpush.bf16.msra.mxu0 0
        %3354 = vmatpush.bf16.msra.mxu0 0
        %3355 = vmatpush.bf16.msra.mxu0 %v3343
        %3356 = vmatmul.bf16.gmra.mxu0 %v3337
        %v3357 = vpop.f32.mrf.mxu0
        %v3358 = vadd.f32 0.0, %v3357
        %v3359 = vpop.f32.mrf.mxu0
        %v3360 = vadd.f32 0.0, %v3359
        %3361 = vmatmul.bf16.gmra.mxu0 %v3340
        %v3362 = vpop.f32.mrf.mxu0
        %v3363 = vadd.f32 0.0, %v3362
        %v3364 = vpop.f32.mrf.mxu0
        %v3365 = vadd.f32 0.0, %v3364
        %3366 = vdwg.mxu0
        %3367 = vmatpush.bf16.msra.mxu0 0
        %3368 = vmatpush.bf16.msra.mxu0 0
        %3369 = vmatpush.bf16.msra.mxu0 0
        %3370 = vmatpush.bf16.msra.mxu0 0
        %3371 = vmatpush.bf16.msra.mxu0 0
        %3372 = vmatpush.bf16.msra.mxu0 0
        %3373 = vmatpush.bf16.msra.mxu0 0
        %3374 = vmatpush.bf16.msra.mxu0 %v3346
        %3375 = vmatmul.bf16.gmra.mxu0 %v3337
        %v3376 = vpop.f32.mrf.mxu0
        %v3377 = vadd.f32 0.0, %v3376
        %v3378 = vpop.f32.mrf.mxu0
        %v3379 = vadd.f32 0.0, %v3378
        %3380 = vmatmul.bf16.gmra.mxu0 %v3340
        %v3381 = vpop.f32.mrf.mxu0
        %v3382 = vadd.f32 0.0, %v3381
        %v3383 = vpop.f32.mrf.mxu0
        %v3384 = vadd.f32 0.0, %v3383
        %3385 = vdwg.mxu0
        %v3386 = vadd.f32 %v3307, %v3358
        %v3387 = vadd.f32 %v3308, %v3377
        %v3388 = vadd.f32 %v3309, %v3360
        %v3389 = vadd.f32 %v3310, %v3379
        %v3390 = vadd.f32 %v3311, %v3363
        %v3391 = vadd.f32 %v3312, %v3382
        %v3392 = vadd.f32 %v3313, %v3365
        %v3393 = vadd.f32 %v3314, %v3384
        %s3394 = scalar_lea.vmem %s4, 96
        %v3395 = vld [vmem:[%s3394] sm:$0xf]
        %v3396 = vld [vmem:[%s3394 + $0x4] sm:$0xf]
        %v3397 = vld [vmem:[%s3394 + $0x8] sm:$0xf]
        %v3398 = vld [vmem:[%s3394 + $0xc] sm:$0x1]
        %v3403 = vunpack.c.l.b16 %v3395
        %v3404 = vunpack.c.l.b16 %v3396
        %v3405 = vunpack.c.l.b16 %v3397
        %v3406 = vunpack.c.l.b16 %v3398
        %v3407 = vpack.c.b16 %v3404, %v3403
        %v3408 = vpack.c.b16 %v3406, %v3405
        %3409 = vrot.lane.b32.xlu0 %v2936, 100
        %v3410 = vpop.permute.xlu0 %3409
        %3411 = vrot.lane.b32.xlu0 %v2937, 100
        %v3412 = vpop.permute.xlu0 %3411
        %vm3413 = vcmask 818176
        %v3414 = vsel %vm3413, %v3410, %v3412
        %v3416 = vsel %vm2964, %v3407, 0
        %v3419 = vsel %vm2964, %v3408, 0
        %v3422 = vand.u32 %v3414, %v2974
        %v3425 = vand.u32 %v3412, %v2974
        %3427 = vmatpush.bf16.msra.mxu0 0
        %3428 = vmatpush.bf16.msra.mxu0 0
        %3429 = vmatpush.bf16.msra.mxu0 0
        %3430 = vmatpush.bf16.msra.mxu0 0
        %3431 = vmatpush.bf16.msra.mxu0 0
        %3432 = vmatpush.bf16.msra.mxu0 0
        %3433 = vmatpush.bf16.msra.mxu0 0
        %3434 = vmatpush.bf16.msra.mxu0 %v3422
        %3435 = vmatmul.bf16.gmra.mxu0 %v3416
        %v3436 = vpop.f32.mrf.mxu0
        %v3437 = vadd.f32 0.0, %v3436
        %v3438 = vpop.f32.mrf.mxu0
        %v3439 = vadd.f32 0.0, %v3438
        %3440 = vmatmul.bf16.gmra.mxu0 %v3419
        %v3441 = vpop.f32.mrf.mxu0
        %v3442 = vadd.f32 0.0, %v3441
        %v3443 = vpop.f32.mrf.mxu0
        %v3444 = vadd.f32 0.0, %v3443
        %3445 = vdwg.mxu0
        %3446 = vmatpush.bf16.msra.mxu0 0
        %3447 = vmatpush.bf16.msra.mxu0 0
        %3448 = vmatpush.bf16.msra.mxu0 0
        %3449 = vmatpush.bf16.msra.mxu0 0
        %3450 = vmatpush.bf16.msra.mxu0 0
        %3451 = vmatpush.bf16.msra.mxu0 0
        %3452 = vmatpush.bf16.msra.mxu0 0
        %3453 = vmatpush.bf16.msra.mxu0 %v3425
        %3454 = vmatmul.bf16.gmra.mxu0 %v3416
        %v3455 = vpop.f32.mrf.mxu0
        %v3456 = vadd.f32 0.0, %v3455
        %v3457 = vpop.f32.mrf.mxu0
        %v3458 = vadd.f32 0.0, %v3457
        %3459 = vmatmul.bf16.gmra.mxu0 %v3419
        %v3460 = vpop.f32.mrf.mxu0
        %v3461 = vadd.f32 0.0, %v3460
        %v3462 = vpop.f32.mrf.mxu0
        %v3463 = vadd.f32 0.0, %v3462
        %3464 = vdwg.mxu0
        %v3465 = vadd.f32 %v3386, %v3437
        %v3466 = vadd.f32 %v3387, %v3456
        %v3467 = vadd.f32 %v3388, %v3439
        %v3468 = vadd.f32 %v3389, %v3458
        %v3469 = vadd.f32 %v3390, %v3442
        %v3470 = vadd.f32 %v3391, %v3461
        %v3471 = vadd.f32 %v3392, %v3444
        %v3472 = vadd.f32 %v3393, %v3463
        %s3473 = scalar_lea.vmem %s4, 112
        %v3474 = vld [vmem:[%s3473] sm:$0xf]
        %v3475 = vld [vmem:[%s3473 + $0x4] sm:$0xf]
        %v3476 = vld [vmem:[%s3473 + $0x8] sm:$0xf]
        %v3477 = vld [vmem:[%s3473 + $0xc] sm:$0x1]
        %v3482 = vunpack.c.l.b16 %v3474
        %v3483 = vunpack.c.l.b16 %v3475
        %v3484 = vunpack.c.l.b16 %v3476
        %v3485 = vunpack.c.l.b16 %v3477
        %v3486 = vpack.c.b16 %v3483, %v3482
        %v3487 = vpack.c.b16 %v3485, %v3484
        %3488 = vrot.lane.b32.xlu0 %v2936, 99
        %v3489 = vpop.permute.xlu0 %3488
        %3490 = vrot.lane.b32.xlu0 %v2937, 99
        %v3491 = vpop.permute.xlu0 %3490
        %vm3492 = vcmask 809984
        %v3493 = vsel %vm3492, %v3489, %v3491
        %v3495 = vsel %vm2964, %v3486, 0
        %v3498 = vsel %vm2964, %v3487, 0
        %v3501 = vand.u32 %v3493, %v2974
        %v3504 = vand.u32 %v3491, %v2974
        %3506 = vmatpush.bf16.msra.mxu0 0
        %3507 = vmatpush.bf16.msra.mxu0 0
        %3508 = vmatpush.bf16.msra.mxu0 0
        %3509 = vmatpush.bf16.msra.mxu0 0
        %3510 = vmatpush.bf16.msra.mxu0 0
        %3511 = vmatpush.bf16.msra.mxu0 0
        %3512 = vmatpush.bf16.msra.mxu0 0
        %3513 = vmatpush.bf16.msra.mxu0 %v3501
        %3514 = vmatmul.bf16.gmra.mxu0 %v3495
        %v3515 = vpop.f32.mrf.mxu0
        %v3516 = vadd.f32 0.0, %v3515
        %v3517 = vpop.f32.mrf.mxu0
        %v3518 = vadd.f32 0.0, %v3517
        %3519 = vmatmul.bf16.gmra.mxu0 %v3498
        %v3520 = vpop.f32.mrf.mxu0
        %v3521 = vadd.f32 0.0, %v3520
        %v3522 = vpop.f32.mrf.mxu0
        %v3523 = vadd.f32 0.0, %v3522
        %3524 = vdwg.mxu0
        %3525 = vmatpush.bf16.msra.mxu0 0
        %3526 = vmatpush.bf16.msra.mxu0 0
        %3527 = vmatpush.bf16.msra.mxu0 0
        %3528 = vmatpush.bf16.msra.mxu0 0
        %3529 = vmatpush.bf16.msra.mxu0 0
        %3530 = vmatpush.bf16.msra.mxu0 0
        %3531 = vmatpush.bf16.msra.mxu0 0
        %3532 = vmatpush.bf16.msra.mxu0 %v3504
        %3533 = vmatmul.bf16.gmra.mxu0 %v3495
        %v3534 = vpop.f32.mrf.mxu0
        %v3535 = vadd.f32 0.0, %v3534
        %v3536 = vpop.f32.mrf.mxu0
        %v3537 = vadd.f32 0.0, %v3536
        %3538 = vmatmul.bf16.gmra.mxu0 %v3498
        %v3539 = vpop.f32.mrf.mxu0
        %v3540 = vadd.f32 0.0, %v3539
        %v3541 = vpop.f32.mrf.mxu0
        %v3542 = vadd.f32 0.0, %v3541
        %3543 = vdwg.mxu0
        %v3544 = vadd.f32 %v3465, %v3516
        %v3545 = vadd.f32 %v3466, %v3535
        %v3546 = vadd.f32 %v3467, %v3518
        %v3547 = vadd.f32 %v3468, %v3537
        %v3548 = vadd.f32 %v3469, %v3521
        %v3549 = vadd.f32 %v3470, %v3540
        %v3550 = vadd.f32 %v3471, %v3523
        %v3551 = vadd.f32 %v3472, %v3542
        %s3552 = scalar_lea.vmem %s4, 128
        %v3553 = vld [vmem:[%s3552] sm:$0xf]
        %v3554 = vld [vmem:[%s3552 + $0x4] sm:$0xf]
        %v3555 = vld [vmem:[%s3552 + $0x8] sm:$0xf]
        %v3556 = vld [vmem:[%s3552 + $0xc] sm:$0x1]
        %v3561 = vunpack.c.l.b16 %v3553
        %v3562 = vunpack.c.l.b16 %v3554
        %v3563 = vunpack.c.l.b16 %v3555
        %v3564 = vunpack.c.l.b16 %v3556
        %v3565 = vpack.c.b16 %v3562, %v3561
        %v3566 = vpack.c.b16 %v3564, %v3563
        %3567 = vrot.lane.b32.xlu0 %v2936, 98
        %v3568 = vpop.permute.xlu0 %3567
        %3569 = vrot.lane.b32.xlu0 %v2937, 98
        %v3570 = vpop.permute.xlu0 %3569
        %v3571 = vsel %vm1052, %v3568, %v3570
        %v3573 = vsel %vm2964, %v3565, 0
        %v3576 = vsel %vm2964, %v3566, 0
        %v3579 = vand.u32 %v3571, %v2974
        %v3582 = vand.u32 %v3570, %v2974
        %3584 = vmatpush.bf16.msra.mxu0 0
        %3585 = vmatpush.bf16.msra.mxu0 0
        %3586 = vmatpush.bf16.msra.mxu0 0
        %3587 = vmatpush.bf16.msra.mxu0 0
        %3588 = vmatpush.bf16.msra.mxu0 0
        %3589 = vmatpush.bf16.msra.mxu0 0
        %3590 = vmatpush.bf16.msra.mxu0 0
        %3591 = vmatpush.bf16.msra.mxu0 %v3579
        %3592 = vmatmul.bf16.gmra.mxu0 %v3573
        %v3593 = vpop.f32.mrf.mxu0
        %v3594 = vadd.f32 0.0, %v3593
        %v3595 = vpop.f32.mrf.mxu0
        %v3596 = vadd.f32 0.0, %v3595
        %3597 = vmatmul.bf16.gmra.mxu0 %v3576
        %v3598 = vpop.f32.mrf.mxu0
        %v3599 = vadd.f32 0.0, %v3598
        %v3600 = vpop.f32.mrf.mxu0
        %v3601 = vadd.f32 0.0, %v3600
        %3602 = vdwg.mxu0
        %3603 = vmatpush.bf16.msra.mxu0 0
        %3604 = vmatpush.bf16.msra.mxu0 0
        %3605 = vmatpush.bf16.msra.mxu0 0
        %3606 = vmatpush.bf16.msra.mxu0 0
        %3607 = vmatpush.bf16.msra.mxu0 0
        %3608 = vmatpush.bf16.msra.mxu0 0
        %3609 = vmatpush.bf16.msra.mxu0 0
        %3610 = vmatpush.bf16.msra.mxu0 %v3582
        %3611 = vmatmul.bf16.gmra.mxu0 %v3573
        %v3612 = vpop.f32.mrf.mxu0
        %v3613 = vadd.f32 0.0, %v3612
        %v3614 = vpop.f32.mrf.mxu0
        %v3615 = vadd.f32 0.0, %v3614
        %3616 = vmatmul.bf16.gmra.mxu0 %v3576
        %v3617 = vpop.f32.mrf.mxu0
        %v3618 = vadd.f32 0.0, %v3617
        %v3619 = vpop.f32.mrf.mxu0
        %v3620 = vadd.f32 0.0, %v3619
        %3621 = vdwg.mxu0
        %v3622 = vadd.f32 %v3544, %v3594
        %v3623 = vadd.f32 %v3545, %v3613
        %v3624 = vadd.f32 %v3546, %v3596
        %v3625 = vadd.f32 %v3547, %v3615
        %v3626 = vadd.f32 %v3548, %v3599
        %v3627 = vadd.f32 %v3549, %v3618
        %v3628 = vadd.f32 %v3550, %v3601
        %v3629 = vadd.f32 %v3551, %v3620
        %3638 = vrot.lane.b32.xlu0 %v3622, 127
        %v3639 = vpop.permute.xlu0 %3638
        %3640 = vrot.lane.b32.xlu0 %v3623, 127
        %v3641 = vpop.permute.xlu0 %3640
        %3642 = vrot.lane.b32.xlu0 %v3624, 127
        %v3643 = vpop.permute.xlu0 %3642
        %3644 = vrot.lane.b32.xlu0 %v3625, 127
        %v3645 = vpop.permute.xlu0 %3644
        %3646 = vrot.lane.b32.xlu0 %v3626, 127
        %v3647 = vpop.permute.xlu0 %3646
        %3648 = vrot.lane.b32.xlu0 %v3627, 127
        %v3649 = vpop.permute.xlu0 %3648
        %3650 = vrot.lane.b32.xlu0 %v3628, 127
        %v3651 = vpop.permute.xlu0 %3650
        %3652 = vrot.lane.b32.xlu0 %v3629, 127
        %v3653 = vpop.permute.xlu0 %3652
        %v3654 = vsel %vm2258, %v3639, %v3641
        %v3655 = vsel %vm2258, %v3643, %v3645
        %v3656 = vsel %vm2258, %v3647, %v3649
        %v3657 = vsel %vm2258, %v3651, %v3653
        %v3666 = vmax.f32 %v3622, %v3654
        %v3667 = vmax.f32 %v3623, %v3641
        %v3668 = vmax.f32 %v3624, %v3655
        %v3669 = vmax.f32 %v3625, %v3645
        %v3670 = vmax.f32 %v3626, %v3656
        %v3671 = vmax.f32 %v3627, %v3649
        %v3672 = vmax.f32 %v3628, %v3657
        %v3673 = vmax.f32 %v3629, %v3653
        %3682 = vrot.lane.b32.xlu0 %v3666, 114
        %v3683 = vpop.permute.xlu0 %3682
        %3684 = vrot.lane.b32.xlu0 %v3667, 114
        %v3685 = vpop.permute.xlu0 %3684
        %3686 = vrot.lane.b32.xlu0 %v3668, 114
        %v3687 = vpop.permute.xlu0 %3686
        %3688 = vrot.lane.b32.xlu0 %v3669, 114
        %v3689 = vpop.permute.xlu0 %3688
        %3690 = vrot.lane.b32.xlu0 %v3670, 114
        %v3691 = vpop.permute.xlu0 %3690
        %3692 = vrot.lane.b32.xlu0 %v3671, 114
        %v3693 = vpop.permute.xlu0 %3692
        %3694 = vrot.lane.b32.xlu0 %v3672, 114
        %v3695 = vpop.permute.xlu0 %3694
        %3696 = vrot.lane.b32.xlu0 %v3673, 114
        %v3697 = vpop.permute.xlu0 %3696
        %vm3698 = vcmask 932864
        %v3699 = vsel %vm3698, %v3683, %v3685
        %v3700 = vsel %vm3698, %v3687, %v3689
        %v3701 = vsel %vm3698, %v3691, %v3693
        %v3702 = vsel %vm3698, %v3695, %v3697
        %v3711 = vmax.f32 %v3666, %v3699
        %v3712 = vmax.f32 %v3667, %v3685
        %v3713 = vmax.f32 %v3668, %v3700
        %v3714 = vmax.f32 %v3669, %v3689
        %v3715 = vmax.f32 %v3670, %v3701
        %v3716 = vmax.f32 %v3671, %v3693
        %v3717 = vmax.f32 %v3672, %v3702
        %v3718 = vmax.f32 %v3673, %v3697
        %v3719 = vld [vmem:[%s6] sm:$0xff]
        %v3720 = vld [vmem:[%s6 + $0x8] sm:$0xff]
        %v3721 = vld [vmem:[%s6 + $0x10] sm:$0xff]
        %v3722 = vld [vmem:[%s6 + $0x18] sm:$0xff]
        %v3723 = vld [vmem:[%s6 + $0x20] sm:$0xff]
        %v3724 = vld [vmem:[%s6 + $0x28] sm:$0xff]
        %v3725 = vld [vmem:[%s6 + $0x30] sm:$0xff]
        %v3726 = vld [vmem:[%s6 + $0x38] sm:$0xff]
        %v3727 = vld [vmem:[%s6 + $0x40] sm:$0xff]
        %v3728 = vld [vmem:[%s6 + $0x48] sm:$0xff]
        %v3729 = vld [vmem:[%s6 + $0x50] sm:$0xff]
        %v3730 = vld [vmem:[%s6 + $0x58] sm:$0xff]
        %v3731 = vld [vmem:[%s6 + $0x60] sm:$0xff]
        %v3732 = vld [vmem:[%s6 + $0x68] sm:$0xff]
        %v3733 = vld [vmem:[%s6 + $0x70] sm:$0xff]
        %v3734 = vld [vmem:[%s6 + $0x78] sm:$0xff]
        %v3735 = vld [vmem:[%s6 + $0x80] sm:$0xff]
        %v3736 = vld [vmem:[%s6 + $0x88] sm:$0xff]
        %v3737 = vld [vmem:[%s6 + $0x90] sm:$0x7f]
        %v3738 = vld [vmem:[%s5] sm:$0xff]
        %v3739 = vld [vmem:[%s5 + $0x8] sm:$0xff]
        %v3740 = vld [vmem:[%s5 + $0x10] sm:$0xff]
        %v3741 = vld [vmem:[%s5 + $0x18] sm:$0x1]
        %3743 = vset.pattern.permute.xlu0 0
        %3744 = vperm.xlu0 %3743, %v3738
        %v3745 = vpop.permute.xlu0 %3744
        %3748 = vset.pattern.permute.xlu0 0
        %3749 = vperm.xlu0 %3748, %v3739
        %v3750 = vpop.permute.xlu0 %3749
        %3753 = vset.pattern.permute.xlu0 0
        %3754 = vperm.xlu0 %3753, %v3740
        %v3755 = vpop.permute.xlu0 %3754
        %3758 = vset.pattern.permute.xlu0 0
        %3759 = vperm.xlu0 %3758, %v3741
        %v3760 = vpop.permute.xlu0 %3759
        %vm3762 = vcmask 187392
        %v3764 = vsel %vm3762, %v3712, 0
        %v3767 = vsel %vm3762, %v3714, 0
        %v3770 = vsel %vm3762, %v3716, 0
        %v3773 = vsel %vm3762, %v3718, 0
        %v3776 = vsel %vm2603, %v3737, 0
        %3778 = vmatpush.msra.mxu0 %v3734
        %3779 = vmatpush.msra.mxu0 %v3733
        %3780 = vmatpush.msra.mxu0 %v3732
        %3781 = vmatpush.msra.mxu0 %v3731
        %3782 = vmatpush.msra.mxu0 %v3730
        %3783 = vmatpush.msra.mxu0 %v3729
        %3784 = vmatpush.msra.mxu0 %v3728
        %3785 = vmatpush.msra.mxu0 %v3727
        %3786 = vmatpush.msra.mxu0 %v3726
        %3787 = vmatpush.msra.mxu0 %v3725
        %3788 = vmatpush.msra.mxu0 %v3724
        %3789 = vmatpush.msra.mxu0 %v3723
        %3790 = vmatpush.msra.mxu0 %v3722
        %3791 = vmatpush.msra.mxu0 %v3721
        %3792 = vmatpush.msra.mxu0 %v3720
        %3793 = vmatpush.msra.mxu0 %v3719
        %3794 = vmatmul.f32.gmra.mxu0 %v3711
        %v3795 = vpop.f32.mrf.mxu0
        %v3796 = vadd.f32 %v3745, %v3795
        %3797 = vmatmul.f32.gmra.mxu0 %v3713
        %v3798 = vpop.f32.mrf.mxu0
        %v3799 = vadd.f32 %v3750, %v3798
        %3800 = vmatmul.f32.gmra.mxu0 %v3715
        %v3801 = vpop.f32.mrf.mxu0
        %v3802 = vadd.f32 %v3755, %v3801
        %3803 = vmatmul.f32.gmra.mxu0 %v3717
        %v3804 = vpop.f32.mrf.mxu0
        %v3805 = vadd.f32 %v3760, %v3804
        %3806 = vdwg.mxu0
        %3807 = vmatpush.msra.mxu0 0.0
        %3808 = vmatpush.msra.mxu0 0.0
        %3809 = vmatpush.msra.mxu0 0.0
        %3810 = vmatpush.msra.mxu0 0.0
        %3811 = vmatpush.msra.mxu0 0.0
        %3812 = vmatpush.msra.mxu0 0.0
        %3813 = vmatpush.msra.mxu0 0.0
        %3814 = vmatpush.msra.mxu0 0.0
        %3815 = vmatpush.msra.mxu0 0.0
        %3816 = vmatpush.msra.mxu0 0.0
        %3817 = vmatpush.msra.mxu0 0.0
        %3818 = vmatpush.msra.mxu0 0.0
        %3819 = vmatpush.msra.mxu0 0.0
        %3820 = vmatpush.msra.mxu0 %v3776
        %3821 = vmatpush.msra.mxu0 %v3736
        %3822 = vmatpush.msra.mxu0 %v3735
        %3823 = vmatmul.f32.gmra.mxu0 %v3764
        %v3824 = vpop.f32.mrf.mxu0
        %v3825 = vadd.f32 %v3796, %v3824
        %3826 = vmatmul.f32.gmra.mxu0 %v3767
        %v3827 = vpop.f32.mrf.mxu0
        %v3828 = vadd.f32 %v3799, %v3827
        %3829 = vmatmul.f32.gmra.mxu0 %v3770
        %v3830 = vpop.f32.mrf.mxu0
        %v3831 = vadd.f32 %v3802, %v3830
        %3832 = vmatmul.f32.gmra.mxu0 %v3773
        %v3833 = vpop.f32.mrf.mxu0
        %v3834 = vadd.f32 %v3805, %v3833
        %3835 = vdwg.mxu0
        %v3836 = vmax.f32 %v3825, 0.0
        %v3837 = vmax.f32 %v3828, 0.0
        %v3838 = vmax.f32 %v3831, 0.0
        %v3839 = vmax.f32 %v3834, 0.0
        %v3840 = vld [vmem:[%s8] sm:$0x1]
        %v3841 = vpack.c.bf16 %v3836, %v3836
        %v3842 = vld [vmem:[%s7] sm:$0xf]
        %v3843 = vld [vmem:[%s7 + $0x4] sm:$0xf]
        %v3844 = vld [vmem:[%s7 + $0x8] sm:$0xf]
        %v3845 = vld [vmem:[%s7 + $0xc] sm:$0xf]
        %v3846 = vld [vmem:[%s7 + $0x10] sm:$0x3]
        %v3852 = vunpack.c.l.b16 %v3842
        %v3853 = vunpack.c.l.b16 %v3843
        %v3854 = vunpack.c.l.b16 %v3844
        %v3855 = vunpack.c.l.b16 %v3845
        %v3856 = vunpack.c.l.b16 %v3846
        %v3857 = vpack.c.b16 %v3853, %v3852
        %v3858 = vpack.c.b16 %v3855, %v3854
        %v3859 = vpack.c.b16 %v3856, %v3856
        %vm3862 = vcmask 293888
        %v3864 = vsel %vm3862, %v3841, 0
        %v3867 = vsel %vm546, %v3859, 0
        %3869 = vmatpush.bf16.msra.mxu0 0
        %3870 = vmatpush.bf16.msra.mxu0 0
        %3871 = vmatpush.bf16.msra.mxu0 0
        %3872 = vmatpush.bf16.msra.mxu0 0
        %3873 = vmatpush.bf16.msra.mxu0 0
        %3874 = vmatpush.bf16.msra.mxu0 %v3867
        %3875 = vmatpush.bf16.msra.mxu0 %v3858
        %3876 = vmatpush.bf16.msra.mxu0 %v3857
        %3877 = vmatmul.bf16.gmra.mxu0 %v3864
        %v3878 = vpop.f32.mrf.mxu0
        %v3879 = vadd.f32 0.0, %v3878
        %v3880 = vpop.f32.mrf.mxu0
        %3881 = vdwg.mxu0
        %v3882 = vadd.f32 %v3840, %v3879
        %s3883 = scalar_lea.vmem %s7, 20
        %v3884 = vld [vmem:[%s3883] sm:$0xf]
        %v3885 = vld [vmem:[%s3883 + $0x4] sm:$0xf]
        %v3886 = vld [vmem:[%s3883 + $0x8] sm:$0xf]
        %v3887 = vld [vmem:[%s3883 + $0xc] sm:$0xf]
        %v3888 = vld [vmem:[%s3883 + $0x10] sm:$0x3]
        %v3889 = vshrl.u32 %v3841, 16
        %v3896 = vunpack.c.l.b16 %v3884
        %v3897 = vunpack.c.l.b16 %v3885
        %v3898 = vunpack.c.l.b16 %v3886
        %v3899 = vunpack.c.l.b16 %v3887
        %v3900 = vunpack.c.l.b16 %v3888
        %v3901 = vpack.c.b16 %v3897, %v3896
        %v3902 = vpack.c.b16 %v3899, %v3898
        %v3903 = vpack.c.b16 %v3900, %v3900
        %v3907 = vsel %vm3862, %v3889, 0
        %v3910 = vsel %vm546, %v3903, 0
        %3912 = vmatpush.bf16.msra.mxu0 0
        %3913 = vmatpush.bf16.msra.mxu0 0
        %3914 = vmatpush.bf16.msra.mxu0 0
        %3915 = vmatpush.bf16.msra.mxu0 0
        %3916 = vmatpush.bf16.msra.mxu0 0
        %3917 = vmatpush.bf16.msra.mxu0 %v3910
        %3918 = vmatpush.bf16.msra.mxu0 %v3902
        %3919 = vmatpush.bf16.msra.mxu0 %v3901
        %3920 = vmatmul.bf16.gmra.mxu0 %v3907
        %v3921 = vpop.f32.mrf.mxu0
        %v3922 = vadd.f32 0.0, %v3921
        %v3923 = vpop.f32.mrf.mxu0
        %3924 = vdwg.mxu0
        %v3925 = vadd.f32 %v3882, %v3922
        %s3926 = scalar_lea.vmem %s7, 40
        %v3927 = vld [vmem:[%s3926] sm:$0xf]
        %v3928 = vld [vmem:[%s3926 + $0x4] sm:$0xf]
        %v3929 = vld [vmem:[%s3926 + $0x8] sm:$0xf]
        %v3930 = vld [vmem:[%s3926 + $0xc] sm:$0xf]
        %v3931 = vld [vmem:[%s3926 + $0x10] sm:$0x3]
        %v3933 = vrot.slane %v3841, 1
        %v3939 = vunpack.c.l.b16 %v3927
        %v3940 = vunpack.c.l.b16 %v3928
        %v3941 = vunpack.c.l.b16 %v3929
        %v3942 = vunpack.c.l.b16 %v3930
        %v3943 = vunpack.c.l.b16 %v3931
        %v3944 = vpack.c.b16 %v3940, %v3939
        %v3945 = vpack.c.b16 %v3942, %v3941
        %v3946 = vpack.c.b16 %v3943, %v3943
        %v3950 = vsel %vm3862, %v3933, 0
        %v3953 = vsel %vm546, %v3946, 0
        %3955 = vmatpush.bf16.msra.mxu0 0
        %3956 = vmatpush.bf16.msra.mxu0 0
        %3957 = vmatpush.bf16.msra.mxu0 0
        %3958 = vmatpush.bf16.msra.mxu0 0
        %3959 = vmatpush.bf16.msra.mxu0 0
        %3960 = vmatpush.bf16.msra.mxu0 %v3953
        %3961 = vmatpush.bf16.msra.mxu0 %v3945
        %3962 = vmatpush.bf16.msra.mxu0 %v3944
        %3963 = vmatmul.bf16.gmra.mxu0 %v3950
        %v3964 = vpop.f32.mrf.mxu0
        %v3965 = vadd.f32 0.0, %v3964
        %v3966 = vpop.f32.mrf.mxu0
        %3967 = vdwg.mxu0
        %v3968 = vadd.f32 %v3925, %v3965
        %s3969 = scalar_lea.vmem %s7, 60
        %v3970 = vld [vmem:[%s3969] sm:$0xf]
        %v3971 = vld [vmem:[%s3969 + $0x4] sm:$0xf]
        %v3972 = vld [vmem:[%s3969 + $0x8] sm:$0xf]
        %v3973 = vld [vmem:[%s3969 + $0xc] sm:$0xf]
        %v3974 = vld [vmem:[%s3969 + $0x10] sm:$0x3]
        %v3975 = vrot.slane %v3889, 1
        %v3981 = vunpack.c.l.b16 %v3970
        %v3982 = vunpack.c.l.b16 %v3971
        %v3983 = vunpack.c.l.b16 %v3972
        %v3984 = vunpack.c.l.b16 %v3973
        %v3985 = vunpack.c.l.b16 %v3974
        %v3986 = vpack.c.b16 %v3982, %v3981
        %v3987 = vpack.c.b16 %v3984, %v3983
        %v3988 = vpack.c.b16 %v3985, %v3985
        %v3992 = vsel %vm3862, %v3975, 0
        %v3995 = vsel %vm546, %v3988, 0
        %3997 = vmatpush.bf16.msra.mxu0 0
        %3998 = vmatpush.bf16.msra.mxu0 0
        %3999 = vmatpush.bf16.msra.mxu0 0
        %4000 = vmatpush.bf16.msra.mxu0 0
        %4001 = vmatpush.bf16.msra.mxu0 0
        %4002 = vmatpush.bf16.msra.mxu0 %v3995
        %4003 = vmatpush.bf16.msra.mxu0 %v3987
        %4004 = vmatpush.bf16.msra.mxu0 %v3986
        %4005 = vmatmul.bf16.gmra.mxu0 %v3992
        %v4006 = vpop.f32.mrf.mxu0
        %v4007 = vadd.f32 0.0, %v4006
        %v4008 = vpop.f32.mrf.mxu0
        %4009 = vdwg.mxu0
        %v4010 = vadd.f32 %v3968, %v4007
        %s4011 = scalar_lea.vmem %s7, 80
        %v4012 = vld [vmem:[%s4011] sm:$0xf]
        %v4013 = vld [vmem:[%s4011 + $0x4] sm:$0xf]
        %v4014 = vld [vmem:[%s4011 + $0x8] sm:$0xf]
        %v4015 = vld [vmem:[%s4011 + $0xc] sm:$0xf]
        %v4016 = vld [vmem:[%s4011 + $0x10] sm:$0x3]
        %v4017 = vrot.slane %v3841, 2
        %v4023 = vunpack.c.l.b16 %v4012
        %v4024 = vunpack.c.l.b16 %v4013
        %v4025 = vunpack.c.l.b16 %v4014
        %v4026 = vunpack.c.l.b16 %v4015
        %v4027 = vunpack.c.l.b16 %v4016
        %v4028 = vpack.c.b16 %v4024, %v4023
        %v4029 = vpack.c.b16 %v4026, %v4025
        %v4030 = vpack.c.b16 %v4027, %v4027
        %v4034 = vsel %vm3862, %v4017, 0
        %v4037 = vsel %vm546, %v4030, 0
        %4039 = vmatpush.bf16.msra.mxu0 0
        %4040 = vmatpush.bf16.msra.mxu0 0
        %4041 = vmatpush.bf16.msra.mxu0 0
        %4042 = vmatpush.bf16.msra.mxu0 0
        %4043 = vmatpush.bf16.msra.mxu0 0
        %4044 = vmatpush.bf16.msra.mxu0 %v4037
        %4045 = vmatpush.bf16.msra.mxu0 %v4029
        %4046 = vmatpush.bf16.msra.mxu0 %v4028
        %4047 = vmatmul.bf16.gmra.mxu0 %v4034
        %v4048 = vpop.f32.mrf.mxu0
        %v4049 = vadd.f32 0.0, %v4048
        %v4050 = vpop.f32.mrf.mxu0
        %4051 = vdwg.mxu0
        %v4052 = vadd.f32 %v4010, %v4049
        %s4053 = scalar_lea.vmem %s7, 100
        %v4054 = vld [vmem:[%s4053] sm:$0xf]
        %v4055 = vld [vmem:[%s4053 + $0x4] sm:$0xf]
        %v4056 = vld [vmem:[%s4053 + $0x8] sm:$0xf]
        %v4057 = vld [vmem:[%s4053 + $0xc] sm:$0xf]
        %v4058 = vld [vmem:[%s4053 + $0x10] sm:$0x3]
        %v4059 = vrot.slane %v3889, 2
        %v4065 = vunpack.c.l.b16 %v4054
        %v4066 = vunpack.c.l.b16 %v4055
        %v4067 = vunpack.c.l.b16 %v4056
        %v4068 = vunpack.c.l.b16 %v4057
        %v4069 = vunpack.c.l.b16 %v4058
        %v4070 = vpack.c.b16 %v4066, %v4065
        %v4071 = vpack.c.b16 %v4068, %v4067
        %v4072 = vpack.c.b16 %v4069, %v4069
        %v4076 = vsel %vm3862, %v4059, 0
        %v4079 = vsel %vm546, %v4072, 0
        %4081 = vmatpush.bf16.msra.mxu0 0
        %4082 = vmatpush.bf16.msra.mxu0 0
        %4083 = vmatpush.bf16.msra.mxu0 0
        %4084 = vmatpush.bf16.msra.mxu0 0
        %4085 = vmatpush.bf16.msra.mxu0 0
        %4086 = vmatpush.bf16.msra.mxu0 %v4079
        %4087 = vmatpush.bf16.msra.mxu0 %v4071
        %4088 = vmatpush.bf16.msra.mxu0 %v4070
        %4089 = vmatmul.bf16.gmra.mxu0 %v4076
        %v4090 = vpop.f32.mrf.mxu0
        %v4091 = vadd.f32 0.0, %v4090
        %v4092 = vpop.f32.mrf.mxu0
        %4093 = vdwg.mxu0
        %v4094 = vadd.f32 %v4052, %v4091
        %s4095 = scalar_lea.vmem %s7, 120
        %v4096 = vld [vmem:[%s4095] sm:$0xf]
        %v4097 = vld [vmem:[%s4095 + $0x4] sm:$0xf]
        %v4098 = vld [vmem:[%s4095 + $0x8] sm:$0xf]
        %v4099 = vld [vmem:[%s4095 + $0xc] sm:$0xf]
        %v4100 = vld [vmem:[%s4095 + $0x10] sm:$0x3]
        %v4101 = vrot.slane %v3841, 3
        %v4107 = vunpack.c.l.b16 %v4096
        %v4108 = vunpack.c.l.b16 %v4097
        %v4109 = vunpack.c.l.b16 %v4098
        %v4110 = vunpack.c.l.b16 %v4099
        %v4111 = vunpack.c.l.b16 %v4100
        %v4112 = vpack.c.b16 %v4108, %v4107
        %v4113 = vpack.c.b16 %v4110, %v4109
        %v4114 = vpack.c.b16 %v4111, %v4111
        %v4118 = vsel %vm3862, %v4101, 0
        %v4121 = vsel %vm546, %v4114, 0
        %4123 = vmatpush.bf16.msra.mxu0 0
        %4124 = vmatpush.bf16.msra.mxu0 0
        %4125 = vmatpush.bf16.msra.mxu0 0
        %4126 = vmatpush.bf16.msra.mxu0 0
        %4127 = vmatpush.bf16.msra.mxu0 0
        %4128 = vmatpush.bf16.msra.mxu0 %v4121
        %4129 = vmatpush.bf16.msra.mxu0 %v4113
        %4130 = vmatpush.bf16.msra.mxu0 %v4112
        %4131 = vmatmul.bf16.gmra.mxu0 %v4118
        %v4132 = vpop.f32.mrf.mxu0
        %v4133 = vadd.f32 0.0, %v4132
        %v4134 = vpop.f32.mrf.mxu0
        %4135 = vdwg.mxu0
        %v4136 = vadd.f32 %v4094, %v4133
        %s4137 = scalar_lea.vmem %s7, 140
        %v4138 = vld [vmem:[%s4137] sm:$0xf]
        %v4139 = vld [vmem:[%s4137 + $0x4] sm:$0xf]
        %v4140 = vld [vmem:[%s4137 + $0x8] sm:$0xf]
        %v4141 = vld [vmem:[%s4137 + $0xc] sm:$0xf]
        %v4142 = vld [vmem:[%s4137 + $0x10] sm:$0x3]
        %v4143 = vrot.slane %v3889, 3
        %v4149 = vunpack.c.l.b16 %v4138
        %v4150 = vunpack.c.l.b16 %v4139
        %v4151 = vunpack.c.l.b16 %v4140
        %v4152 = vunpack.c.l.b16 %v4141
        %v4153 = vunpack.c.l.b16 %v4142
        %v4154 = vpack.c.b16 %v4150, %v4149
        %v4155 = vpack.c.b16 %v4152, %v4151
        %v4156 = vpack.c.b16 %v4153, %v4153
        %v4160 = vsel %vm3862, %v4143, 0
        %v4163 = vsel %vm546, %v4156, 0
        %4165 = vmatpush.bf16.msra.mxu0 0
        %4166 = vmatpush.bf16.msra.mxu0 0
        %4167 = vmatpush.bf16.msra.mxu0 0
        %4168 = vmatpush.bf16.msra.mxu0 0
        %4169 = vmatpush.bf16.msra.mxu0 0
        %4170 = vmatpush.bf16.msra.mxu0 %v4163
        %4171 = vmatpush.bf16.msra.mxu0 %v4155
        %4172 = vmatpush.bf16.msra.mxu0 %v4154
        %4173 = vmatmul.bf16.gmra.mxu0 %v4160
        %v4174 = vpop.f32.mrf.mxu0
        %v4175 = vadd.f32 0.0, %v4174
        %v4176 = vpop.f32.mrf.mxu0
        %4177 = vdwg.mxu0
        %v4178 = vadd.f32 %v4136, %v4175
        %v4179 = vpack.c.bf16 %v3837, %v3837
        %s4180 = scalar_lea.vmem %s7, 160
        %v4181 = vld [vmem:[%s4180] sm:$0xf]
        %v4182 = vld [vmem:[%s4180 + $0x4] sm:$0xf]
        %v4183 = vld [vmem:[%s4180 + $0x8] sm:$0xf]
        %v4184 = vld [vmem:[%s4180 + $0xc] sm:$0xf]
        %v4185 = vld [vmem:[%s4180 + $0x10] sm:$0x3]
        %v4191 = vunpack.c.l.b16 %v4181
        %v4192 = vunpack.c.l.b16 %v4182
        %v4193 = vunpack.c.l.b16 %v4183
        %v4194 = vunpack.c.l.b16 %v4184
        %v4195 = vunpack.c.l.b16 %v4185
        %v4196 = vpack.c.b16 %v4192, %v4191
        %v4197 = vpack.c.b16 %v4194, %v4193
        %v4198 = vpack.c.b16 %v4195, %v4195
        %v4202 = vsel %vm3862, %v4179, 0
        %v4205 = vsel %vm546, %v4198, 0
        %4207 = vmatpush.bf16.msra.mxu0 0
        %4208 = vmatpush.bf16.msra.mxu0 0
        %4209 = vmatpush.bf16.msra.mxu0 0
        %4210 = vmatpush.bf16.msra.mxu0 0
        %4211 = vmatpush.bf16.msra.mxu0 0
        %4212 = vmatpush.bf16.msra.mxu0 %v4205
        %4213 = vmatpush.bf16.msra.mxu0 %v4197
        %4214 = vmatpush.bf16.msra.mxu0 %v4196
        %4215 = vmatmul.bf16.gmra.mxu0 %v4202
        %v4216 = vpop.f32.mrf.mxu0
        %v4217 = vadd.f32 0.0, %v4216
        %v4218 = vpop.f32.mrf.mxu0
        %4219 = vdwg.mxu0
        %v4220 = vadd.f32 %v4178, %v4217
        %s4221 = scalar_lea.vmem %s7, 180
        %v4222 = vld [vmem:[%s4221] sm:$0xf]
        %v4223 = vld [vmem:[%s4221 + $0x4] sm:$0xf]
        %v4224 = vld [vmem:[%s4221 + $0x8] sm:$0xf]
        %v4225 = vld [vmem:[%s4221 + $0xc] sm:$0xf]
        %v4226 = vld [vmem:[%s4221 + $0x10] sm:$0x3]
        %v4227 = vshrl.u32 %v4179, 16
        %v4234 = vunpack.c.l.b16 %v4222
        %v4235 = vunpack.c.l.b16 %v4223
        %v4236 = vunpack.c.l.b16 %v4224
        %v4237 = vunpack.c.l.b16 %v4225
        %v4238 = vunpack.c.l.b16 %v4226
        %v4239 = vpack.c.b16 %v4235, %v4234
        %v4240 = vpack.c.b16 %v4237, %v4236
        %v4241 = vpack.c.b16 %v4238, %v4238
        %v4245 = vsel %vm3862, %v4227, 0
        %v4248 = vsel %vm546, %v4241, 0
        %4250 = vmatpush.bf16.msra.mxu0 0
        %4251 = vmatpush.bf16.msra.mxu0 0
        %4252 = vmatpush.bf16.msra.mxu0 0
        %4253 = vmatpush.bf16.msra.mxu0 0
        %4254 = vmatpush.bf16.msra.mxu0 0
        %4255 = vmatpush.bf16.msra.mxu0 %v4248
        %4256 = vmatpush.bf16.msra.mxu0 %v4240
        %4257 = vmatpush.bf16.msra.mxu0 %v4239
        %4258 = vmatmul.bf16.gmra.mxu0 %v4245
        %v4259 = vpop.f32.mrf.mxu0
        %v4260 = vadd.f32 0.0, %v4259
        %v4261 = vpop.f32.mrf.mxu0
        %4262 = vdwg.mxu0
        %v4263 = vadd.f32 %v4220, %v4260
        %s4264 = scalar_lea.vmem %s7, 200
        %v4265 = vld [vmem:[%s4264] sm:$0xf]
        %v4266 = vld [vmem:[%s4264 + $0x4] sm:$0xf]
        %v4267 = vld [vmem:[%s4264 + $0x8] sm:$0xf]
        %v4268 = vld [vmem:[%s4264 + $0xc] sm:$0xf]
        %v4269 = vld [vmem:[%s4264 + $0x10] sm:$0x3]
        %v4271 = vrot.slane %v4179, 1
        %v4277 = vunpack.c.l.b16 %v4265
        %v4278 = vunpack.c.l.b16 %v4266
        %v4279 = vunpack.c.l.b16 %v4267
        %v4280 = vunpack.c.l.b16 %v4268
        %v4281 = vunpack.c.l.b16 %v4269
        %v4282 = vpack.c.b16 %v4278, %v4277
        %v4283 = vpack.c.b16 %v4280, %v4279
        %v4284 = vpack.c.b16 %v4281, %v4281
        %v4288 = vsel %vm3862, %v4271, 0
        %v4291 = vsel %vm546, %v4284, 0
        %4293 = vmatpush.bf16.msra.mxu0 0
        %4294 = vmatpush.bf16.msra.mxu0 0
        %4295 = vmatpush.bf16.msra.mxu0 0
        %4296 = vmatpush.bf16.msra.mxu0 0
        %4297 = vmatpush.bf16.msra.mxu0 0
        %4298 = vmatpush.bf16.msra.mxu0 %v4291
        %4299 = vmatpush.bf16.msra.mxu0 %v4283
        %4300 = vmatpush.bf16.msra.mxu0 %v4282
        %4301 = vmatmul.bf16.gmra.mxu0 %v4288
        %v4302 = vpop.f32.mrf.mxu0
        %v4303 = vadd.f32 0.0, %v4302
        %v4304 = vpop.f32.mrf.mxu0
        %4305 = vdwg.mxu0
        %v4306 = vadd.f32 %v4263, %v4303
        %s4307 = scalar_lea.vmem %s7, 220
        %v4308 = vld [vmem:[%s4307] sm:$0xf]
        %v4309 = vld [vmem:[%s4307 + $0x4] sm:$0xf]
        %v4310 = vld [vmem:[%s4307 + $0x8] sm:$0xf]
        %v4311 = vld [vmem:[%s4307 + $0xc] sm:$0xf]
        %v4312 = vld [vmem:[%s4307 + $0x10] sm:$0x3]
        %v4313 = vrot.slane %v4227, 1
        %v4319 = vunpack.c.l.b16 %v4308
        %v4320 = vunpack.c.l.b16 %v4309
        %v4321 = vunpack.c.l.b16 %v4310
        %v4322 = vunpack.c.l.b16 %v4311
        %v4323 = vunpack.c.l.b16 %v4312
        %v4324 = vpack.c.b16 %v4320, %v4319
        %v4325 = vpack.c.b16 %v4322, %v4321
        %v4326 = vpack.c.b16 %v4323, %v4323
        %v4330 = vsel %vm3862, %v4313, 0
        %v4333 = vsel %vm546, %v4326, 0
        %4335 = vmatpush.bf16.msra.mxu0 0
        %4336 = vmatpush.bf16.msra.mxu0 0
        %4337 = vmatpush.bf16.msra.mxu0 0
        %4338 = vmatpush.bf16.msra.mxu0 0
        %4339 = vmatpush.bf16.msra.mxu0 0
        %4340 = vmatpush.bf16.msra.mxu0 %v4333
        %4341 = vmatpush.bf16.msra.mxu0 %v4325
        %4342 = vmatpush.bf16.msra.mxu0 %v4324
        %4343 = vmatmul.bf16.gmra.mxu0 %v4330
        %v4344 = vpop.f32.mrf.mxu0
        %v4345 = vadd.f32 0.0, %v4344
        %v4346 = vpop.f32.mrf.mxu0
        %4347 = vdwg.mxu0
        %v4348 = vadd.f32 %v4306, %v4345
        %s4349 = scalar_lea.vmem %s7, 240
        %v4350 = vld [vmem:[%s4349] sm:$0xf]
        %v4351 = vld [vmem:[%s4349 + $0x4] sm:$0xf]
        %v4352 = vld [vmem:[%s4349 + $0x8] sm:$0xf]
        %v4353 = vld [vmem:[%s4349 + $0xc] sm:$0xf]
        %v4354 = vld [vmem:[%s4349 + $0x10] sm:$0x3]
        %v4355 = vrot.slane %v4179, 2
        %v4361 = vunpack.c.l.b16 %v4350
        %v4362 = vunpack.c.l.b16 %v4351
        %v4363 = vunpack.c.l.b16 %v4352
        %v4364 = vunpack.c.l.b16 %v4353
        %v4365 = vunpack.c.l.b16 %v4354
        %v4366 = vpack.c.b16 %v4362, %v4361
        %v4367 = vpack.c.b16 %v4364, %v4363
        %v4368 = vpack.c.b16 %v4365, %v4365
        %v4372 = vsel %vm3862, %v4355, 0
        %v4375 = vsel %vm546, %v4368, 0
        %4377 = vmatpush.bf16.msra.mxu0 0
        %4378 = vmatpush.bf16.msra.mxu0 0
        %4379 = vmatpush.bf16.msra.mxu0 0
        %4380 = vmatpush.bf16.msra.mxu0 0
        %4381 = vmatpush.bf16.msra.mxu0 0
        %4382 = vmatpush.bf16.msra.mxu0 %v4375
        %4383 = vmatpush.bf16.msra.mxu0 %v4367
        %4384 = vmatpush.bf16.msra.mxu0 %v4366
        %4385 = vmatmul.bf16.gmra.mxu0 %v4372
        %v4386 = vpop.f32.mrf.mxu0
        %v4387 = vadd.f32 0.0, %v4386
        %v4388 = vpop.f32.mrf.mxu0
        %4389 = vdwg.mxu0
        %v4390 = vadd.f32 %v4348, %v4387
        %s4391 = scalar_lea.vmem %s7, 260
        %v4392 = vld [vmem:[%s4391] sm:$0xf]
        %v4393 = vld [vmem:[%s4391 + $0x4] sm:$0xf]
        %v4394 = vld [vmem:[%s4391 + $0x8] sm:$0xf]
        %v4395 = vld [vmem:[%s4391 + $0xc] sm:$0xf]
        %v4396 = vld [vmem:[%s4391 + $0x10] sm:$0x3]
        %v4397 = vrot.slane %v4227, 2
        %v4403 = vunpack.c.l.b16 %v4392
        %v4404 = vunpack.c.l.b16 %v4393
        %v4405 = vunpack.c.l.b16 %v4394
        %v4406 = vunpack.c.l.b16 %v4395
        %v4407 = vunpack.c.l.b16 %v4396
        %v4408 = vpack.c.b16 %v4404, %v4403
        %v4409 = vpack.c.b16 %v4406, %v4405
        %v4410 = vpack.c.b16 %v4407, %v4407
        %v4414 = vsel %vm3862, %v4397, 0
        %v4417 = vsel %vm546, %v4410, 0
        %4419 = vmatpush.bf16.msra.mxu0 0
        %4420 = vmatpush.bf16.msra.mxu0 0
        %4421 = vmatpush.bf16.msra.mxu0 0
        %4422 = vmatpush.bf16.msra.mxu0 0
        %4423 = vmatpush.bf16.msra.mxu0 0
        %4424 = vmatpush.bf16.msra.mxu0 %v4417
        %4425 = vmatpush.bf16.msra.mxu0 %v4409
        %4426 = vmatpush.bf16.msra.mxu0 %v4408
        %4427 = vmatmul.bf16.gmra.mxu0 %v4414
        %v4428 = vpop.f32.mrf.mxu0
        %v4429 = vadd.f32 0.0, %v4428
        %v4430 = vpop.f32.mrf.mxu0
        %4431 = vdwg.mxu0
        %v4432 = vadd.f32 %v4390, %v4429
        %s4433 = scalar_lea.vmem %s7, 280
        %v4434 = vld [vmem:[%s4433] sm:$0xf]
        %v4435 = vld [vmem:[%s4433 + $0x4] sm:$0xf]
        %v4436 = vld [vmem:[%s4433 + $0x8] sm:$0xf]
        %v4437 = vld [vmem:[%s4433 + $0xc] sm:$0xf]
        %v4438 = vld [vmem:[%s4433 + $0x10] sm:$0x3]
        %v4439 = vrot.slane %v4179, 3
        %v4445 = vunpack.c.l.b16 %v4434
        %v4446 = vunpack.c.l.b16 %v4435
        %v4447 = vunpack.c.l.b16 %v4436
        %v4448 = vunpack.c.l.b16 %v4437
        %v4449 = vunpack.c.l.b16 %v4438
        %v4450 = vpack.c.b16 %v4446, %v4445
        %v4451 = vpack.c.b16 %v4448, %v4447
        %v4452 = vpack.c.b16 %v4449, %v4449
        %v4456 = vsel %vm3862, %v4439, 0
        %v4459 = vsel %vm546, %v4452, 0
        %4461 = vmatpush.bf16.msra.mxu0 0
        %4462 = vmatpush.bf16.msra.mxu0 0
        %4463 = vmatpush.bf16.msra.mxu0 0
        %4464 = vmatpush.bf16.msra.mxu0 0
        %4465 = vmatpush.bf16.msra.mxu0 0
        %4466 = vmatpush.bf16.msra.mxu0 %v4459
        %4467 = vmatpush.bf16.msra.mxu0 %v4451
        %4468 = vmatpush.bf16.msra.mxu0 %v4450
        %4469 = vmatmul.bf16.gmra.mxu0 %v4456
        %v4470 = vpop.f32.mrf.mxu0
        %v4471 = vadd.f32 0.0, %v4470
        %v4472 = vpop.f32.mrf.mxu0
        %4473 = vdwg.mxu0
        %v4474 = vadd.f32 %v4432, %v4471
        %s4475 = scalar_lea.vmem %s7, 300
        %v4476 = vld [vmem:[%s4475] sm:$0xf]
        %v4477 = vld [vmem:[%s4475 + $0x4] sm:$0xf]
        %v4478 = vld [vmem:[%s4475 + $0x8] sm:$0xf]
        %v4479 = vld [vmem:[%s4475 + $0xc] sm:$0xf]
        %v4480 = vld [vmem:[%s4475 + $0x10] sm:$0x3]
        %v4481 = vrot.slane %v4227, 3
        %v4487 = vunpack.c.l.b16 %v4476
        %v4488 = vunpack.c.l.b16 %v4477
        %v4489 = vunpack.c.l.b16 %v4478
        %v4490 = vunpack.c.l.b16 %v4479
        %v4491 = vunpack.c.l.b16 %v4480
        %v4492 = vpack.c.b16 %v4488, %v4487
        %v4493 = vpack.c.b16 %v4490, %v4489
        %v4494 = vpack.c.b16 %v4491, %v4491
        %v4498 = vsel %vm3862, %v4481, 0
        %v4501 = vsel %vm546, %v4494, 0
        %4503 = vmatpush.bf16.msra.mxu0 0
        %4504 = vmatpush.bf16.msra.mxu0 0
        %4505 = vmatpush.bf16.msra.mxu0 0
        %4506 = vmatpush.bf16.msra.mxu0 0
        %4507 = vmatpush.bf16.msra.mxu0 0
        %4508 = vmatpush.bf16.msra.mxu0 %v4501
        %4509 = vmatpush.bf16.msra.mxu0 %v4493
        %4510 = vmatpush.bf16.msra.mxu0 %v4492
        %4511 = vmatmul.bf16.gmra.mxu0 %v4498
        %v4512 = vpop.f32.mrf.mxu0
        %v4513 = vadd.f32 0.0, %v4512
        %v4514 = vpop.f32.mrf.mxu0
        %4515 = vdwg.mxu0
        %v4516 = vadd.f32 %v4474, %v4513
        %v4517 = vpack.c.bf16 %v3838, %v3838
        %s4518 = scalar_lea.vmem %s7, 320
        %v4519 = vld [vmem:[%s4518] sm:$0xf]
        %v4520 = vld [vmem:[%s4518 + $0x4] sm:$0xf]
        %v4521 = vld [vmem:[%s4518 + $0x8] sm:$0xf]
        %v4522 = vld [vmem:[%s4518 + $0xc] sm:$0xf]
        %v4523 = vld [vmem:[%s4518 + $0x10] sm:$0x3]
        %v4529 = vunpack.c.l.b16 %v4519
        %v4530 = vunpack.c.l.b16 %v4520
        %v4531 = vunpack.c.l.b16 %v4521
        %v4532 = vunpack.c.l.b16 %v4522
        %v4533 = vunpack.c.l.b16 %v4523
        %v4534 = vpack.c.b16 %v4530, %v4529
        %v4535 = vpack.c.b16 %v4532, %v4531
        %v4536 = vpack.c.b16 %v4533, %v4533
        %v4540 = vsel %vm3862, %v4517, 0
        %v4543 = vsel %vm546, %v4536, 0
        %4545 = vmatpush.bf16.msra.mxu0 0
        %4546 = vmatpush.bf16.msra.mxu0 0
        %4547 = vmatpush.bf16.msra.mxu0 0
        %4548 = vmatpush.bf16.msra.mxu0 0
        %4549 = vmatpush.bf16.msra.mxu0 0
        %4550 = vmatpush.bf16.msra.mxu0 %v4543
        %4551 = vmatpush.bf16.msra.mxu0 %v4535
        %4552 = vmatpush.bf16.msra.mxu0 %v4534
        %4553 = vmatmul.bf16.gmra.mxu0 %v4540
        %v4554 = vpop.f32.mrf.mxu0
        %v4555 = vadd.f32 0.0, %v4554
        %v4556 = vpop.f32.mrf.mxu0
        %4557 = vdwg.mxu0
        %v4558 = vadd.f32 %v4516, %v4555
        %s4559 = scalar_lea.vmem %s7, 340
        %v4560 = vld [vmem:[%s4559] sm:$0xf]
        %v4561 = vld [vmem:[%s4559 + $0x4] sm:$0xf]
        %v4562 = vld [vmem:[%s4559 + $0x8] sm:$0xf]
        %v4563 = vld [vmem:[%s4559 + $0xc] sm:$0xf]
        %v4564 = vld [vmem:[%s4559 + $0x10] sm:$0x3]
        %v4565 = vshrl.u32 %v4517, 16
        %v4572 = vunpack.c.l.b16 %v4560
        %v4573 = vunpack.c.l.b16 %v4561
        %v4574 = vunpack.c.l.b16 %v4562
        %v4575 = vunpack.c.l.b16 %v4563
        %v4576 = vunpack.c.l.b16 %v4564
        %v4577 = vpack.c.b16 %v4573, %v4572
        %v4578 = vpack.c.b16 %v4575, %v4574
        %v4579 = vpack.c.b16 %v4576, %v4576
        %v4583 = vsel %vm3862, %v4565, 0
        %v4586 = vsel %vm546, %v4579, 0
        %4588 = vmatpush.bf16.msra.mxu0 0
        %4589 = vmatpush.bf16.msra.mxu0 0
        %4590 = vmatpush.bf16.msra.mxu0 0
        %4591 = vmatpush.bf16.msra.mxu0 0
        %4592 = vmatpush.bf16.msra.mxu0 0
        %4593 = vmatpush.bf16.msra.mxu0 %v4586
        %4594 = vmatpush.bf16.msra.mxu0 %v4578
        %4595 = vmatpush.bf16.msra.mxu0 %v4577
        %4596 = vmatmul.bf16.gmra.mxu0 %v4583
        %v4597 = vpop.f32.mrf.mxu0
        %v4598 = vadd.f32 0.0, %v4597
        %v4599 = vpop.f32.mrf.mxu0
        %4600 = vdwg.mxu0
        %v4601 = vadd.f32 %v4558, %v4598
        %s4602 = scalar_lea.vmem %s7, 360
        %v4603 = vld [vmem:[%s4602] sm:$0xf]
        %v4604 = vld [vmem:[%s4602 + $0x4] sm:$0xf]
        %v4605 = vld [vmem:[%s4602 + $0x8] sm:$0xf]
        %v4606 = vld [vmem:[%s4602 + $0xc] sm:$0xf]
        %v4607 = vld [vmem:[%s4602 + $0x10] sm:$0x3]
        %v4609 = vrot.slane %v4517, 1
        %v4615 = vunpack.c.l.b16 %v4603
        %v4616 = vunpack.c.l.b16 %v4604
        %v4617 = vunpack.c.l.b16 %v4605
        %v4618 = vunpack.c.l.b16 %v4606
        %v4619 = vunpack.c.l.b16 %v4607
        %v4620 = vpack.c.b16 %v4616, %v4615
        %v4621 = vpack.c.b16 %v4618, %v4617
        %v4622 = vpack.c.b16 %v4619, %v4619
        %v4626 = vsel %vm3862, %v4609, 0
        %v4629 = vsel %vm546, %v4622, 0
        %4631 = vmatpush.bf16.msra.mxu0 0
        %4632 = vmatpush.bf16.msra.mxu0 0
        %4633 = vmatpush.bf16.msra.mxu0 0
        %4634 = vmatpush.bf16.msra.mxu0 0
        %4635 = vmatpush.bf16.msra.mxu0 0
        %4636 = vmatpush.bf16.msra.mxu0 %v4629
        %4637 = vmatpush.bf16.msra.mxu0 %v4621
        %4638 = vmatpush.bf16.msra.mxu0 %v4620
        %4639 = vmatmul.bf16.gmra.mxu0 %v4626
        %v4640 = vpop.f32.mrf.mxu0
        %v4641 = vadd.f32 0.0, %v4640
        %v4642 = vpop.f32.mrf.mxu0
        %4643 = vdwg.mxu0
        %v4644 = vadd.f32 %v4601, %v4641
        %s4645 = scalar_lea.vmem %s7, 380
        %v4646 = vld [vmem:[%s4645] sm:$0xf]
        %v4647 = vld [vmem:[%s4645 + $0x4] sm:$0xf]
        %v4648 = vld [vmem:[%s4645 + $0x8] sm:$0xf]
        %v4649 = vld [vmem:[%s4645 + $0xc] sm:$0xf]
        %v4650 = vld [vmem:[%s4645 + $0x10] sm:$0x3]
        %v4651 = vrot.slane %v4565, 1
        %v4657 = vunpack.c.l.b16 %v4646
        %v4658 = vunpack.c.l.b16 %v4647
        %v4659 = vunpack.c.l.b16 %v4648
        %v4660 = vunpack.c.l.b16 %v4649
        %v4661 = vunpack.c.l.b16 %v4650
        %v4662 = vpack.c.b16 %v4658, %v4657
        %v4663 = vpack.c.b16 %v4660, %v4659
        %v4664 = vpack.c.b16 %v4661, %v4661
        %v4668 = vsel %vm3862, %v4651, 0
        %v4671 = vsel %vm546, %v4664, 0
        %4673 = vmatpush.bf16.msra.mxu0 0
        %4674 = vmatpush.bf16.msra.mxu0 0
        %4675 = vmatpush.bf16.msra.mxu0 0
        %4676 = vmatpush.bf16.msra.mxu0 0
        %4677 = vmatpush.bf16.msra.mxu0 0
        %4678 = vmatpush.bf16.msra.mxu0 %v4671
        %4679 = vmatpush.bf16.msra.mxu0 %v4663
        %4680 = vmatpush.bf16.msra.mxu0 %v4662
        %4681 = vmatmul.bf16.gmra.mxu0 %v4668
        %v4682 = vpop.f32.mrf.mxu0
        %v4683 = vadd.f32 0.0, %v4682
        %v4684 = vpop.f32.mrf.mxu0
        %4685 = vdwg.mxu0
        %v4686 = vadd.f32 %v4644, %v4683
        %s4687 = scalar_lea.vmem %s7, 400
        %v4688 = vld [vmem:[%s4687] sm:$0xf]
        %v4689 = vld [vmem:[%s4687 + $0x4] sm:$0xf]
        %v4690 = vld [vmem:[%s4687 + $0x8] sm:$0xf]
        %v4691 = vld [vmem:[%s4687 + $0xc] sm:$0xf]
        %v4692 = vld [vmem:[%s4687 + $0x10] sm:$0x3]
        %v4693 = vrot.slane %v4517, 2
        %v4699 = vunpack.c.l.b16 %v4688
        %v4700 = vunpack.c.l.b16 %v4689
        %v4701 = vunpack.c.l.b16 %v4690
        %v4702 = vunpack.c.l.b16 %v4691
        %v4703 = vunpack.c.l.b16 %v4692
        %v4704 = vpack.c.b16 %v4700, %v4699
        %v4705 = vpack.c.b16 %v4702, %v4701
        %v4706 = vpack.c.b16 %v4703, %v4703
        %v4710 = vsel %vm3862, %v4693, 0
        %v4713 = vsel %vm546, %v4706, 0
        %4715 = vmatpush.bf16.msra.mxu0 0
        %4716 = vmatpush.bf16.msra.mxu0 0
        %4717 = vmatpush.bf16.msra.mxu0 0
        %4718 = vmatpush.bf16.msra.mxu0 0
        %4719 = vmatpush.bf16.msra.mxu0 0
        %4720 = vmatpush.bf16.msra.mxu0 %v4713
        %4721 = vmatpush.bf16.msra.mxu0 %v4705
        %4722 = vmatpush.bf16.msra.mxu0 %v4704
        %4723 = vmatmul.bf16.gmra.mxu0 %v4710
        %v4724 = vpop.f32.mrf.mxu0
        %v4725 = vadd.f32 0.0, %v4724
        %v4726 = vpop.f32.mrf.mxu0
        %4727 = vdwg.mxu0
        %v4728 = vadd.f32 %v4686, %v4725
        %s4729 = scalar_lea.vmem %s7, 420
        %v4730 = vld [vmem:[%s4729] sm:$0xf]
        %v4731 = vld [vmem:[%s4729 + $0x4] sm:$0xf]
        %v4732 = vld [vmem:[%s4729 + $0x8] sm:$0xf]
        %v4733 = vld [vmem:[%s4729 + $0xc] sm:$0xf]
        %v4734 = vld [vmem:[%s4729 + $0x10] sm:$0x3]
        %v4735 = vrot.slane %v4565, 2
        %v4741 = vunpack.c.l.b16 %v4730
        %v4742 = vunpack.c.l.b16 %v4731
        %v4743 = vunpack.c.l.b16 %v4732
        %v4744 = vunpack.c.l.b16 %v4733
        %v4745 = vunpack.c.l.b16 %v4734
        %v4746 = vpack.c.b16 %v4742, %v4741
        %v4747 = vpack.c.b16 %v4744, %v4743
        %v4748 = vpack.c.b16 %v4745, %v4745
        %v4752 = vsel %vm3862, %v4735, 0
        %v4755 = vsel %vm546, %v4748, 0
        %4757 = vmatpush.bf16.msra.mxu0 0
        %4758 = vmatpush.bf16.msra.mxu0 0
        %4759 = vmatpush.bf16.msra.mxu0 0
        %4760 = vmatpush.bf16.msra.mxu0 0
        %4761 = vmatpush.bf16.msra.mxu0 0
        %4762 = vmatpush.bf16.msra.mxu0 %v4755
        %4763 = vmatpush.bf16.msra.mxu0 %v4747
        %4764 = vmatpush.bf16.msra.mxu0 %v4746
        %4765 = vmatmul.bf16.gmra.mxu0 %v4752
        %v4766 = vpop.f32.mrf.mxu0
        %v4767 = vadd.f32 0.0, %v4766
        %v4768 = vpop.f32.mrf.mxu0
        %4769 = vdwg.mxu0
        %v4770 = vadd.f32 %v4728, %v4767
        %s4771 = scalar_lea.vmem %s7, 440
        %v4772 = vld [vmem:[%s4771] sm:$0xf]
        %v4773 = vld [vmem:[%s4771 + $0x4] sm:$0xf]
        %v4774 = vld [vmem:[%s4771 + $0x8] sm:$0xf]
        %v4775 = vld [vmem:[%s4771 + $0xc] sm:$0xf]
        %v4776 = vld [vmem:[%s4771 + $0x10] sm:$0x3]
        %v4777 = vrot.slane %v4517, 3
        %v4783 = vunpack.c.l.b16 %v4772
        %v4784 = vunpack.c.l.b16 %v4773
        %v4785 = vunpack.c.l.b16 %v4774
        %v4786 = vunpack.c.l.b16 %v4775
        %v4787 = vunpack.c.l.b16 %v4776
        %v4788 = vpack.c.b16 %v4784, %v4783
        %v4789 = vpack.c.b16 %v4786, %v4785
        %v4790 = vpack.c.b16 %v4787, %v4787
        %v4794 = vsel %vm3862, %v4777, 0
        %v4797 = vsel %vm546, %v4790, 0
        %4799 = vmatpush.bf16.msra.mxu0 0
        %4800 = vmatpush.bf16.msra.mxu0 0
        %4801 = vmatpush.bf16.msra.mxu0 0
        %4802 = vmatpush.bf16.msra.mxu0 0
        %4803 = vmatpush.bf16.msra.mxu0 0
        %4804 = vmatpush.bf16.msra.mxu0 %v4797
        %4805 = vmatpush.bf16.msra.mxu0 %v4789
        %4806 = vmatpush.bf16.msra.mxu0 %v4788
        %4807 = vmatmul.bf16.gmra.mxu0 %v4794
        %v4808 = vpop.f32.mrf.mxu0
        %v4809 = vadd.f32 0.0, %v4808
        %v4810 = vpop.f32.mrf.mxu0
        %4811 = vdwg.mxu0
        %v4812 = vadd.f32 %v4770, %v4809
        %s4813 = scalar_lea.vmem %s7, 460
        %v4814 = vld [vmem:[%s4813] sm:$0xf]
        %v4815 = vld [vmem:[%s4813 + $0x4] sm:$0xf]
        %v4816 = vld [vmem:[%s4813 + $0x8] sm:$0xf]
        %v4817 = vld [vmem:[%s4813 + $0xc] sm:$0xf]
        %v4818 = vld [vmem:[%s4813 + $0x10] sm:$0x3]
        %v4819 = vrot.slane %v4565, 3
        %v4825 = vunpack.c.l.b16 %v4814
        %v4826 = vunpack.c.l.b16 %v4815
        %v4827 = vunpack.c.l.b16 %v4816
        %v4828 = vunpack.c.l.b16 %v4817
        %v4829 = vunpack.c.l.b16 %v4818
        %v4830 = vpack.c.b16 %v4826, %v4825
        %v4831 = vpack.c.b16 %v4828, %v4827
        %v4832 = vpack.c.b16 %v4829, %v4829
        %v4836 = vsel %vm3862, %v4819, 0
        %v4839 = vsel %vm546, %v4832, 0
        %4841 = vmatpush.bf16.msra.mxu0 0
        %4842 = vmatpush.bf16.msra.mxu0 0
        %4843 = vmatpush.bf16.msra.mxu0 0
        %4844 = vmatpush.bf16.msra.mxu0 0
        %4845 = vmatpush.bf16.msra.mxu0 0
        %4846 = vmatpush.bf16.msra.mxu0 %v4839
        %4847 = vmatpush.bf16.msra.mxu0 %v4831
        %4848 = vmatpush.bf16.msra.mxu0 %v4830
        %4849 = vmatmul.bf16.gmra.mxu0 %v4836
        %v4850 = vpop.f32.mrf.mxu0
        %v4851 = vadd.f32 0.0, %v4850
        %v4852 = vpop.f32.mrf.mxu0
        %4853 = vdwg.mxu0
        %v4854 = vadd.f32 %v4812, %v4851
        %v4855 = vpack.c.bf16 %v3839, %v3839
        %s4856 = scalar_lea.vmem %s7, 480
        %v4857 = vld [vmem:[%s4856] sm:$0xf]
        %v4858 = vld [vmem:[%s4856 + $0x4] sm:$0xf]
        %v4859 = vld [vmem:[%s4856 + $0x8] sm:$0xf]
        %v4860 = vld [vmem:[%s4856 + $0xc] sm:$0xf]
        %v4861 = vld [vmem:[%s4856 + $0x10] sm:$0x3]
        %v4867 = vunpack.c.l.b16 %v4857
        %v4868 = vunpack.c.l.b16 %v4858
        %v4869 = vunpack.c.l.b16 %v4859
        %v4870 = vunpack.c.l.b16 %v4860
        %v4871 = vunpack.c.l.b16 %v4861
        %v4872 = vpack.c.b16 %v4868, %v4867
        %v4873 = vpack.c.b16 %v4870, %v4869
        %v4874 = vpack.c.b16 %v4871, %v4871
        %v4878 = vsel %vm3862, %v4855, 0
        %v4881 = vsel %vm546, %v4874, 0
        %4883 = vmatpush.bf16.msra.mxu0 0
        %4884 = vmatpush.bf16.msra.mxu0 0
        %4885 = vmatpush.bf16.msra.mxu0 0
        %4886 = vmatpush.bf16.msra.mxu0 0
        %4887 = vmatpush.bf16.msra.mxu0 0
        %4888 = vmatpush.bf16.msra.mxu0 %v4881
        %4889 = vmatpush.bf16.msra.mxu0 %v4873
        %4890 = vmatpush.bf16.msra.mxu0 %v4872
        %4891 = vmatmul.bf16.gmra.mxu0 %v4878
        %v4892 = vpop.f32.mrf.mxu0
        %v4893 = vadd.f32 0.0, %v4892
        %v4894 = vpop.f32.mrf.mxu0
        %4895 = vdwg.mxu0
        %v4896 = vadd.f32 %v4854, %v4893
        %v4897 = vmax.f32 %v4896, 0.0
        %v4898 = vpack.c.bf16 %v4897, %v4897
        %v4899 = vld [vmem:[%s9] sm:$0xf]
        %v4900 = vld [vmem:[%s9 + $0x4] sm:$0xf]
        %v4901 = vld [vmem:[%s9 + $0x8] sm:$0xf]
        %v4902 = vld [vmem:[%s9 + $0xc] sm:$0xf]
        %v4903 = vld [vmem:[%s9 + $0x10] sm:$0xf]
        %v4904 = vld [vmem:[%s9 + $0x14] sm:$0xf]
        %v4905 = vld [vmem:[%s9 + $0x18] sm:$0xf]
        %v4906 = vld [vmem:[%s9 + $0x1c] sm:$0xf]
        %v4907 = vld [vmem:[%s9 + $0x20] sm:$0xf]
        %v4908 = vld [vmem:[%s9 + $0x24] sm:$0xf]
        %v4909 = vld [vmem:[%s9 + $0x28] sm:$0xf]
        %v4910 = vld [vmem:[%s9 + $0x2c] sm:$0xf]
        %v4911 = vld [vmem:[%s9 + $0x30] sm:$0x3]
        %v4912 = vld [vmem:[%s10] sm:$0x1]
        %v4926 = vunpack.c.l.b16 %v4899
        %v4927 = vunpack.c.l.b16 %v4900
        %v4928 = vunpack.c.l.b16 %v4901
        %v4929 = vunpack.c.l.b16 %v4902
        %v4930 = vunpack.c.l.b16 %v4903
        %v4931 = vunpack.c.l.b16 %v4904
        %v4932 = vunpack.c.l.b16 %v4905
        %v4933 = vunpack.c.l.b16 %v4906
        %v4934 = vunpack.c.l.b16 %v4907
        %v4935 = vunpack.c.l.b16 %v4908
        %v4936 = vunpack.c.l.b16 %v4909
        %v4937 = vunpack.c.l.b16 %v4910
        %v4938 = vunpack.c.l.b16 %v4911
        %v4939 = vpack.c.b16 %v4927, %v4926
        %v4940 = vpack.c.b16 %v4929, %v4928
        %v4941 = vpack.c.b16 %v4931, %v4930
        %v4942 = vpack.c.b16 %v4933, %v4932
        %v4943 = vpack.c.b16 %v4935, %v4934
        %v4944 = vpack.c.b16 %v4937, %v4936
        %v4945 = vpack.c.b16 %v4938, %v4938
        %vm4952 = vcmask 818176
        %v4954 = vsel %vm4952, %v4898, 0
        %v4957 = vsel %vm546, %v4945, 0
        %4959 = vmatpush.bf16.msra.mxu0 0
        %4960 = vmatpush.bf16.msra.mxu0 %v4957
        %4961 = vmatpush.bf16.msra.mxu0 %v4944
        %4962 = vmatpush.bf16.msra.mxu0 %v4943
        %4963 = vmatpush.bf16.msra.mxu0 %v4942
        %4964 = vmatpush.bf16.msra.mxu0 %v4941
        %4965 = vmatpush.bf16.msra.mxu0 %v4940
        %4966 = vmatpush.bf16.msra.mxu0 %v4939
        %4967 = vmatmul.bf16.gmra.mxu0 %v4954
        %v4968 = vpop.f32.mrf.mxu0
        %v4969 = vadd.f32 %v4912, %v4968
        %v4970 = vpop.f32.mrf.mxu0
        %4971 = vdwg.mxu0
        %v4972 = vmax.f32 %v4969, 0.0
        %v4973 = vpack.c.bf16 %v4972, %v4972
        %v4974 = vld [vmem:[%s11] sm:$0xf]
        %v4975 = vld [vmem:[%s11 + $0x4] sm:$0xf]
        %v4976 = vld [vmem:[%s11 + $0x8] sm:$0xf]
        %v4977 = vld [vmem:[%s11 + $0xc] sm:$0xf]
        %v4978 = vld [vmem:[%s11 + $0x10] sm:$0xf]
        %v4979 = vld [vmem:[%s12] sm:$0x1]
        %v4985 = vunpack.c.l.b16 %v4974
        %v4986 = vunpack.c.l.b16 %v4975
        %v4987 = vunpack.c.l.b16 %v4976
        %v4988 = vunpack.c.l.b16 %v4977
        %v4989 = vunpack.c.l.b16 %v4978
        %v4990 = vpack.c.b16 %v4986, %v4985
        %v4991 = vpack.c.b16 %v4988, %v4987
        %v4992 = vpack.c.b16 %v4989, %v4989
        %vm4995 = vcmask 326656
        %v4997 = vsel %vm4995, %v4973, 0
        %v5000 = vsel %vm2971, %v4992, 0
        %5002 = vmatpush.bf16.msra.mxu0 0
        %5003 = vmatpush.bf16.msra.mxu0 0
        %5004 = vmatpush.bf16.msra.mxu0 0
        %5005 = vmatpush.bf16.msra.mxu0 0
        %5006 = vmatpush.bf16.msra.mxu0 0
        %5007 = vmatpush.bf16.msra.mxu0 %v5000
        %5008 = vmatpush.bf16.msra.mxu0 %v4991
        %5009 = vmatpush.bf16.msra.mxu0 %v4990
        %5010 = vmatmul.bf16.gmra.mxu0 %v4997
        %v5011 = vpop.f32.mrf.mxu0
        %v5012 = vadd.f32 %v4979, %v5011
        %v5013 = vpop.f32.mrf.mxu0
        %5014 = vdwg.mxu0
        %vm5015 = vcmask 16384
        %5016 = vst.msk [vmem:[%s432] sm:$0x1] %vm5015, %v5012
        %s5017 = sand.u32 %s313, 1
        %s5018 = scalar_lea.sflag [#allocation3], %s5017
        %s5019 = sand.u32 %s313, 1
        %s5020 = scalar_lea.vmem [#allocation2], %s5019
        // Predicated region
        $region73: #{net_forward.1} parent=71 // pred_check
          %p5021 = pneg %p323
        $region74: #{net_forward.1} parent=71 // pred_check_branch
          %5023 = sbr.rel (%p5021) target = $region76
        $region75: #{net_forward.1} parent=71 // pred_region
          %5025 = vsyncadd %s5018, 0
          %s5026 = scalar_lea.hbm %s13, %s27
          %s5028 = sshll.u32 %s5020, 4
          %s5029 = int_to_ptr.vmem [resolvable:$true] %s5028
          %s5030 = sshll.u32 %s5026, 4
          %s5031 = int_to_ptr.hbm [resolvable:$true] %s5030
          %5033 = dma.vmem_to_hbm [thread:$0]  %s5029, 16, %s5031, %s5018
        $region76: #{net_forward.1} parent=71 // pred_fallthru
          _
      $region72: #{net_forward.1} parent=5 // pred_fallthru
        _
      %p5034 = scmp.le.s32.totalorder 2, %s22
      // Predicated region
      $region77: #{net_forward.1} parent=5 // pred_check
        %p5035 = pneg %p5034
      $region78: #{net_forward.1} parent=5 // pred_check_branch
        %5037 = sbr.rel (%p5035) target = $region80
      $region79: #{net_forward.1} parent=5 // pred_region
        %s5038 = ssub.s32 %s22, 2
        // Predicated region
        $region81: #{net_forward.1} parent=79 // pred_check
          %p5039 = pneg %p329
        $region82: #{net_forward.1} parent=79 // pred_check_branch
          %5041 = sbr.rel (%p5039) target = $region84
        $region83: #{net_forward.1} parent=79 // pred_region
          %s5042 = sand.u32 %s314, 1
          %s5043 = scalar_lea.sflag [#allocation3], %s5042
          %s5044 = sand.u32 %s314, 1
          %s5045 = scalar_lea.vmem [#allocation2], %s5044
          %5047 = dma.done %s5043, 16
        $region84: #{net_forward.1} parent=79 // pred_fallthru
          _
      $region80: #{net_forward.1} parent=5 // pred_fallthru
        _
    $region6: #{net_forward.1} parent=1 // loop_footer
      %s26 = sadd.s32 1, %s22
    $region7: #{net_forward.1} parent=1 // loop_footer_branch
      %21 = sbr.rel target = $region3
    $region8: #{net_forward.1} parent=1 // loop_exit
      _
    %5048 = vsyncpa [#allocation3], 1
    %s5049 = scalar_lea.sflag [#allocation3], 1
    %5050 = vsyncpa %s5049, 1

</llo_original>
